<compile_context>
chip_gen: v7x
topology: tpu7x:2x2x1
jax: 0.10.0
libtpu: 0.0.40
codegen_flags: <defaults>
</compile_context>

<pallas_src>
import math

import jax
import jax.numpy as jnp
from jax import lax
from jax.experimental import pallas as pl
from jax.experimental.pallas import tpu as pltpu

EMBED_DIM = 32
N_HEADS = 8
HEAD_DIM = EMBED_DIM // N_HEADS
EXPANSION = 4
FF_DIM = EXPANSION * EMBED_DIM
LN_EPS = 1e-5

# rows of the packed (10, 128) bias / LayerNorm parameter slab
(ROW_BQ, ROW_BK, ROW_BV, ROW_BO, ROW_G1, ROW_BE1,
 ROW_BF1, ROW_BF2, ROW_G2, ROW_BE2) = range(10)
NUM_VEC_ROWS = 10
VEC_WIDTH = FF_DIM  # 128 lanes -> lane-dense slab


def _layernorm(x, gamma, beta):
    mean = jnp.mean(x, axis=-1, keepdims=True)
    var = jnp.mean((x - mean) ** 2, axis=-1, keepdims=True)
    return (x - mean) * lax.rsqrt(var + LN_EPS) * gamma + beta


def encoder_block_kernel(key_ref, query_ref, value_ref,
                         wqkv_ref, wo_ref, w1_ref, w2_ref, vec_ref,
                         out_ref):
    S, E = key_ref.shape                  # leading batch dim squeezed by BlockSpec
    H, D = N_HEADS, HEAD_DIM

    kx = key_ref[...]                     # block `key`   -> MHA query input
    qx = query_ref[...]                   # block `query` -> MHA key input + residual 1
    vx = value_ref[...]                   # block `value` -> MHA value input

    vecs = vec_ref[...]                   # (10, 128)
    bq = vecs[ROW_BQ:ROW_BQ + 1, :E]      # pre-scaled by 1/sqrt(D) at pack time
    bk = vecs[ROW_BK:ROW_BK + 1, :E]
    bv = vecs[ROW_BV:ROW_BV + 1, :E]
    bo = vecs[ROW_BO:ROW_BO + 1, :E]
    g1 = vecs[ROW_G1:ROW_G1 + 1, :E]
    be1 = vecs[ROW_BE1:ROW_BE1 + 1, :E]
    bf1 = vecs[ROW_BF1:ROW_BF1 + 1, :FF_DIM]
    bf2 = vecs[ROW_BF2:ROW_BF2 + 1, :E]
    g2 = vecs[ROW_G2:ROW_G2 + 1, :E]
    be2 = vecs[ROW_BE2:ROW_BE2 + 1, :E]

    # --- QKV projections: three lane-dense (S,E)@(E,E) MXU matmuls ---
    # TODO(synk): cast MXU operands to bf16 (f32 accumulate) once S/E grow; kept
    # f32 here so the self-check holds a tight tolerance vs the f32 reference.
    q = jnp.dot(kx, wqkv_ref[0], preferred_element_type=jnp.float32) + bq   # (S,E)
    k = jnp.dot(qx, wqkv_ref[1], preferred_element_type=jnp.float32) + bk   # (S,E)
    v = jnp.dot(vx, wqkv_ref[2], preferred_element_type=jnp.float32) + bv   # (S,E)

    # --- per-head attention (heads batched; batch handled by the grid) ---
    qh = jnp.transpose(q.reshape(S, H, D), (1, 0, 2))          # (H,S,D)
    kh = jnp.transpose(k.reshape(S, H, D), (1, 0, 2))          # (H,S,D)
    vh = jnp.transpose(v.reshape(S, H, D), (1, 0, 2))          # (H,S,D)

    # q already carries the 1/sqrt(D) scale (folded into wq/bq host-side).
    scores = jnp.einsum('hqd,hkd->hqk', qh, kh,
                        preferred_element_type=jnp.float32)    # (H,S,S)
    m = jnp.max(scores, axis=-1, keepdims=True)
    p = jnp.exp(scores - m)
    wgt = p / jnp.sum(p, axis=-1, keepdims=True)               # exact divide
    ctx = jnp.einsum('hqk,hkd->hqd', wgt, vh,
                     preferred_element_type=jnp.float32)       # (H,S,D)
    ctx = jnp.transpose(ctx, (1, 0, 2)).reshape(S, E)          # concat heads

    attn = jnp.dot(ctx, wo_ref[...], preferred_element_type=jnp.float32) + bo

    # --- residual + LayerNorm 1 (dropout1 = identity in eval mode) ---
    x1 = attn + qx
    n1 = _layernorm(x1, g1, be1)

    # --- feed-forward ---
    h1 = jnp.dot(n1, w1_ref[...], preferred_element_type=jnp.float32) + bf1
    h1 = jnp.maximum(h1, 0.0)
    ff = jnp.dot(h1, w2_ref[...], preferred_element_type=jnp.float32) + bf2

    # --- residual + LayerNorm 2 (dropout2 = identity in eval mode) ---
    x2 = ff + n1
    out_ref[...] = _layernorm(x2, g2, be2)


@jax.jit
def transformer_encoder_block(key_x, query_x, value_x, wqkv, wo, w1, w2, vecs):
    B, S, E = key_x.shape

    def tok_spec():
        return pl.BlockSpec((None, S, E), lambda b: (b, 0, 0))

    # TODO(synk): for larger S/E, add a token-tile grid axis with an online
    # softmax (the (H,S,S) score tensor grows as S^2) and set vmem_limit_bytes —
    # v7x has 64 MiB physical VMEM vs 128 MiB on v5e/v6e.
    return pl.pallas_call(
        encoder_block_kernel,
        out_shape=jax.ShapeDtypeStruct((B, S, E), jnp.float32),
        grid=(B,),
        in_specs=[
            tok_spec(), tok_spec(), tok_spec(),
            pl.BlockSpec((3, E, E), lambda b: (0, 0, 0)),            # wqkv
            pl.BlockSpec((E, E), lambda b: (0, 0)),                  # wo
            pl.BlockSpec((E, FF_DIM), lambda b: (0, 0)),             # w1
            pl.BlockSpec((FF_DIM, E), lambda b: (0, 0)),             # w2
            pl.BlockSpec((NUM_VEC_ROWS, VEC_WIDTH), lambda b: (0, 0)),  # vecs
        ],
        out_specs=pl.BlockSpec((None, S, E), lambda b: (b, 0, 0)),
        compiler_params=pltpu.CompilerParams(
            dimension_semantics=("parallel",)),   # v7x: 2 TCs split the batch
    )(key_x, query_x, value_x, wqkv, wo, w1, w2, vecs)


def init_params(rng):
    keys = jax.random.split(rng, 16)

    def w(k, shape, fan_in):
        return jax.random.normal(k, shape, jnp.float32) / math.sqrt(fan_in)

    return {
        "wq": w(keys[0], (EMBED_DIM, EMBED_DIM), EMBED_DIM),
        "bq": 0.01 * jax.random.normal(keys[1], (1, EMBED_DIM), jnp.float32),
        "wk": w(keys[2], (EMBED_DIM, EMBED_DIM), EMBED_DIM),
        "bk": 0.01 * jax.random.normal(keys[3], (1, EMBED_DIM), jnp.float32),
        "wv": w(keys[4], (EMBED_DIM, EMBED_DIM), EMBED_DIM),
        "bv": 0.01 * jax.random.normal(keys[5], (1, EMBED_DIM), jnp.float32),
        "wo": w(keys[6], (EMBED_DIM, EMBED_DIM), EMBED_DIM),
        "bo": 0.01 * jax.random.normal(keys[7], (1, EMBED_DIM), jnp.float32),
        "g1": jnp.ones((1, EMBED_DIM), jnp.float32),
        "be1": jnp.zeros((1, EMBED_DIM), jnp.float32),
        "w1": w(keys[8], (EMBED_DIM, FF_DIM), EMBED_DIM),
        "bf1": 0.01 * jax.random.normal(keys[9], (1, FF_DIM), jnp.float32),
        "w2": w(keys[10], (FF_DIM, EMBED_DIM), FF_DIM),
        "bf2": 0.01 * jax.random.normal(keys[11], (1, EMBED_DIM), jnp.float32),
        "g2": jnp.ones((1, EMBED_DIM), jnp.float32),
        "be2": jnp.zeros((1, EMBED_DIM), jnp.float32),
    }


def pack_params(p):
    """Host-side packing of the 16 parameter tensors into 5 lane-dense inputs."""
    scale = 1.0 / math.sqrt(HEAD_DIM)
    # Fold the 1/sqrt(D) attention scale into the Q projection (weight AND bias).
    wqkv = jnp.stack([p["wq"] * scale, p["wk"], p["wv"]], axis=0)    # (3,E,E)

    def row(v):
        v = v.reshape(-1)
        return jnp.pad(v, (0, VEC_WIDTH - v.shape[0]))

    vec_list = [p["bq"] * scale, p["bk"], p["bv"], p["bo"],
                p["g1"], p["be1"], p["bf1"], p["bf2"], p["g2"], p["be2"]]
    vecs = jnp.stack([row(v) for v in vec_list], axis=0)             # (10,128)
    return wqkv, p["wo"], p["w1"], p["w2"], vecs


def reference_forward(key_x, query_x, value_x, p):
    """Pure-JAX reference matching the PyTorch forward exactly (eval mode)."""
    B, S, E = key_x.shape
    # MHA called as attention(key, query, value)
    Q = key_x @ p["wq"] + p["bq"][0]
    K = query_x @ p["wk"] + p["bk"][0]
    V = value_x @ p["wv"] + p["bv"][0]
    Qh = Q.reshape(B, S, N_HEADS, HEAD_DIM).transpose(0, 2, 1, 3)
    Kh = K.reshape(B, S, N_HEADS, HEAD_DIM).transpose(0, 2, 1, 3)
    Vh = V.reshape(B, S, N_HEADS, HEAD_DIM).transpose(0, 2, 1, 3)
    scores = (Qh @ Kh.transpose(0, 1, 3, 2)) / math.sqrt(HEAD_DIM)
    w = jax.nn.softmax(scores, axis=-1)
    attn = (w @ Vh).transpose(0, 2, 1, 3).reshape(B, S, E)
    attn = attn @ p["wo"] + p["bo"][0]

    def ln(x, g, b):
        mean = x.mean(-1, keepdims=True)
        var = ((x - mean) ** 2).mean(-1, keepdims=True)
        return (x - mean) / jnp.sqrt(var + LN_EPS) * g[0] + b[0]

    x1 = attn + query_x
    n1 = ln(x1, p["g1"], p["be1"])
    ff = jnp.maximum(n1 @ p["w1"] + p["bf1"][0], 0.0) @ p["w2"] + p["bf2"][0]
    return ln(ff + n1, p["g2"], p["be2"])


if __name__ == "__main__":
    B, S, E = 2, 8, EMBED_DIM
    root = jax.random.PRNGKey(0)
    k_key, k_query, k_value, k_params = jax.random.split(root, 4)
    key_x = jax.random.normal(k_key, (B, S, E), jnp.float32)
    query_x = jax.random.normal(k_query, (B, S, E), jnp.float32)
    value_x = jax.random.normal(k_value, (B, S, E), jnp.float32)
    params = init_params(k_params)
    packed = pack_params(params)

    out = transformer_encoder_block(key_x, query_x, value_x, *packed)
    out = jax.block_until_ready(out)

    ref = reference_forward(key_x, query_x, value_x, params)
    assert out.shape == (B, S, E)
    # Tolerance budgets only for MXU f32 matmul precision-mode differences
    # (bf16-pass emulation) between the Mosaic kernel and the XLA reference;
    # the kernel itself uses exact softmax division and f32 accumulation.
    max_err = float(jnp.max(jnp.abs(out - ref)))
    assert max_err < 2e-2, f"mismatch vs JAX reference (max abs err {max_err:.3e})"
    print("KERNEL_OK")
</pallas_src>

<mosaic_0001>
module attributes {stable_mosaic.version = 11 : i64} {
  func.func @encoder_block_kernel(%arg0: i32, %arg1: memref<1x8x32xf32, #tpu.memory_space<vmem>>, %arg2: memref<1x8x32xf32, #tpu.memory_space<vmem>>, %arg3: memref<1x8x32xf32, #tpu.memory_space<vmem>>, %arg4: memref<3x32x32xf32, #tpu.memory_space<vmem>>, %arg5: memref<32x32xf32, #tpu.memory_space<vmem>>, %arg6: memref<32x128xf32, #tpu.memory_space<vmem>>, %arg7: memref<128x32xf32, #tpu.memory_space<vmem>>, %arg8: memref<10x128xf32, #tpu.memory_space<vmem>>, %arg9: memref<1x8x32xf32, #tpu.memory_space<vmem>>) attributes {dimension_semantics = [#tpu.dimension_semantics<parallel>], iteration_bounds = array<i64: 2>, scalar_prefetch = 0 : i64, scratch_operands = 0 : i64, tpu.core_type = #tpu.core_type<tc>, window_params = [{transform_indices = @transform_0, window_bounds = array<i64: 1, 8, 32>}, {transform_indices = @transform_1, window_bounds = array<i64: 1, 8, 32>}, {transform_indices = @transform_2, window_bounds = array<i64: 1, 8, 32>}, {pipeline_mode = #tpu.pipeline_mode<synchronous>, transform_indices = @transform_3, window_bounds = array<i64: 3, 32, 32>}, {pipeline_mode = #tpu.pipeline_mode<synchronous>, transform_indices = @transform_4, window_bounds = array<i64: 32, 32>}, {pipeline_mode = #tpu.pipeline_mode<synchronous>, transform_indices = @transform_5, window_bounds = array<i64: 32, 128>}, {pipeline_mode = #tpu.pipeline_mode<synchronous>, transform_indices = @transform_6, window_bounds = array<i64: 128, 32>}, {pipeline_mode = #tpu.pipeline_mode<synchronous>, transform_indices = @transform_7, window_bounds = array<i64: 10, 128>}, {transform_indices = @transform_8, window_bounds = array<i64: 1, 8, 32>}]} {
    %c0 = arith.constant 0 : index
    %c0_0 = arith.constant 0 : index
    %c0_1 = arith.constant 0 : index
    %0 = vector.load %arg1[%c0, %c0_0, %c0_1] : memref<1x8x32xf32, #tpu.memory_space<vmem>>, vector<1x8x32xf32>
    %1 = vector.shape_cast %0 : vector<1x8x32xf32> to vector<8x32xf32>
    %c0_2 = arith.constant 0 : index
    %c0_3 = arith.constant 0 : index
    %c0_4 = arith.constant 0 : index
    %2 = vector.load %arg2[%c0_2, %c0_3, %c0_4] : memref<1x8x32xf32, #tpu.memory_space<vmem>>, vector<1x8x32xf32>
    %3 = vector.shape_cast %2 : vector<1x8x32xf32> to vector<8x32xf32>
    %c0_5 = arith.constant 0 : index
    %c0_6 = arith.constant 0 : index
    %c0_7 = arith.constant 0 : index
    %4 = vector.load %arg3[%c0_5, %c0_6, %c0_7] : memref<1x8x32xf32, #tpu.memory_space<vmem>>, vector<1x8x32xf32>
    %5 = vector.shape_cast %4 : vector<1x8x32xf32> to vector<8x32xf32>
    %c0_8 = arith.constant 0 : index
    %c0_9 = arith.constant 0 : index
    %6 = vector.load %arg8[%c0_8, %c0_9] : memref<10x128xf32, #tpu.memory_space<vmem>>, vector<10x128xf32>
    %7 = vector.extract_strided_slice %6 {offsets = [0, 0], sizes = [1, 32], strides = [1, 1]} : vector<10x128xf32> to vector<1x32xf32>
    %8 = vector.extract_strided_slice %6 {offsets = [1, 0], sizes = [1, 32], strides = [1, 1]} : vector<10x128xf32> to vector<1x32xf32>
    %9 = vector.extract_strided_slice %6 {offsets = [2, 0], sizes = [1, 32], strides = [1, 1]} : vector<10x128xf32> to vector<1x32xf32>
    %10 = vector.extract_strided_slice %6 {offsets = [3, 0], sizes = [1, 32], strides = [1, 1]} : vector<10x128xf32> to vector<1x32xf32>
    %11 = vector.extract_strided_slice %6 {offsets = [4, 0], sizes = [1, 32], strides = [1, 1]} : vector<10x128xf32> to vector<1x32xf32>
    %12 = vector.extract_strided_slice %6 {offsets = [5, 0], sizes = [1, 32], strides = [1, 1]} : vector<10x128xf32> to vector<1x32xf32>
    %13 = vector.extract_strided_slice %6 {offsets = [6, 0], sizes = [1, 128], strides = [1, 1]} : vector<10x128xf32> to vector<1x128xf32>
    %14 = vector.extract_strided_slice %6 {offsets = [7, 0], sizes = [1, 32], strides = [1, 1]} : vector<10x128xf32> to vector<1x32xf32>
    %15 = vector.extract_strided_slice %6 {offsets = [8, 0], sizes = [1, 32], strides = [1, 1]} : vector<10x128xf32> to vector<1x32xf32>
    %16 = vector.extract_strided_slice %6 {offsets = [9, 0], sizes = [1, 32], strides = [1, 1]} : vector<10x128xf32> to vector<1x32xf32>
    %c0_10 = arith.constant 0 : index
    %c0_11 = arith.constant 0 : index
    %c0_12 = arith.constant 0 : index
    %17 = vector.load %arg4[%c0_10, %c0_11, %c0_12] : memref<3x32x32xf32, #tpu.memory_space<vmem>>, vector<1x32x32xf32>
    %18 = vector.shape_cast %17 : vector<1x32x32xf32> to vector<32x32xf32>
    %cst = arith.constant dense<0.000000e+00> : vector<8x32xf32>
    %19 = tpu.matmul %1, %18, %cst {dimension_numbers = #tpu.dot_dimension_numbers<[1], [0], [0], [1], [0, 0, 1, 1], [], []>} : vector<8x32xf32>, vector<32x32xf32>, vector<8x32xf32> -> vector<8x32xf32>
    %20 = vector.broadcast %7 : vector<1x32xf32> to vector<8x32xf32>
    %21 = arith.addf %19, %20 : vector<8x32xf32>
    %c1 = arith.constant 1 : index
    %c0_13 = arith.constant 0 : index
    %c0_14 = arith.constant 0 : index
    %22 = vector.load %arg4[%c1, %c0_13, %c0_14] : memref<3x32x32xf32, #tpu.memory_space<vmem>>, vector<1x32x32xf32>
    %23 = vector.shape_cast %22 : vector<1x32x32xf32> to vector<32x32xf32>
    %cst_15 = arith.constant dense<0.000000e+00> : vector<8x32xf32>
    %24 = tpu.matmul %3, %23, %cst_15 {dimension_numbers = #tpu.dot_dimension_numbers<[1], [0], [0], [1], [0, 0, 1, 1], [], []>} : vector<8x32xf32>, vector<32x32xf32>, vector<8x32xf32> -> vector<8x32xf32>
    %25 = vector.broadcast %8 : vector<1x32xf32> to vector<8x32xf32>
    %26 = arith.addf %24, %25 : vector<8x32xf32>
    %c2 = arith.constant 2 : index
    %c0_16 = arith.constant 0 : index
    %c0_17 = arith.constant 0 : index
    %27 = vector.load %arg4[%c2, %c0_16, %c0_17] : memref<3x32x32xf32, #tpu.memory_space<vmem>>, vector<1x32x32xf32>
    %28 = vector.shape_cast %27 : vector<1x32x32xf32> to vector<32x32xf32>
    %cst_18 = arith.constant dense<0.000000e+00> : vector<8x32xf32>
    %29 = tpu.matmul %5, %28, %cst_18 {dimension_numbers = #tpu.dot_dimension_numbers<[1], [0], [0], [1], [0, 0, 1, 1], [], []>} : vector<8x32xf32>, vector<32x32xf32>, vector<8x32xf32> -> vector<8x32xf32>
    %30 = vector.broadcast %9 : vector<1x32xf32> to vector<8x32xf32>
    %31 = arith.addf %29, %30 : vector<8x32xf32>
    %32 = vector.shape_cast %21 : vector<8x32xf32> to vector<8x8x4xf32>
    %33 = tpu.transpose %32, [1, 0, 2] : vector<8x8x4xf32> -> vector<8x8x4xf32>
    %34 = vector.shape_cast %26 : vector<8x32xf32> to vector<8x8x4xf32>
    %35 = tpu.transpose %34, [1, 0, 2] : vector<8x8x4xf32> -> vector<8x8x4xf32>
    %36 = vector.shape_cast %31 : vector<8x32xf32> to vector<8x8x4xf32>
    %37 = tpu.transpose %36, [1, 0, 2] : vector<8x8x4xf32> -> vector<8x8x4xf32>
    "tpu.trace_start"() <{level = 10 : i32, message = "hqd,hkd->hqk"}> : () -> ()
    %cst_19 = arith.constant dense<0.000000e+00> : vector<8x8x8xf32>
    %38 = tpu.matmul %33, %35, %cst_19 {dimension_numbers = #tpu.dot_dimension_numbers<[2], [2], [1], [1], [0, 0, 0, 1, 1, 1], [0], [0]>} : vector<8x8x4xf32>, vector<8x8x4xf32>, vector<8x8x8xf32> -> vector<8x8x8xf32>
    "tpu.trace_stop"() : () -> ()
    %cst_20 = arith.constant dense<0xFF800000> : vector<8x8xf32>
    %39 = vector.multi_reduction <maximumf>, %38, %cst_20 [2] : vector<8x8x8xf32> to vector<8x8xf32>
    %40 = vector.shape_cast %39 : vector<8x8xf32> to vector<8x8x1xf32>
    %41 = vector.broadcast %40 : vector<8x8x1xf32> to vector<8x8x8xf32>
    %42 = arith.subf %38, %41 : vector<8x8x8xf32>
    %43 = math.exp %42 : vector<8x8x8xf32>
    %cst_21 = arith.constant dense<0.000000e+00> : vector<8x8xf32>
    %44 = vector.multi_reduction <add>, %43, %cst_21 [2] : vector<8x8x8xf32> to vector<8x8xf32>
    %45 = vector.shape_cast %44 : vector<8x8xf32> to vector<8x8x1xf32>
    %46 = vector.broadcast %45 : vector<8x8x1xf32> to vector<8x8x8xf32>
    %47 = arith.divf %43, %46 : vector<8x8x8xf32>
    "tpu.trace_start"() <{level = 10 : i32, message = "hqk,hkd->hqd"}> : () -> ()
    %cst_22 = arith.constant dense<0.000000e+00> : vector<8x8x4xf32>
    %48 = tpu.matmul %47, %37, %cst_22 {dimension_numbers = #tpu.dot_dimension_numbers<[2], [1], [1], [2], [0, 0, 0, 1, 1, 2], [0], [0]>} : vector<8x8x8xf32>, vector<8x8x4xf32>, vector<8x8x4xf32> -> vector<8x8x4xf32>
    "tpu.trace_stop"() : () -> ()
    %49 = tpu.transpose %48, [1, 0, 2] : vector<8x8x4xf32> -> vector<8x8x4xf32>
    %50 = vector.shape_cast %49 : vector<8x8x4xf32> to vector<8x32xf32>
    %c0_23 = arith.constant 0 : index
    %c0_24 = arith.constant 0 : index
    %51 = vector.load %arg5[%c0_23, %c0_24] : memref<32x32xf32, #tpu.memory_space<vmem>>, vector<32x32xf32>
    %cst_25 = arith.constant dense<0.000000e+00> : vector<8x32xf32>
    %52 = tpu.matmul %50, %51, %cst_25 {dimension_numbers = #tpu.dot_dimension_numbers<[1], [0], [0], [1], [0, 0, 1, 1], [], []>} : vector<8x32xf32>, vector<32x32xf32>, vector<8x32xf32> -> vector<8x32xf32>
    %53 = vector.broadcast %10 : vector<1x32xf32> to vector<8x32xf32>
    %54 = arith.addf %52, %53 : vector<8x32xf32>
    %55 = arith.addf %54, %3 : vector<8x32xf32>
    %cst_26 = arith.constant dense<0.000000e+00> : vector<8xf32>
    %56 = vector.multi_reduction <add>, %55, %cst_26 [1] : vector<8x32xf32> to vector<8xf32>
    %57 = vector.shape_cast %56 : vector<8xf32> to vector<8x1xf32>
    %cst_27 = arith.constant 3.200000e+01 : f32
    %58 = vector.broadcast %cst_27 : f32 to vector<8x1xf32>
    %59 = arith.divf %57, %58 : vector<8x1xf32>
    %60 = vector.broadcast %59 : vector<8x1xf32> to vector<8x32xf32>
    %61 = arith.subf %55, %60 : vector<8x32xf32>
    %62 = arith.mulf %61, %61 : vector<8x32xf32>
    %cst_28 = arith.constant dense<0.000000e+00> : vector<8xf32>
    %63 = vector.multi_reduction <add>, %62, %cst_28 [1] : vector<8x32xf32> to vector<8xf32>
    %64 = vector.shape_cast %63 : vector<8xf32> to vector<8x1xf32>
    %cst_29 = arith.constant 3.200000e+01 : f32
    %65 = vector.broadcast %cst_29 : f32 to vector<8x1xf32>
    %66 = arith.divf %64, %65 : vector<8x1xf32>
    %67 = vector.broadcast %59 : vector<8x1xf32> to vector<8x32xf32>
    %68 = arith.subf %55, %67 : vector<8x32xf32>
    %cst_30 = arith.constant 9.99999974E-6 : f32
    %69 = vector.broadcast %cst_30 : f32 to vector<8x1xf32>
    %70 = arith.addf %66, %69 : vector<8x1xf32>
    %71 = math.rsqrt %70 : vector<8x1xf32>
    %72 = vector.broadcast %71 : vector<8x1xf32> to vector<8x32xf32>
    %73 = arith.mulf %68, %72 : vector<8x32xf32>
    %74 = vector.broadcast %11 : vector<1x32xf32> to vector<8x32xf32>
    %75 = arith.mulf %73, %74 : vector<8x32xf32>
    %76 = vector.broadcast %12 : vector<1x32xf32> to vector<8x32xf32>
    %77 = arith.addf %75, %76 : vector<8x32xf32>
    %c0_31 = arith.constant 0 : index
    %c0_32 = arith.constant 0 : index
    %78 = vector.load %arg6[%c0_31, %c0_32] : memref<32x128xf32, #tpu.memory_space<vmem>>, vector<32x128xf32>
    %cst_33 = arith.constant dense<0.000000e+00> : vector<8x128xf32>
    %79 = tpu.matmul %77, %78, %cst_33 {dimension_numbers = #tpu.dot_dimension_numbers<[1], [0], [0], [1], [0, 0, 1, 1], [], []>} : vector<8x32xf32>, vector<32x128xf32>, vector<8x128xf32> -> vector<8x128xf32>
    %80 = vector.broadcast %13 : vector<1x128xf32> to vector<8x128xf32>
    %81 = arith.addf %79, %80 : vector<8x128xf32>
    %cst_34 = arith.constant 0.000000e+00 : f32
    %82 = vector.broadcast %cst_34 : f32 to vector<8x128xf32>
    %83 = arith.maximumf %81, %82 : vector<8x128xf32>
    %c0_35 = arith.constant 0 : index
    %c0_36 = arith.constant 0 : index
    %84 = vector.load %arg7[%c0_35, %c0_36] : memref<128x32xf32, #tpu.memory_space<vmem>>, vector<128x32xf32>
    %cst_37 = arith.constant dense<0.000000e+00> : vector<8x32xf32>
    %85 = tpu.matmul %83, %84, %cst_37 {dimension_numbers = #tpu.dot_dimension_numbers<[1], [0], [0], [1], [0, 0, 1, 1], [], []>} : vector<8x128xf32>, vector<128x32xf32>, vector<8x32xf32> -> vector<8x32xf32>
    %86 = vector.broadcast %14 : vector<1x32xf32> to vector<8x32xf32>
    %87 = arith.addf %85, %86 : vector<8x32xf32>
    %88 = arith.addf %87, %77 : vector<8x32xf32>
    %cst_38 = arith.constant dense<0.000000e+00> : vector<8xf32>
    %89 = vector.multi_reduction <add>, %88, %cst_38 [1] : vector<8x32xf32> to vector<8xf32>
    %90 = vector.shape_cast %89 : vector<8xf32> to vector<8x1xf32>
    %cst_39 = arith.constant 3.200000e+01 : f32
    %91 = vector.broadcast %cst_39 : f32 to vector<8x1xf32>
    %92 = arith.divf %90, %91 : vector<8x1xf32>
    %93 = vector.broadcast %92 : vector<8x1xf32> to vector<8x32xf32>
    %94 = arith.subf %88, %93 : vector<8x32xf32>
    %95 = arith.mulf %94, %94 : vector<8x32xf32>
    %cst_40 = arith.constant dense<0.000000e+00> : vector<8xf32>
    %96 = vector.multi_reduction <add>, %95, %cst_40 [1] : vector<8x32xf32> to vector<8xf32>
    %97 = vector.shape_cast %96 : vector<8xf32> to vector<8x1xf32>
    %cst_41 = arith.constant 3.200000e+01 : f32
    %98 = vector.broadcast %cst_41 : f32 to vector<8x1xf32>
    %99 = arith.divf %97, %98 : vector<8x1xf32>
    %100 = vector.broadcast %92 : vector<8x1xf32> to vector<8x32xf32>
    %101 = arith.subf %88, %100 : vector<8x32xf32>
    %cst_42 = arith.constant 9.99999974E-6 : f32
    %102 = vector.broadcast %cst_42 : f32 to vector<8x1xf32>
    %103 = arith.addf %99, %102 : vector<8x1xf32>
    %104 = math.rsqrt %103 : vector<8x1xf32>
    %105 = vector.broadcast %104 : vector<8x1xf32> to vector<8x32xf32>
    %106 = arith.mulf %101, %105 : vector<8x32xf32>
    %107 = vector.broadcast %15 : vector<1x32xf32> to vector<8x32xf32>
    %108 = arith.mulf %106, %107 : vector<8x32xf32>
    %109 = vector.broadcast %16 : vector<1x32xf32> to vector<8x32xf32>
    %110 = arith.addf %108, %109 : vector<8x32xf32>
    %c0_43 = arith.constant 0 : index
    %c0_44 = arith.constant 0 : index
    %c0_45 = arith.constant 0 : index
    %111 = vector.load %arg9[%c0_43, %c0_44, %c0_45] : memref<1x8x32xf32, #tpu.memory_space<vmem>>, vector<1x8x32xf32>
    %112 = vector.shape_cast %111 : vector<1x8x32xf32> to vector<8x32xf32>
    %113 = vector.shape_cast %110 : vector<8x32xf32> to vector<1x8x32xf32>
    tpu.vector_store %arg9[%c0_43, %c0_44, %c0_45], %113 {strides = array<i32>} : memref<1x8x32xf32, #tpu.memory_space<vmem>>, vector<1x8x32xf32>,
    return
  }
  func.func @transform_0(%arg0: i32) -> (i32, i32, i32) {
    %c0_i32 = arith.constant 0 : i32
    %c0_i32_0 = arith.constant 0 : i32
    %c0_i32_1 = arith.constant 0 : i32
    return %arg0, %c0_i32, %c0_i32_0 : i32, i32, i32
  }
  func.func @transform_1(%arg0: i32) -> (i32, i32, i32) {
    %c0_i32 = arith.constant 0 : i32
    %c0_i32_0 = arith.constant 0 : i32
    %c0_i32_1 = arith.constant 0 : i32
    return %arg0, %c0_i32, %c0_i32_0 : i32, i32, i32
  }
  func.func @transform_2(%arg0: i32) -> (i32, i32, i32) {
    %c0_i32 = arith.constant 0 : i32
    %c0_i32_0 = arith.constant 0 : i32
    %c0_i32_1 = arith.constant 0 : i32
    return %arg0, %c0_i32, %c0_i32_0 : i32, i32, i32
  }
  func.func @transform_3(%arg0: i32) -> (i32, i32, i32) {
    %c0_i32 = arith.constant 0 : i32
    %c0_i32_0 = arith.constant 0 : i32
    %c0_i32_1 = arith.constant 0 : i32
    %c0_i32_2 = arith.constant 0 : i32
    return %c0_i32, %c0_i32_0, %c0_i32_1 : i32, i32, i32
  }
  func.func @transform_4(%arg0: i32) -> (i32, i32) {
    %c0_i32 = arith.constant 0 : i32
    %c0_i32_0 = arith.constant 0 : i32
    %c0_i32_1 = arith.constant 0 : i32
    return %c0_i32, %c0_i32_0 : i32, i32
  }
  func.func @transform_5(%arg0: i32) -> (i32, i32) {
    %c0_i32 = arith.constant 0 : i32
    %c0_i32_0 = arith.constant 0 : i32
    %c0_i32_1 = arith.constant 0 : i32
    return %c0_i32, %c0_i32_0 : i32, i32
  }
  func.func @transform_6(%arg0: i32) -> (i32, i32) {
    %c0_i32 = arith.constant 0 : i32
    %c0_i32_0 = arith.constant 0 : i32
    %c0_i32_1 = arith.constant 0 : i32
    return %c0_i32, %c0_i32_0 : i32, i32
  }
  func.func @transform_7(%arg0: i32) -> (i32, i32) {
    %c0_i32 = arith.constant 0 : i32
    %c0_i32_0 = arith.constant 0 : i32
    %c0_i32_1 = arith.constant 0 : i32
    return %c0_i32, %c0_i32_0 : i32, i32
  }
  func.func @transform_8(%arg0: i32) -> (i32, i32, i32) {
    %c0_i32 = arith.constant 0 : i32
    %c0_i32_0 = arith.constant 0 : i32
    %c0_i32_1 = arith.constant 0 : i32
    return %arg0, %c0_i32, %c0_i32_0 : i32, i32, i32
  }
}

</mosaic_0001>

<llo_original>
// kernel: transformer_encoder_block.1
$region0: #{transformer_encoder_block.1}
  #allocation0 [shape = 'u32[]', space=smem, size = 0x4, offset = 0x4, fixed_abs, tag = 'smem constant byte address 0x4 - core index']
  #allocation1 [shape = 'u32[144,128]{1,0:T(1,128)}', space=vmem, size = 0x12000, scoped, tag = 'internal scratch']
  %s0 = inlined_call_operand.hbm [shape: f32[2,8,32], index: 0, kind: input, shape index: {}]
  %s1 = inlined_call_operand.hbm [shape: f32[2,8,32], index: 1, kind: input, shape index: {}]
  %s2 = inlined_call_operand.hbm [shape: f32[2,8,32], index: 2, kind: input, shape index: {}]
  %s3 = inlined_call_operand.vmem [shape: f32[3,32,32], index: 3, kind: input, shape index: {}]
  %s4 = inlined_call_operand.vmem [shape: f32[32,32], index: 4, kind: input, shape index: {}]
  %s5 = inlined_call_operand.vmem [shape: f32[32,128], index: 5, kind: input, shape index: {}]
  %s6 = inlined_call_operand.vmem [shape: f32[128,32], index: 6, kind: input, shape index: {}]
  %s7 = inlined_call_operand.vmem [shape: f32[10,128], index: 7, kind: input, shape index: {}]
  %s8 = inlined_call_operand.hbm [shape: f32[2,8,32], index: 8, kind: output, shape index: {}]
  %s9 = sld [smem:[#allocation0]]
  $region77: #{transformer_encoder_block.1} parent=0
    _
  %s11 = ssub.s32 1, %s9
  %s12 = scalar_select 0, %s11, %s9
  $region1: #{transformer_encoder_block.1} parent=0
    #allocation2 [shape = 'u8[8192]{0}', space=vmem, size = 0x2000, scoped, tag = 'input window, operand 0']
    #allocation3 [shape = 's32[2]{0}', space=sflag, size = 0x8, scoped, tag = 'scoped memory for transformer_encoder_block.1']
    #allocation4 [shape = 's32[2]{0}', space=sflag, size = 0x8, scoped, tag = 'scoped memory for transformer_encoder_block.1']
    #allocation5 [shape = 'u8[8192]{0}', space=vmem, size = 0x2000, scoped, tag = 'input window, operand 1']
    #allocation6 [shape = 's32[2]{0}', space=sflag, size = 0x8, scoped, tag = 'scoped memory for transformer_encoder_block.1']
    #allocation7 [shape = 'u8[8192]{0}', space=vmem, size = 0x2000, scoped, tag = 'input window, operand 2']
    #allocation8 [shape = 'u8[8192]{0}', space=vmem, size = 0x2000, scoped, tag = 'output window, operand 0']
    %13 = vsyncpa [#allocation3], 0
    %s14 = scalar_lea.sflag [#allocation3], 1
    %15 = vsyncpa %s14, 0
    %16 = vsyncpa [#allocation6], 0
    %s17 = scalar_lea.sflag [#allocation6], 1
    %18 = vsyncpa %s17, 0
    %19 = vsyncpa [#allocation4], 0
    %s20 = scalar_lea.sflag [#allocation4], 1
    %21 = vsyncpa %s20, 0
    loop: start=0, step=1, limit=4
    $region2: #{transformer_encoder_block.1} parent=1 // loop_pre_header
      _
    $region3: #{transformer_encoder_block.1} parent=1 // loop_header
      %s23 = sphi 0, %s27
      %p24 = scmp.ge.s32.totalorder %s23, 4
      %s33 = sphi 0, %s35
      %s36 = sphi 0, %s33
      %s37 = sphi 0, %s36
      %s53 = sphi 0, %s37
      %s59 = sphi 0, %s61
      %s62 = sphi 0, %s59
      %s63 = sphi 0, %s62
      %s79 = sphi 0, %s63
      %s85 = sphi 0, %s87
      %s88 = sphi 0, %s85
      %s89 = sphi 0, %s88
      %s105 = sphi 0, %s89
      %s109 = sphi 0, %s109
      %s111 = sphi 0, %s109
      %s112 = sphi 0, %s111
      %s126 = sphi 0, %s112
      %s130 = sphi 0, %s130
      %s132 = sphi 0, %s130
      %s133 = sphi 0, %s132
      %s147 = sphi 0, %s133
      %s151 = sphi 0, %s151
      %s153 = sphi 0, %s151
      %s154 = sphi 0, %s153
      %s168 = sphi 0, %s154
      %s172 = sphi 0, %s172
      %s174 = sphi 0, %s172
      %s175 = sphi 0, %s174
      %s189 = sphi 0, %s175
      %s193 = sphi 0, %s193
      %s195 = sphi 0, %s193
      %s196 = sphi 0, %s195
      %s210 = sphi 0, %s196
      %s216 = sphi 0, %s218
      %s219 = sphi 0, %s216
      %s220 = sphi 0, %s219
      %s236 = sphi 0, %s220
    $region4: #{transformer_encoder_block.1} parent=1 // loop_header_branch
      %26 = sbr.rel (%p24) target = $region8
    $region5: #{transformer_encoder_block.1} parent=1 // loop_body
      %s28 = ssub.s32 %s23, 1
      %s29 = ssub.s32 %s23, 2
      %s30 = sadd.s32 %s23, 1
      %s31 = ssub.s32 %s23, %s30
      %p32 = scmp.eq.s32.totalorder %s31, 0
      %s34 = sadd.s32 %s33, 1
      %s35 = scalar_select %p32, %s33, %s34
      %p38 = pneg %p32
      %p39 = scmp.eq.s32.totalorder %s23, 1
      %p40 = por %p38, %p39
      %p41 = scmp.ne.s32.totalorder %s33, %s36
      %p42 = scmp.eq.s32.totalorder %s23, 0
      %p43 = por %p41, %p42
      %p44 = scmp.ne.s32.totalorder %s33, %s36
      %p45 = scmp.eq.s32.totalorder %s28, 1
      %p46 = por %p44, %p45
      %p47 = scmp.ne.s32.totalorder %s36, %s37
      %p48 = scmp.eq.s32.totalorder %s28, 0
      %p49 = por %p47, %p48
      %p50 = scmp.ne.s32.totalorder %s36, %s37
      %p51 = scmp.eq.s32.totalorder %s29, 1
      %p52 = por %p50, %p51
      %p54 = scmp.ne.s32.totalorder %s37, %s53
      %p55 = scmp.eq.s32.totalorder %s29, 0
      %p56 = por %p54, %p55
      %s57 = ssub.s32 %s23, %s30
      %p58 = scmp.eq.s32.totalorder %s57, 0
      %s60 = sadd.s32 %s59, 1
      %s61 = scalar_select %p58, %s59, %s60
      %p64 = pneg %p58
      %p65 = scmp.eq.s32.totalorder %s23, 1
      %p66 = por %p64, %p65
      %p67 = scmp.ne.s32.totalorder %s59, %s62
      %p68 = scmp.eq.s32.totalorder %s23, 0
      %p69 = por %p67, %p68
      %p70 = scmp.ne.s32.totalorder %s59, %s62
      %p71 = scmp.eq.s32.totalorder %s28, 1
      %p72 = por %p70, %p71
      %p73 = scmp.ne.s32.totalorder %s62, %s63
      %p74 = scmp.eq.s32.totalorder %s28, 0
      %p75 = por %p73, %p74
      %p76 = scmp.ne.s32.totalorder %s62, %s63
      %p77 = scmp.eq.s32.totalorder %s29, 1
      %p78 = por %p76, %p77
      %p80 = scmp.ne.s32.totalorder %s63, %s79
      %p81 = scmp.eq.s32.totalorder %s29, 0
      %p82 = por %p80, %p81
      %s83 = ssub.s32 %s23, %s30
      %p84 = scmp.eq.s32.totalorder %s83, 0
      %s86 = sadd.s32 %s85, 1
      %s87 = scalar_select %p84, %s85, %s86
      %p90 = pneg %p84
      %p91 = scmp.eq.s32.totalorder %s23, 1
      %p92 = por %p90, %p91
      %p93 = scmp.ne.s32.totalorder %s85, %s88
      %p94 = scmp.eq.s32.totalorder %s23, 0
      %p95 = por %p93, %p94
      %p96 = scmp.ne.s32.totalorder %s85, %s88
      %p97 = scmp.eq.s32.totalorder %s28, 1
      %p98 = por %p96, %p97
      %p99 = scmp.ne.s32.totalorder %s88, %s89
      %p100 = scmp.eq.s32.totalorder %s28, 0
      %p101 = por %p99, %p100
      %p102 = scmp.ne.s32.totalorder %s88, %s89
      %p103 = scmp.eq.s32.totalorder %s29, 1
      %p104 = por %p102, %p103
      %p106 = scmp.ne.s32.totalorder %s89, %s105
      %p107 = scmp.eq.s32.totalorder %s29, 0
      %p108 = por %p106, %p107
      %s110 = sadd.s32 %s109, 1
      %p113 = scmp.eq.s32.totalorder %s23, 1
      %p114 = scmp.ne.s32.totalorder %s109, %s111
      %p115 = scmp.eq.s32.totalorder %s23, 0
      %p116 = por %p114, %p115
      %p117 = scmp.ne.s32.totalorder %s109, %s111
      %p118 = scmp.eq.s32.totalorder %s28, 1
      %p119 = por %p117, %p118
      %p120 = scmp.ne.s32.totalorder %s111, %s112
      %p121 = scmp.eq.s32.totalorder %s28, 0
      %p122 = por %p120, %p121
      %p123 = scmp.ne.s32.totalorder %s111, %s112
      %p124 = scmp.eq.s32.totalorder %s29, 1
      %p125 = por %p123, %p124
      %p127 = scmp.ne.s32.totalorder %s112, %s126
      %p128 = scmp.eq.s32.totalorder %s29, 0
      %p129 = por %p127, %p128
      %s131 = sadd.s32 %s130, 1
      %p134 = scmp.eq.s32.totalorder %s23, 1
      %p135 = scmp.ne.s32.totalorder %s130, %s132
      %p136 = scmp.eq.s32.totalorder %s23, 0
      %p137 = por %p135, %p136
      %p138 = scmp.ne.s32.totalorder %s130, %s132
      %p139 = scmp.eq.s32.totalorder %s28, 1
      %p140 = por %p138, %p139
      %p141 = scmp.ne.s32.totalorder %s132, %s133
      %p142 = scmp.eq.s32.totalorder %s28, 0
      %p143 = por %p141, %p142
      %p144 = scmp.ne.s32.totalorder %s132, %s133
      %p145 = scmp.eq.s32.totalorder %s29, 1
      %p146 = por %p144, %p145
      %p148 = scmp.ne.s32.totalorder %s133, %s147
      %p149 = scmp.eq.s32.totalorder %s29, 0
      %p150 = por %p148, %p149
      %s152 = sadd.s32 %s151, 1
      %p155 = scmp.eq.s32.totalorder %s23, 1
      %p156 = scmp.ne.s32.totalorder %s151, %s153
      %p157 = scmp.eq.s32.totalorder %s23, 0
      %p158 = por %p156, %p157
      %p159 = scmp.ne.s32.totalorder %s151, %s153
      %p160 = scmp.eq.s32.totalorder %s28, 1
      %p161 = por %p159, %p160
      %p162 = scmp.ne.s32.totalorder %s153, %s154
      %p163 = scmp.eq.s32.totalorder %s28, 0
      %p164 = por %p162, %p163
      %p165 = scmp.ne.s32.totalorder %s153, %s154
      %p166 = scmp.eq.s32.totalorder %s29, 1
      %p167 = por %p165, %p166
      %p169 = scmp.ne.s32.totalorder %s154, %s168
      %p170 = scmp.eq.s32.totalorder %s29, 0
      %p171 = por %p169, %p170
      %s173 = sadd.s32 %s172, 1
      %p176 = scmp.eq.s32.totalorder %s23, 1
      %p177 = scmp.ne.s32.totalorder %s172, %s174
      %p178 = scmp.eq.s32.totalorder %s23, 0
      %p179 = por %p177, %p178
      %p180 = scmp.ne.s32.totalorder %s172, %s174
      %p181 = scmp.eq.s32.totalorder %s28, 1
      %p182 = por %p180, %p181
      %p183 = scmp.ne.s32.totalorder %s174, %s175
      %p184 = scmp.eq.s32.totalorder %s28, 0
      %p185 = por %p183, %p184
      %p186 = scmp.ne.s32.totalorder %s174, %s175
      %p187 = scmp.eq.s32.totalorder %s29, 1
      %p188 = por %p186, %p187
      %p190 = scmp.ne.s32.totalorder %s175, %s189
      %p191 = scmp.eq.s32.totalorder %s29, 0
      %p192 = por %p190, %p191
      %s194 = sadd.s32 %s193, 1
      %p197 = scmp.eq.s32.totalorder %s23, 1
      %p198 = scmp.ne.s32.totalorder %s193, %s195
      %p199 = scmp.eq.s32.totalorder %s23, 0
      %p200 = por %p198, %p199
      %p201 = scmp.ne.s32.totalorder %s193, %s195
      %p202 = scmp.eq.s32.totalorder %s28, 1
      %p203 = por %p201, %p202
      %p204 = scmp.ne.s32.totalorder %s195, %s196
      %p205 = scmp.eq.s32.totalorder %s28, 0
      %p206 = por %p204, %p205
      %p207 = scmp.ne.s32.totalorder %s195, %s196
      %p208 = scmp.eq.s32.totalorder %s29, 1
      %p209 = por %p207, %p208
      %p211 = scmp.ne.s32.totalorder %s196, %s210
      %p212 = scmp.eq.s32.totalorder %s29, 0
      %p213 = por %p211, %p212
      %s214 = ssub.s32 %s23, %s30
      %p215 = scmp.eq.s32.totalorder %s214, 0
      %s217 = sadd.s32 %s216, 1
      %s218 = scalar_select %p215, %s216, %s217
      %p221 = pneg %p215
      %p222 = scmp.eq.s32.totalorder %s23, 1
      %p223 = por %p221, %p222
      %p224 = scmp.ne.s32.totalorder %s216, %s219
      %p225 = scmp.eq.s32.totalorder %s23, 0
      %p226 = por %p224, %p225
      %p227 = scmp.ne.s32.totalorder %s216, %s219
      %p228 = scmp.eq.s32.totalorder %s28, 1
      %p229 = por %p227, %p228
      %p230 = scmp.ne.s32.totalorder %s219, %s220
      %p231 = scmp.eq.s32.totalorder %s28, 0
      %p232 = por %p230, %p231
      %p233 = scmp.ne.s32.totalorder %s219, %s220
      %p234 = scmp.eq.s32.totalorder %s29, 1
      %p235 = por %p233, %p234
      %p237 = scmp.ne.s32.totalorder %s220, %s236
      %p238 = scmp.eq.s32.totalorder %s29, 0
      %p239 = por %p237, %p238
      %p240 = scmp.le.s32.totalorder 1, %s23
      %p241 = scmp.lt.s32.totalorder %s23, 3
      %p242 = pnand %p240, %p241
      %p243 = pneg %p242
      // Predicated region
      $region9: #{transformer_encoder_block.1} parent=5 // pred_check
        _
      $region10: #{transformer_encoder_block.1} parent=5 // pred_check_branch
        %245 = sbr.rel (%p242) target = $region12
      $region11: #{transformer_encoder_block.1} parent=5 // pred_region
        %s246 = ssub.s32 %s23, 1
        // Predicated region
        $region13: #{transformer_encoder_block.1} parent=11 // pred_check
          %p247 = pneg %p122
        $region14: #{transformer_encoder_block.1} parent=11 // pred_check_branch
          %249 = sbr.rel (%p247) target = $region16
        $region15: #{transformer_encoder_block.1} parent=11 // pred_region
          _
        $region16: #{transformer_encoder_block.1} parent=11 // pred_fallthru
          _
        // Predicated region
        $region17: #{transformer_encoder_block.1} parent=11 // pred_check
          %p250 = pneg %p143
        $region18: #{transformer_encoder_block.1} parent=11 // pred_check_branch
          %252 = sbr.rel (%p250) target = $region20
        $region19: #{transformer_encoder_block.1} parent=11 // pred_region
          _
        $region20: #{transformer_encoder_block.1} parent=11 // pred_fallthru
          _
        // Predicated region
        $region21: #{transformer_encoder_block.1} parent=11 // pred_check
          %p253 = pneg %p164
        $region22: #{transformer_encoder_block.1} parent=11 // pred_check_branch
          %255 = sbr.rel (%p253) target = $region24
        $region23: #{transformer_encoder_block.1} parent=11 // pred_region
          _
        $region24: #{transformer_encoder_block.1} parent=11 // pred_fallthru
          _
        // Predicated region
        $region25: #{transformer_encoder_block.1} parent=11 // pred_check
          %p256 = pneg %p185
        $region26: #{transformer_encoder_block.1} parent=11 // pred_check_branch
          %258 = sbr.rel (%p256) target = $region28
        $region27: #{transformer_encoder_block.1} parent=11 // pred_region
          _
        $region28: #{transformer_encoder_block.1} parent=11 // pred_fallthru
          _
        // Predicated region
        $region29: #{transformer_encoder_block.1} parent=11 // pred_check
          %p259 = pneg %p206
        $region30: #{transformer_encoder_block.1} parent=11 // pred_check_branch
          %261 = sbr.rel (%p259) target = $region32
        $region31: #{transformer_encoder_block.1} parent=11 // pred_region
          _
        $region32: #{transformer_encoder_block.1} parent=11 // pred_fallthru
          _
      $region12: #{transformer_encoder_block.1} parent=5 // pred_fallthru
        _
      %p262 = scmp.lt.s32.totalorder %s23, 2
      // Predicated region
      $region33: #{transformer_encoder_block.1} parent=5 // pred_check
        %p263 = pneg %p262
      $region34: #{transformer_encoder_block.1} parent=5 // pred_check_branch
        %265 = sbr.rel (%p263) target = $region36
      $region35: #{transformer_encoder_block.1} parent=5 // pred_region
        // Predicated region
        $region37: #{transformer_encoder_block.1} parent=35 // pred_check
          %p266 = pneg %p43
        $region38: #{transformer_encoder_block.1} parent=35 // pred_check_branch
          %268 = sbr.rel (%p266) target = $region40
        $region39: #{transformer_encoder_block.1} parent=35 // pred_region
          %s269 = sand.u32 %s33, 1
          %s270 = scalar_lea.sflag [#allocation3], %s269
          %s271 = sand.u32 %s33, 1
          %s272 = smul.addr %s271, 8
          %s273 = scalar_lea.vmem [#allocation2], %s272
          %s275 = ssub.s32 128, 128
          %276 = vsyncadd %s270, %s275
          %s277 = smul.addr %s23, 128
          %s278 = scalar_lea.hbm %s0, %s277
          %s280 = sshll.u32 %s273, 4
          %s281 = int_to_ptr.vmem [resolvable:$true] %s280
          %283 = dma.hbm_to_vmem [thread:$0]  %s278, 128, %s281, %s270
        $region40: #{transformer_encoder_block.1} parent=35 // pred_fallthru
          _
        // Predicated region
        $region41: #{transformer_encoder_block.1} parent=35 // pred_check
          %p284 = pneg %p69
        $region42: #{transformer_encoder_block.1} parent=35 // pred_check_branch
          %286 = sbr.rel (%p284) target = $region44
        $region43: #{transformer_encoder_block.1} parent=35 // pred_region
          %s287 = sand.u32 %s23, 1
          %s288 = scalar_lea.sflag [#allocation6], %s287
          %s289 = sand.u32 %s59, 1
          %s290 = smul.addr %s289, 8
          %s291 = scalar_lea.vmem [#allocation5], %s290
          %s293 = ssub.s32 128, 128
          %294 = vsyncadd %s288, %s293
          %s295 = smul.addr %s23, 128
          %s296 = scalar_lea.hbm %s1, %s295
          %s298 = sshll.u32 %s291, 4
          %s299 = int_to_ptr.vmem [resolvable:$true] %s298
          %301 = dma.hbm_to_vmem [thread:$0]  %s296, 128, %s299, %s288
        $region44: #{transformer_encoder_block.1} parent=35 // pred_fallthru
          _
        // Predicated region
        $region45: #{transformer_encoder_block.1} parent=35 // pred_check
          %p302 = pneg %p95
        $region46: #{transformer_encoder_block.1} parent=35 // pred_check_branch
          %304 = sbr.rel (%p302) target = $region48
        $region47: #{transformer_encoder_block.1} parent=35 // pred_region
          %s305 = sand.u32 %s23, 1
          %s306 = scalar_lea.sflag [#allocation6], %s305
          %s307 = sand.u32 %s85, 1
          %s308 = smul.addr %s307, 8
          %s309 = scalar_lea.vmem [#allocation7], %s308
          %s311 = ssub.s32 128, 128
          %312 = vsyncadd %s306, %s311
          %s313 = smul.addr %s23, 128
          %s314 = scalar_lea.hbm %s2, %s313
          %s316 = sshll.u32 %s309, 4
          %s317 = int_to_ptr.vmem [resolvable:$true] %s316
          %319 = dma.hbm_to_vmem [thread:$0]  %s314, 128, %s317, %s306
        $region48: #{transformer_encoder_block.1} parent=35 // pred_fallthru
          _
      $region36: #{transformer_encoder_block.1} parent=5 // pred_fallthru
        _
      %p320 = scmp.le.s32.totalorder 1, %s23
      %p321 = scmp.lt.s32.totalorder %s23, 3
      %p322 = pnand %p320, %p321
      %p323 = pneg %p322
      // Predicated region
      $region49: #{transformer_encoder_block.1} parent=5 // pred_check
        _
      $region50: #{transformer_encoder_block.1} parent=5 // pred_check_branch
        %325 = sbr.rel (%p322) target = $region52
      $region51: #{transformer_encoder_block.1} parent=5 // pred_region
        %s326 = ssub.s32 %s23, 1
        %s327 = sand.u32 %s36, 1
        %s328 = scalar_lea.sflag [#allocation3], %s327
        %s329 = sand.u32 %s36, 1
        %s330 = smul.addr %s329, 8
        %s331 = scalar_lea.vmem [#allocation2], %s330
        // Predicated region
        $region53: #{transformer_encoder_block.1} parent=51 // pred_check
          %p332 = pneg %p49
        $region54: #{transformer_encoder_block.1} parent=51 // pred_check_branch
          %334 = sbr.rel (%p332) target = $region56
        $region55: #{transformer_encoder_block.1} parent=51 // pred_region
          %335 = dma.done %s328, 128
        $region56: #{transformer_encoder_block.1} parent=51 // pred_fallthru
          _
        %s336 = sand.u32 %s28, 1
        %s337 = scalar_lea.sflag [#allocation6], %s336
        %s338 = sand.u32 %s62, 1
        %s339 = smul.addr %s338, 8
        %s340 = scalar_lea.vmem [#allocation5], %s339
        // Predicated region
        $region57: #{transformer_encoder_block.1} parent=51 // pred_check
          %p341 = pneg %p75
        $region58: #{transformer_encoder_block.1} parent=51 // pred_check_branch
          %343 = sbr.rel (%p341) target = $region60
        $region59: #{transformer_encoder_block.1} parent=51 // pred_region
          %344 = dma.done %s337, 128
        $region60: #{transformer_encoder_block.1} parent=51 // pred_fallthru
          _
        %s345 = sand.u32 %s28, 1
        %s346 = scalar_lea.sflag [#allocation6], %s345
        %s347 = sand.u32 %s88, 1
        %s348 = smul.addr %s347, 8
        %s349 = scalar_lea.vmem [#allocation7], %s348
        // Predicated region
        $region61: #{transformer_encoder_block.1} parent=51 // pred_check
          %p350 = pneg %p101
        $region62: #{transformer_encoder_block.1} parent=51 // pred_check_branch
          %352 = sbr.rel (%p350) target = $region64
        $region63: #{transformer_encoder_block.1} parent=51 // pred_region
          %353 = dma.done %s346, 128
        $region64: #{transformer_encoder_block.1} parent=51 // pred_fallthru
          _
        %s354 = sand.u32 %s36, 1
        %s355 = scalar_lea.sflag [#allocation3], %s354
        %s356 = sand.u32 %s36, 1
        %s357 = smul.addr %s356, 8
        %s358 = scalar_lea.vmem [#allocation2], %s357
        %p359 = pneg %p49
        %p360 = pneg %p46
        %s361 = sand.u32 %s28, 1
        %s362 = scalar_lea.sflag [#allocation6], %s361
        %s363 = sand.u32 %s62, 1
        %s364 = smul.addr %s363, 8
        %s365 = scalar_lea.vmem [#allocation5], %s364
        %p366 = pneg %p75
        %p367 = pneg %p72
        %s368 = sand.u32 %s28, 1
        %s369 = scalar_lea.sflag [#allocation6], %s368
        %s370 = sand.u32 %s88, 1
        %s371 = smul.addr %s370, 8
        %s372 = scalar_lea.vmem [#allocation7], %s371
        %p373 = pneg %p101
        %p374 = pneg %p98
        %p375 = pneg %p122
        %p376 = pneg %p119
        %p377 = pneg %p143
        %p378 = pneg %p140
        %p379 = pneg %p164
        %p380 = pneg %p161
        %p381 = pneg %p185
        %p382 = pneg %p182
        %p383 = pneg %p206
        %p384 = pneg %p203
        %p385 = pneg %p232
        %p386 = pneg %p229
        %s387 = sand.u32 %s219, 1
        %s388 = scalar_lea.sflag [#allocation4], %s387
        %s389 = sand.u32 %s219, 1
        %s390 = smul.addr %s389, 8
        %s391 = scalar_lea.vmem [#allocation8], %s390
        %v392 = vld [vmem:[%s331] sm:$0xff]
        %v393 = vld [vmem:[%s340] sm:$0xff]
        %v394 = vld [vmem:[%s349] sm:$0xff]
        %v395 = vld [vmem:[%s7] sm:$0xff]
        %v396 = vld [vmem:[%s7 + $0x8] sm:$0x3]
        %v397 = vld [vmem:[%s3] sm:$0xff]
        %v398 = vld [vmem:[%s3 + $0x8] sm:$0xff]
        %v399 = vld [vmem:[%s3 + $0x10] sm:$0xff]
        %v400 = vld [vmem:[%s3 + $0x18] sm:$0xff]
        %v401 = vlaneseq
        %v402 = vshrl.u32 %v401, 7
        %v403 = vsub.s32 0, %v402
        %v404 = vrot.slane %v395, %v403
        %vm405 = vcmask 261120
        %v407 = vsel %vm405, %v392, 0
        %409 = vmatprep.subr.mxu0 0.0
        %410 = vmatpush1.msra.mxu0 %v397
        %411 = vmatprep.subr.mxu0 0.0
        %412 = vmatpush1.msra.mxu0 %v398
        %413 = vmatprep.subr.mxu0 0.0
        %414 = vmatpush1.msra.mxu0 %v399
        %415 = vmatprep.subr.mxu0 0.0
        %416 = vmatpush1.msra.mxu0 %v400
        %417 = vmatprep.subr.mxu0 0.0
        %418 = vmatpush1.msra.mxu0 0.0
        %419 = vmatprep.subr.mxu0 0.0
        %420 = vmatpush1.msra.mxu0 0.0
        %421 = vmatprep.subr.mxu0 0.0
        %422 = vmatpush1.msra.mxu0 0.0
        %423 = vmatprep.subr.mxu0 0.0
        %424 = vmatpush1.msra.mxu0 0.0
        %425 = vmatprep.subr.mxu0 0.0
        %426 = vmatpush1.msra.mxu0 0.0
        %427 = vmatprep.subr.mxu0 0.0
        %428 = vmatpush1.msra.mxu0 0.0
        %429 = vmatprep.subr.mxu0 0.0
        %430 = vmatpush1.msra.mxu0 0.0
        %431 = vmatprep.subr.mxu0 0.0
        %432 = vmatpush1.msra.mxu0 0.0
        %433 = vmatprep.subr.mxu0 0.0
        %434 = vmatpush1.msra.mxu0 0.0
        %435 = vmatprep.subr.mxu0 0.0
        %436 = vmatpush1.msra.mxu0 0.0
        %437 = vmatprep.subr.mxu0 0.0
        %438 = vmatpush1.msra.mxu0 0.0
        %439 = vmatprep.subr.mxu0 0.0
        %440 = vmatpush1.msra.mxu0 0.0
        %441 = vmatprep.subr.mxu0 0.0
        %442 = vmatpush1.msra.mxu0 0.0
        %443 = vmatprep.subr.mxu0 0.0
        %444 = vmatpush1.msra.mxu0 0.0
        %445 = vmatprep.subr.mxu0 0.0
        %446 = vmatpush1.msra.mxu0 0.0
        %447 = vmatprep.subr.mxu0 0.0
        %448 = vmatpush1.msra.mxu0 0.0
        %449 = vmatprep.subr.mxu0 0.0
        %450 = vmatpush1.msra.mxu0 0.0
        %451 = vmatprep.subr.mxu0 0.0
        %452 = vmatpush1.msra.mxu0 0.0
        %453 = vmatprep.subr.mxu0 0.0
        %454 = vmatpush1.msra.mxu0 0.0
        %455 = vmatprep.subr.mxu0 0.0
        %456 = vmatpush1.msra.mxu0 0.0
        %457 = vmatprep.subr.mxu0 0.0
        %458 = vmatpush1.msra.mxu0 0.0
        %459 = vmatprep.subr.mxu0 0.0
        %460 = vmatpush1.msra.mxu0 0.0
        %461 = vmatprep.subr.mxu0 0.0
        %462 = vmatpush1.msra.mxu0 0.0
        %463 = vmatprep.subr.mxu0 0.0
        %464 = vmatpush1.msra.mxu0 0.0
        %465 = vmatprep.subr.mxu0 0.0
        %466 = vmatpush1.msra.mxu0 0.0
        %467 = vmatprep.subr.mxu0 0.0
        %468 = vmatpush1.msra.mxu0 0.0
        %469 = vmatprep.subr.mxu0 0.0
        %470 = vmatpush1.msra.mxu0 0.0
        %471 = vmatprep.subr.mxu0 0.0
        %472 = vmatpush1.msra.mxu0 0.0
        %473 = vmatprep.mubr.f32.mxu0 0.0
        %474 = vmatmul.mubr.f32.gmra.mrb[0].mxu0 %v407
        %v475 = vpop.f32.mrb[0].mxu0
        %v476 = vadd.f32 %v404, %v475
        %v477 = vpop.f32.mrb[0].mxu0
        %478 = vdwg.mxu0
        %s479 = scalar_lea.vmem %s3, 32
        %v480 = vld [vmem:[%s479] sm:$0xff]
        %v481 = vld [vmem:[%s479 + $0x8] sm:$0xff]
        %v482 = vld [vmem:[%s479 + $0x10] sm:$0xff]
        %v483 = vld [vmem:[%s479 + $0x18] sm:$0xff]
        %v484 = vlaneseq
        %v485 = vshrl.u32 %v484, 7
        %v486 = vsub.s32 1, %v485
        %v487 = vrot.slane %v395, %v486
        %v489 = vsel %vm405, %v393, 0
        %491 = vmatprep.subr.mxu0 0.0
        %492 = vmatpush1.msra.mxu0 %v480
        %493 = vmatprep.subr.mxu0 0.0
        %494 = vmatpush1.msra.mxu0 %v481
        %495 = vmatprep.subr.mxu0 0.0
        %496 = vmatpush1.msra.mxu0 %v482
        %497 = vmatprep.subr.mxu0 0.0
        %498 = vmatpush1.msra.mxu0 %v483
        %499 = vmatprep.subr.mxu0 0.0
        %500 = vmatpush1.msra.mxu0 0.0
        %501 = vmatprep.subr.mxu0 0.0
        %502 = vmatpush1.msra.mxu0 0.0
        %503 = vmatprep.subr.mxu0 0.0
        %504 = vmatpush1.msra.mxu0 0.0
        %505 = vmatprep.subr.mxu0 0.0
        %506 = vmatpush1.msra.mxu0 0.0
        %507 = vmatprep.subr.mxu0 0.0
        %508 = vmatpush1.msra.mxu0 0.0
        %509 = vmatprep.subr.mxu0 0.0
        %510 = vmatpush1.msra.mxu0 0.0
        %511 = vmatprep.subr.mxu0 0.0
        %512 = vmatpush1.msra.mxu0 0.0
        %513 = vmatprep.subr.mxu0 0.0
        %514 = vmatpush1.msra.mxu0 0.0
        %515 = vmatprep.subr.mxu0 0.0
        %516 = vmatpush1.msra.mxu0 0.0
        %517 = vmatprep.subr.mxu0 0.0
        %518 = vmatpush1.msra.mxu0 0.0
        %519 = vmatprep.subr.mxu0 0.0
        %520 = vmatpush1.msra.mxu0 0.0
        %521 = vmatprep.subr.mxu0 0.0
        %522 = vmatpush1.msra.mxu0 0.0
        %523 = vmatprep.subr.mxu0 0.0
        %524 = vmatpush1.msra.mxu0 0.0
        %525 = vmatprep.subr.mxu0 0.0
        %526 = vmatpush1.msra.mxu0 0.0
        %527 = vmatprep.subr.mxu0 0.0
        %528 = vmatpush1.msra.mxu0 0.0
        %529 = vmatprep.subr.mxu0 0.0
        %530 = vmatpush1.msra.mxu0 0.0
        %531 = vmatprep.subr.mxu0 0.0
        %532 = vmatpush1.msra.mxu0 0.0
        %533 = vmatprep.subr.mxu0 0.0
        %534 = vmatpush1.msra.mxu0 0.0
        %535 = vmatprep.subr.mxu0 0.0
        %536 = vmatpush1.msra.mxu0 0.0
        %537 = vmatprep.subr.mxu0 0.0
        %538 = vmatpush1.msra.mxu0 0.0
        %539 = vmatprep.subr.mxu0 0.0
        %540 = vmatpush1.msra.mxu0 0.0
        %541 = vmatprep.subr.mxu0 0.0
        %542 = vmatpush1.msra.mxu0 0.0
        %543 = vmatprep.subr.mxu0 0.0
        %544 = vmatpush1.msra.mxu0 0.0
        %545 = vmatprep.subr.mxu0 0.0
        %546 = vmatpush1.msra.mxu0 0.0
        %547 = vmatprep.subr.mxu0 0.0
        %548 = vmatpush1.msra.mxu0 0.0
        %549 = vmatprep.subr.mxu0 0.0
        %550 = vmatpush1.msra.mxu0 0.0
        %551 = vmatprep.subr.mxu0 0.0
        %552 = vmatpush1.msra.mxu0 0.0
        %553 = vmatprep.subr.mxu0 0.0
        %554 = vmatpush1.msra.mxu0 0.0
        %555 = vmatprep.mubr.f32.mxu0 0.0
        %556 = vmatmul.mubr.f32.gmra.mrb[0].mxu0 %v489
        %v557 = vpop.f32.mrb[0].mxu0
        %v558 = vadd.f32 %v487, %v557
        %v559 = vpop.f32.mrb[0].mxu0
        %560 = vdwg.mxu0
        %s561 = scalar_lea.vmem %s3, 64
        %v562 = vld [vmem:[%s561] sm:$0xff]
        %v563 = vld [vmem:[%s561 + $0x8] sm:$0xff]
        %v564 = vld [vmem:[%s561 + $0x10] sm:$0xff]
        %v565 = vld [vmem:[%s561 + $0x18] sm:$0xff]
        %v566 = vlaneseq
        %v567 = vshrl.u32 %v566, 7
        %v568 = vsub.s32 2, %v567
        %v569 = vrot.slane %v395, %v568
        %v571 = vsel %vm405, %v394, 0
        %573 = vmatprep.subr.mxu0 0.0
        %574 = vmatpush1.msra.mxu0 %v562
        %575 = vmatprep.subr.mxu0 0.0
        %576 = vmatpush1.msra.mxu0 %v563
        %577 = vmatprep.subr.mxu0 0.0
        %578 = vmatpush1.msra.mxu0 %v564
        %579 = vmatprep.subr.mxu0 0.0
        %580 = vmatpush1.msra.mxu0 %v565
        %581 = vmatprep.subr.mxu0 0.0
        %582 = vmatpush1.msra.mxu0 0.0
        %583 = vmatprep.subr.mxu0 0.0
        %584 = vmatpush1.msra.mxu0 0.0
        %585 = vmatprep.subr.mxu0 0.0
        %586 = vmatpush1.msra.mxu0 0.0
        %587 = vmatprep.subr.mxu0 0.0
        %588 = vmatpush1.msra.mxu0 0.0
        %589 = vmatprep.subr.mxu0 0.0
        %590 = vmatpush1.msra.mxu0 0.0
        %591 = vmatprep.subr.mxu0 0.0
        %592 = vmatpush1.msra.mxu0 0.0
        %593 = vmatprep.subr.mxu0 0.0
        %594 = vmatpush1.msra.mxu0 0.0
        %595 = vmatprep.subr.mxu0 0.0
        %596 = vmatpush1.msra.mxu0 0.0
        %597 = vmatprep.subr.mxu0 0.0
        %598 = vmatpush1.msra.mxu0 0.0
        %599 = vmatprep.subr.mxu0 0.0
        %600 = vmatpush1.msra.mxu0 0.0
        %601 = vmatprep.subr.mxu0 0.0
        %602 = vmatpush1.msra.mxu0 0.0
        %603 = vmatprep.subr.mxu0 0.0
        %604 = vmatpush1.msra.mxu0 0.0
        %605 = vmatprep.subr.mxu0 0.0
        %606 = vmatpush1.msra.mxu0 0.0
        %607 = vmatprep.subr.mxu0 0.0
        %608 = vmatpush1.msra.mxu0 0.0
        %609 = vmatprep.subr.mxu0 0.0
        %610 = vmatpush1.msra.mxu0 0.0
        %611 = vmatprep.subr.mxu0 0.0
        %612 = vmatpush1.msra.mxu0 0.0
        %613 = vmatprep.subr.mxu0 0.0
        %614 = vmatpush1.msra.mxu0 0.0
        %615 = vmatprep.subr.mxu0 0.0
        %616 = vmatpush1.msra.mxu0 0.0
        %617 = vmatprep.subr.mxu0 0.0
        %618 = vmatpush1.msra.mxu0 0.0
        %619 = vmatprep.subr.mxu0 0.0
        %620 = vmatpush1.msra.mxu0 0.0
        %621 = vmatprep.subr.mxu0 0.0
        %622 = vmatpush1.msra.mxu0 0.0
        %623 = vmatprep.subr.mxu0 0.0
        %624 = vmatpush1.msra.mxu0 0.0
        %625 = vmatprep.subr.mxu0 0.0
        %626 = vmatpush1.msra.mxu0 0.0
        %627 = vmatprep.subr.mxu0 0.0
        %628 = vmatpush1.msra.mxu0 0.0
        %629 = vmatprep.subr.mxu0 0.0
        %630 = vmatpush1.msra.mxu0 0.0
        %631 = vmatprep.subr.mxu0 0.0
        %632 = vmatpush1.msra.mxu0 0.0
        %633 = vmatprep.subr.mxu0 0.0
        %634 = vmatpush1.msra.mxu0 0.0
        %635 = vmatprep.subr.mxu0 0.0
        %636 = vmatpush1.msra.mxu0 0.0
        %637 = vmatprep.mubr.f32.mxu0 0.0
        %638 = vmatmul.mubr.f32.gmra.mrb[0].mxu0 %v571
        %v639 = vpop.f32.mrb[0].mxu0
        %v640 = vadd.f32 %v569, %v639
        %v641 = vpop.f32.mrb[0].mxu0
        %642 = vdwg.mxu0
        %644 = vrot.lane.b32.xlu0 %v476, 124
        %v645 = vpop.permute.xlu0 %644
        %647 = vrot.lane.b32.xlu0 %v476, 120
        %v648 = vpop.permute.xlu0 %647
        %650 = vrot.lane.b32.xlu0 %v476, 116
        %v651 = vpop.permute.xlu0 %650
        %653 = vrot.lane.b32.xlu0 %v476, 112
        %v654 = vpop.permute.xlu0 %653
        %656 = vrot.lane.b32.xlu0 %v476, 108
        %v657 = vpop.permute.xlu0 %656
        %659 = vrot.lane.b32.xlu0 %v476, 104
        %v660 = vpop.permute.xlu0 %659
        %662 = vrot.lane.b32.xlu0 %v476, 100
        %v663 = vpop.permute.xlu0 %662
        %v665 = vcombine.low %v476, %v648
        %v666 = vcombine.high %v476, %v648
        %v668 = vunpack.c.l.s4 1983009808
        %v669 = vunpack.c.0.s8 %v668
        %v670 = vlaneseq
        %v671 = vshrl.u32 %v670, 7
        %v672 = vsub.s32 %v669, %v671
        %v673 = vrot.slane %v665, %v672
        %v675 = vunpack.c.l.s4 1983009808
        %v676 = vunpack.c.0.s8 %v675
        %v677 = vlaneseq
        %v678 = vshrl.u32 %v677, 7
        %v679 = vsub.s32 %v676, %v678
        %v680 = vrot.slane %v666, %v679
        %v681 = vcombine.low %v645, %v651
        %v682 = vcombine.high %v645, %v651
        %v684 = vunpack.c.l.s4 1983009808
        %v685 = vunpack.c.0.s8 %v684
        %v686 = vlaneseq
        %v687 = vshrl.u32 %v686, 7
        %v688 = vsub.s32 %v685, %v687
        %v689 = vrot.slane %v681, %v688
        %v691 = vunpack.c.l.s4 1983009808
        %v692 = vunpack.c.0.s8 %v691
        %v693 = vlaneseq
        %v694 = vshrl.u32 %v693, 7
        %v695 = vsub.s32 %v692, %v694
        %v696 = vrot.slane %v682, %v695
        %v697 = vcombine.low %v654, %v660
        %v698 = vcombine.high %v654, %v660
        %v700 = vunpack.c.l.s4 1983009808
        %v701 = vunpack.c.0.s8 %v700
        %v702 = vlaneseq
        %v703 = vshrl.u32 %v702, 7
        %v704 = vsub.s32 %v701, %v703
        %v705 = vrot.slane %v697, %v704
        %v707 = vunpack.c.l.s4 1983009808
        %v708 = vunpack.c.0.s8 %v707
        %v709 = vlaneseq
        %v710 = vshrl.u32 %v709, 7
        %v711 = vsub.s32 %v708, %v710
        %v712 = vrot.slane %v698, %v711
        %v713 = vcombine.low %v657, %v663
        %v714 = vcombine.high %v657, %v663
        %v716 = vunpack.c.l.s4 1983009808
        %v717 = vunpack.c.0.s8 %v716
        %v718 = vlaneseq
        %v719 = vshrl.u32 %v718, 7
        %v720 = vsub.s32 %v717, %v719
        %v721 = vrot.slane %v713, %v720
        %v723 = vunpack.c.l.s4 1983009808
        %v724 = vunpack.c.0.s8 %v723
        %v725 = vlaneseq
        %v726 = vshrl.u32 %v725, 7
        %v727 = vsub.s32 %v724, %v726
        %v728 = vrot.slane %v714, %v727
        %v729 = vcombine.low %v673, %v689
        %v730 = vcombine.high %v673, %v689
        %v732 = vunpack.c.l.s4 1934713408
        %v733 = vunpack.c.0.s8 %v732
        %v734 = vlaneseq
        %v735 = vshrl.u32 %v734, 7
        %v736 = vsub.s32 %v733, %v735
        %v737 = vrot.slane %v729, %v736
        %v739 = vunpack.c.l.s4 1934713408
        %v740 = vunpack.c.0.s8 %v739
        %v741 = vlaneseq
        %v742 = vshrl.u32 %v741, 7
        %v743 = vsub.s32 %v740, %v742
        %v744 = vrot.slane %v730, %v743
        %v745 = vcombine.low %v680, %v696
        %v746 = vcombine.high %v680, %v696
        %v748 = vunpack.c.l.s4 1934713408
        %v749 = vunpack.c.0.s8 %v748
        %v750 = vlaneseq
        %v751 = vshrl.u32 %v750, 7
        %v752 = vsub.s32 %v749, %v751
        %v753 = vrot.slane %v745, %v752
        %v755 = vunpack.c.l.s4 1934713408
        %v756 = vunpack.c.0.s8 %v755
        %v757 = vlaneseq
        %v758 = vshrl.u32 %v757, 7
        %v759 = vsub.s32 %v756, %v758
        %v760 = vrot.slane %v746, %v759
        %v761 = vcombine.low %v705, %v721
        %v762 = vcombine.high %v705, %v721
        %v764 = vunpack.c.l.s4 1934713408
        %v765 = vunpack.c.0.s8 %v764
        %v766 = vlaneseq
        %v767 = vshrl.u32 %v766, 7
        %v768 = vsub.s32 %v765, %v767
        %v769 = vrot.slane %v761, %v768
        %v771 = vunpack.c.l.s4 1934713408
        %v772 = vunpack.c.0.s8 %v771
        %v773 = vlaneseq
        %v774 = vshrl.u32 %v773, 7
        %v775 = vsub.s32 %v772, %v774
        %v776 = vrot.slane %v762, %v775
        %v777 = vcombine.low %v712, %v728
        %v778 = vcombine.high %v712, %v728
        %v780 = vunpack.c.l.s4 1934713408
        %v781 = vunpack.c.0.s8 %v780
        %v782 = vlaneseq
        %v783 = vshrl.u32 %v782, 7
        %v784 = vsub.s32 %v781, %v783
        %v785 = vrot.slane %v777, %v784
        %v787 = vunpack.c.l.s4 1934713408
        %v788 = vunpack.c.0.s8 %v787
        %v789 = vlaneseq
        %v790 = vshrl.u32 %v789, 7
        %v791 = vsub.s32 %v788, %v790
        %v792 = vrot.slane %v778, %v791
        %v793 = vcombine.low %v737, %v769
        %v794 = vcombine.high %v737, %v769
        %v795 = vcombine.low %v744, %v776
        %v796 = vcombine.high %v744, %v776
        %v797 = vcombine.low %v753, %v785
        %v798 = vcombine.high %v753, %v785
        %v799 = vcombine.low %v760, %v792
        %v800 = vcombine.high %v760, %v792
        %v801 = vcombine.low %v793, %v795
        %v802 = vcombine.high %v793, %v795
        %v804 = vunpack.c.l.s4 1983009808
        %v805 = vunpack.c.0.s8 %v804
        %v806 = vlaneseq
        %v807 = vshrl.u32 %v806, 7
        %v808 = vsub.s32 %v805, %v807
        %v809 = vrot.slane %v801, %v808
        %v811 = vunpack.c.l.s4 1983009808
        %v812 = vunpack.c.0.s8 %v811
        %v813 = vlaneseq
        %v814 = vshrl.u32 %v813, 7
        %v815 = vsub.s32 %v812, %v814
        %v816 = vrot.slane %v802, %v815
        %v817 = vcombine.low %v794, %v796
        %v818 = vcombine.high %v794, %v796
        %v820 = vunpack.c.l.s4 1983009808
        %v821 = vunpack.c.0.s8 %v820
        %v822 = vlaneseq
        %v823 = vshrl.u32 %v822, 7
        %v824 = vsub.s32 %v821, %v823
        %v825 = vrot.slane %v817, %v824
        %v827 = vunpack.c.l.s4 1983009808
        %v828 = vunpack.c.0.s8 %v827
        %v829 = vlaneseq
        %v830 = vshrl.u32 %v829, 7
        %v831 = vsub.s32 %v828, %v830
        %v832 = vrot.slane %v818, %v831
        %v833 = vcombine.low %v797, %v799
        %v834 = vcombine.high %v797, %v799
        %v836 = vunpack.c.l.s4 1983009808
        %v837 = vunpack.c.0.s8 %v836
        %v838 = vlaneseq
        %v839 = vshrl.u32 %v838, 7
        %v840 = vsub.s32 %v837, %v839
        %v841 = vrot.slane %v833, %v840
        %v843 = vunpack.c.l.s4 1983009808
        %v844 = vunpack.c.0.s8 %v843
        %v845 = vlaneseq
        %v846 = vshrl.u32 %v845, 7
        %v847 = vsub.s32 %v844, %v846
        %v848 = vrot.slane %v834, %v847
        %v849 = vcombine.low %v798, %v800
        %v850 = vcombine.high %v798, %v800
        %v852 = vunpack.c.l.s4 1983009808
        %v853 = vunpack.c.0.s8 %v852
        %v854 = vlaneseq
        %v855 = vshrl.u32 %v854, 7
        %v856 = vsub.s32 %v853, %v855
        %v857 = vrot.slane %v849, %v856
        %v859 = vunpack.c.l.s4 1983009808
        %v860 = vunpack.c.0.s8 %v859
        %v861 = vlaneseq
        %v862 = vshrl.u32 %v861, 7
        %v863 = vsub.s32 %v860, %v862
        %v864 = vrot.slane %v850, %v863
        %v865 = vcombine.low %v809, %v825
        %v866 = vcombine.high %v809, %v825
        %v868 = vunpack.c.l.s4 1934713408
        %v869 = vunpack.c.0.s8 %v868
        %v870 = vlaneseq
        %v871 = vshrl.u32 %v870, 7
        %v872 = vsub.s32 %v869, %v871
        %v873 = vrot.slane %v865, %v872
        %v875 = vunpack.c.l.s4 1934713408
        %v876 = vunpack.c.0.s8 %v875
        %v877 = vlaneseq
        %v878 = vshrl.u32 %v877, 7
        %v879 = vsub.s32 %v876, %v878
        %v880 = vrot.slane %v866, %v879
        %v881 = vcombine.low %v816, %v832
        %v882 = vcombine.high %v816, %v832
        %v884 = vunpack.c.l.s4 1934713408
        %v885 = vunpack.c.0.s8 %v884
        %v886 = vlaneseq
        %v887 = vshrl.u32 %v886, 7
        %v888 = vsub.s32 %v885, %v887
        %v889 = vrot.slane %v881, %v888
        %v891 = vunpack.c.l.s4 1934713408
        %v892 = vunpack.c.0.s8 %v891
        %v893 = vlaneseq
        %v894 = vshrl.u32 %v893, 7
        %v895 = vsub.s32 %v892, %v894
        %v896 = vrot.slane %v882, %v895
        %v897 = vcombine.low %v841, %v857
        %v898 = vcombine.high %v841, %v857
        %v900 = vunpack.c.l.s4 1934713408
        %v901 = vunpack.c.0.s8 %v900
        %v902 = vlaneseq
        %v903 = vshrl.u32 %v902, 7
        %v904 = vsub.s32 %v901, %v903
        %v905 = vrot.slane %v897, %v904
        %v907 = vunpack.c.l.s4 1934713408
        %v908 = vunpack.c.0.s8 %v907
        %v909 = vlaneseq
        %v910 = vshrl.u32 %v909, 7
        %v911 = vsub.s32 %v908, %v910
        %v912 = vrot.slane %v898, %v911
        %v913 = vcombine.low %v848, %v864
        %v914 = vcombine.high %v848, %v864
        %v916 = vunpack.c.l.s4 1934713408
        %v917 = vunpack.c.0.s8 %v916
        %v918 = vlaneseq
        %v919 = vshrl.u32 %v918, 7
        %v920 = vsub.s32 %v917, %v919
        %v921 = vrot.slane %v913, %v920
        %v923 = vunpack.c.l.s4 1934713408
        %v924 = vunpack.c.0.s8 %v923
        %v925 = vlaneseq
        %v926 = vshrl.u32 %v925, 7
        %v927 = vsub.s32 %v924, %v926
        %v928 = vrot.slane %v914, %v927
        %v929 = vcombine.low %v873, %v905
        %v930 = vcombine.high %v873, %v905
        %v931 = vcombine.low %v880, %v912
        %v932 = vcombine.high %v880, %v912
        %v933 = vcombine.low %v889, %v921
        %v934 = vcombine.high %v889, %v921
        %v935 = vcombine.low %v896, %v928
        %v936 = vcombine.high %v896, %v928
        %938 = vrot.lane.b32.xlu0 %v558, 124
        %v939 = vpop.permute.xlu0 %938
        %941 = vrot.lane.b32.xlu0 %v558, 120
        %v942 = vpop.permute.xlu0 %941
        %944 = vrot.lane.b32.xlu0 %v558, 116
        %v945 = vpop.permute.xlu0 %944
        %947 = vrot.lane.b32.xlu0 %v558, 112
        %v948 = vpop.permute.xlu0 %947
        %950 = vrot.lane.b32.xlu0 %v558, 108
        %v951 = vpop.permute.xlu0 %950
        %953 = vrot.lane.b32.xlu0 %v558, 104
        %v954 = vpop.permute.xlu0 %953
        %956 = vrot.lane.b32.xlu0 %v558, 100
        %v957 = vpop.permute.xlu0 %956
        %v959 = vcombine.low %v558, %v942
        %v960 = vcombine.high %v558, %v942
        %v962 = vunpack.c.l.s4 1983009808
        %v963 = vunpack.c.0.s8 %v962
        %v964 = vlaneseq
        %v965 = vshrl.u32 %v964, 7
        %v966 = vsub.s32 %v963, %v965
        %v967 = vrot.slane %v959, %v966
        %v969 = vunpack.c.l.s4 1983009808
        %v970 = vunpack.c.0.s8 %v969
        %v971 = vlaneseq
        %v972 = vshrl.u32 %v971, 7
        %v973 = vsub.s32 %v970, %v972
        %v974 = vrot.slane %v960, %v973
        %v975 = vcombine.low %v939, %v945
        %v976 = vcombine.high %v939, %v945
        %v978 = vunpack.c.l.s4 1983009808
        %v979 = vunpack.c.0.s8 %v978
        %v980 = vlaneseq
        %v981 = vshrl.u32 %v980, 7
        %v982 = vsub.s32 %v979, %v981
        %v983 = vrot.slane %v975, %v982
        %v985 = vunpack.c.l.s4 1983009808
        %v986 = vunpack.c.0.s8 %v985
        %v987 = vlaneseq
        %v988 = vshrl.u32 %v987, 7
        %v989 = vsub.s32 %v986, %v988
        %v990 = vrot.slane %v976, %v989
        %v991 = vcombine.low %v948, %v954
        %v992 = vcombine.high %v948, %v954
        %v994 = vunpack.c.l.s4 1983009808
        %v995 = vunpack.c.0.s8 %v994
        %v996 = vlaneseq
        %v997 = vshrl.u32 %v996, 7
        %v998 = vsub.s32 %v995, %v997
        %v999 = vrot.slane %v991, %v998
        %v1001 = vunpack.c.l.s4 1983009808
        %v1002 = vunpack.c.0.s8 %v1001
        %v1003 = vlaneseq
        %v1004 = vshrl.u32 %v1003, 7
        %v1005 = vsub.s32 %v1002, %v1004
        %v1006 = vrot.slane %v992, %v1005
        %v1007 = vcombine.low %v951, %v957
        %v1008 = vcombine.high %v951, %v957
        %v1010 = vunpack.c.l.s4 1983009808
        %v1011 = vunpack.c.0.s8 %v1010
        %v1012 = vlaneseq
        %v1013 = vshrl.u32 %v1012, 7
        %v1014 = vsub.s32 %v1011, %v1013
        %v1015 = vrot.slane %v1007, %v1014
        %v1017 = vunpack.c.l.s4 1983009808
        %v1018 = vunpack.c.0.s8 %v1017
        %v1019 = vlaneseq
        %v1020 = vshrl.u32 %v1019, 7
        %v1021 = vsub.s32 %v1018, %v1020
        %v1022 = vrot.slane %v1008, %v1021
        %v1023 = vcombine.low %v967, %v983
        %v1024 = vcombine.high %v967, %v983
        %v1026 = vunpack.c.l.s4 1934713408
        %v1027 = vunpack.c.0.s8 %v1026
        %v1028 = vlaneseq
        %v1029 = vshrl.u32 %v1028, 7
        %v1030 = vsub.s32 %v1027, %v1029
        %v1031 = vrot.slane %v1023, %v1030
        %v1033 = vunpack.c.l.s4 1934713408
        %v1034 = vunpack.c.0.s8 %v1033
        %v1035 = vlaneseq
        %v1036 = vshrl.u32 %v1035, 7
        %v1037 = vsub.s32 %v1034, %v1036
        %v1038 = vrot.slane %v1024, %v1037
        %v1039 = vcombine.low %v974, %v990
        %v1040 = vcombine.high %v974, %v990
        %v1042 = vunpack.c.l.s4 1934713408
        %v1043 = vunpack.c.0.s8 %v1042
        %v1044 = vlaneseq
        %v1045 = vshrl.u32 %v1044, 7
        %v1046 = vsub.s32 %v1043, %v1045
        %v1047 = vrot.slane %v1039, %v1046
        %v1049 = vunpack.c.l.s4 1934713408
        %v1050 = vunpack.c.0.s8 %v1049
        %v1051 = vlaneseq
        %v1052 = vshrl.u32 %v1051, 7
        %v1053 = vsub.s32 %v1050, %v1052
        %v1054 = vrot.slane %v1040, %v1053
        %v1055 = vcombine.low %v999, %v1015
        %v1056 = vcombine.high %v999, %v1015
        %v1058 = vunpack.c.l.s4 1934713408
        %v1059 = vunpack.c.0.s8 %v1058
        %v1060 = vlaneseq
        %v1061 = vshrl.u32 %v1060, 7
        %v1062 = vsub.s32 %v1059, %v1061
        %v1063 = vrot.slane %v1055, %v1062
        %v1065 = vunpack.c.l.s4 1934713408
        %v1066 = vunpack.c.0.s8 %v1065
        %v1067 = vlaneseq
        %v1068 = vshrl.u32 %v1067, 7
        %v1069 = vsub.s32 %v1066, %v1068
        %v1070 = vrot.slane %v1056, %v1069
        %v1071 = vcombine.low %v1006, %v1022
        %v1072 = vcombine.high %v1006, %v1022
        %v1074 = vunpack.c.l.s4 1934713408
        %v1075 = vunpack.c.0.s8 %v1074
        %v1076 = vlaneseq
        %v1077 = vshrl.u32 %v1076, 7
        %v1078 = vsub.s32 %v1075, %v1077
        %v1079 = vrot.slane %v1071, %v1078
        %v1081 = vunpack.c.l.s4 1934713408
        %v1082 = vunpack.c.0.s8 %v1081
        %v1083 = vlaneseq
        %v1084 = vshrl.u32 %v1083, 7
        %v1085 = vsub.s32 %v1082, %v1084
        %v1086 = vrot.slane %v1072, %v1085
        %v1087 = vcombine.low %v1031, %v1063
        %v1088 = vcombine.high %v1031, %v1063
        %v1089 = vcombine.low %v1038, %v1070
        %v1090 = vcombine.high %v1038, %v1070
        %v1091 = vcombine.low %v1047, %v1079
        %v1092 = vcombine.high %v1047, %v1079
        %v1093 = vcombine.low %v1054, %v1086
        %v1094 = vcombine.high %v1054, %v1086
        %v1095 = vcombine.low %v1087, %v1089
        %v1096 = vcombine.high %v1087, %v1089
        %v1098 = vunpack.c.l.s4 1983009808
        %v1099 = vunpack.c.0.s8 %v1098
        %v1100 = vlaneseq
        %v1101 = vshrl.u32 %v1100, 7
        %v1102 = vsub.s32 %v1099, %v1101
        %v1103 = vrot.slane %v1095, %v1102
        %v1105 = vunpack.c.l.s4 1983009808
        %v1106 = vunpack.c.0.s8 %v1105
        %v1107 = vlaneseq
        %v1108 = vshrl.u32 %v1107, 7
        %v1109 = vsub.s32 %v1106, %v1108
        %v1110 = vrot.slane %v1096, %v1109
        %v1111 = vcombine.low %v1088, %v1090
        %v1112 = vcombine.high %v1088, %v1090
        %v1114 = vunpack.c.l.s4 1983009808
        %v1115 = vunpack.c.0.s8 %v1114
        %v1116 = vlaneseq
        %v1117 = vshrl.u32 %v1116, 7
        %v1118 = vsub.s32 %v1115, %v1117
        %v1119 = vrot.slane %v1111, %v1118
        %v1121 = vunpack.c.l.s4 1983009808
        %v1122 = vunpack.c.0.s8 %v1121
        %v1123 = vlaneseq
        %v1124 = vshrl.u32 %v1123, 7
        %v1125 = vsub.s32 %v1122, %v1124
        %v1126 = vrot.slane %v1112, %v1125
        %v1127 = vcombine.low %v1091, %v1093
        %v1128 = vcombine.high %v1091, %v1093
        %v1130 = vunpack.c.l.s4 1983009808
        %v1131 = vunpack.c.0.s8 %v1130
        %v1132 = vlaneseq
        %v1133 = vshrl.u32 %v1132, 7
        %v1134 = vsub.s32 %v1131, %v1133
        %v1135 = vrot.slane %v1127, %v1134
        %v1137 = vunpack.c.l.s4 1983009808
        %v1138 = vunpack.c.0.s8 %v1137
        %v1139 = vlaneseq
        %v1140 = vshrl.u32 %v1139, 7
        %v1141 = vsub.s32 %v1138, %v1140
        %v1142 = vrot.slane %v1128, %v1141
        %v1143 = vcombine.low %v1092, %v1094
        %v1144 = vcombine.high %v1092, %v1094
        %v1146 = vunpack.c.l.s4 1983009808
        %v1147 = vunpack.c.0.s8 %v1146
        %v1148 = vlaneseq
        %v1149 = vshrl.u32 %v1148, 7
        %v1150 = vsub.s32 %v1147, %v1149
        %v1151 = vrot.slane %v1143, %v1150
        %v1153 = vunpack.c.l.s4 1983009808
        %v1154 = vunpack.c.0.s8 %v1153
        %v1155 = vlaneseq
        %v1156 = vshrl.u32 %v1155, 7
        %v1157 = vsub.s32 %v1154, %v1156
        %v1158 = vrot.slane %v1144, %v1157
        %v1159 = vcombine.low %v1103, %v1119
        %v1160 = vcombine.high %v1103, %v1119
        %v1162 = vunpack.c.l.s4 1934713408
        %v1163 = vunpack.c.0.s8 %v1162
        %v1164 = vlaneseq
        %v1165 = vshrl.u32 %v1164, 7
        %v1166 = vsub.s32 %v1163, %v1165
        %v1167 = vrot.slane %v1159, %v1166
        %v1169 = vunpack.c.l.s4 1934713408
        %v1170 = vunpack.c.0.s8 %v1169
        %v1171 = vlaneseq
        %v1172 = vshrl.u32 %v1171, 7
        %v1173 = vsub.s32 %v1170, %v1172
        %v1174 = vrot.slane %v1160, %v1173
        %v1175 = vcombine.low %v1110, %v1126
        %v1176 = vcombine.high %v1110, %v1126
        %v1178 = vunpack.c.l.s4 1934713408
        %v1179 = vunpack.c.0.s8 %v1178
        %v1180 = vlaneseq
        %v1181 = vshrl.u32 %v1180, 7
        %v1182 = vsub.s32 %v1179, %v1181
        %v1183 = vrot.slane %v1175, %v1182
        %v1185 = vunpack.c.l.s4 1934713408
        %v1186 = vunpack.c.0.s8 %v1185
        %v1187 = vlaneseq
        %v1188 = vshrl.u32 %v1187, 7
        %v1189 = vsub.s32 %v1186, %v1188
        %v1190 = vrot.slane %v1176, %v1189
        %v1191 = vcombine.low %v1135, %v1151
        %v1192 = vcombine.high %v1135, %v1151
        %v1194 = vunpack.c.l.s4 1934713408
        %v1195 = vunpack.c.0.s8 %v1194
        %v1196 = vlaneseq
        %v1197 = vshrl.u32 %v1196, 7
        %v1198 = vsub.s32 %v1195, %v1197
        %v1199 = vrot.slane %v1191, %v1198
        %v1201 = vunpack.c.l.s4 1934713408
        %v1202 = vunpack.c.0.s8 %v1201
        %v1203 = vlaneseq
        %v1204 = vshrl.u32 %v1203, 7
        %v1205 = vsub.s32 %v1202, %v1204
        %v1206 = vrot.slane %v1192, %v1205
        %v1207 = vcombine.low %v1142, %v1158
        %v1208 = vcombine.high %v1142, %v1158
        %v1210 = vunpack.c.l.s4 1934713408
        %v1211 = vunpack.c.0.s8 %v1210
        %v1212 = vlaneseq
        %v1213 = vshrl.u32 %v1212, 7
        %v1214 = vsub.s32 %v1211, %v1213
        %v1215 = vrot.slane %v1207, %v1214
        %v1217 = vunpack.c.l.s4 1934713408
        %v1218 = vunpack.c.0.s8 %v1217
        %v1219 = vlaneseq
        %v1220 = vshrl.u32 %v1219, 7
        %v1221 = vsub.s32 %v1218, %v1220
        %v1222 = vrot.slane %v1208, %v1221
        %v1223 = vcombine.low %v1167, %v1199
        %v1224 = vcombine.high %v1167, %v1199
        %v1225 = vcombine.low %v1174, %v1206
        %v1226 = vcombine.high %v1174, %v1206
        %v1227 = vcombine.low %v1183, %v1215
        %v1228 = vcombine.high %v1183, %v1215
        %v1229 = vcombine.low %v1190, %v1222
        %v1230 = vcombine.high %v1190, %v1222
        %1232 = vrot.lane.b32.xlu0 %v640, 124
        %v1233 = vpop.permute.xlu0 %1232
        %1235 = vrot.lane.b32.xlu0 %v640, 120
        %v1236 = vpop.permute.xlu0 %1235
        %1238 = vrot.lane.b32.xlu0 %v640, 116
        %v1239 = vpop.permute.xlu0 %1238
        %1241 = vrot.lane.b32.xlu0 %v640, 112
        %v1242 = vpop.permute.xlu0 %1241
        %1244 = vrot.lane.b32.xlu0 %v640, 108
        %v1245 = vpop.permute.xlu0 %1244
        %1247 = vrot.lane.b32.xlu0 %v640, 104
        %v1248 = vpop.permute.xlu0 %1247
        %1250 = vrot.lane.b32.xlu0 %v640, 100
        %v1251 = vpop.permute.xlu0 %1250
        %v1253 = vcombine.low %v640, %v1236
        %v1254 = vcombine.high %v640, %v1236
        %v1256 = vunpack.c.l.s4 1983009808
        %v1257 = vunpack.c.0.s8 %v1256
        %v1258 = vlaneseq
        %v1259 = vshrl.u32 %v1258, 7
        %v1260 = vsub.s32 %v1257, %v1259
        %v1261 = vrot.slane %v1253, %v1260
        %v1263 = vunpack.c.l.s4 1983009808
        %v1264 = vunpack.c.0.s8 %v1263
        %v1265 = vlaneseq
        %v1266 = vshrl.u32 %v1265, 7
        %v1267 = vsub.s32 %v1264, %v1266
        %v1268 = vrot.slane %v1254, %v1267
        %v1269 = vcombine.low %v1233, %v1239
        %v1270 = vcombine.high %v1233, %v1239
        %v1272 = vunpack.c.l.s4 1983009808
        %v1273 = vunpack.c.0.s8 %v1272
        %v1274 = vlaneseq
        %v1275 = vshrl.u32 %v1274, 7
        %v1276 = vsub.s32 %v1273, %v1275
        %v1277 = vrot.slane %v1269, %v1276
        %v1279 = vunpack.c.l.s4 1983009808
        %v1280 = vunpack.c.0.s8 %v1279
        %v1281 = vlaneseq
        %v1282 = vshrl.u32 %v1281, 7
        %v1283 = vsub.s32 %v1280, %v1282
        %v1284 = vrot.slane %v1270, %v1283
        %v1285 = vcombine.low %v1242, %v1248
        %v1286 = vcombine.high %v1242, %v1248
        %v1288 = vunpack.c.l.s4 1983009808
        %v1289 = vunpack.c.0.s8 %v1288
        %v1290 = vlaneseq
        %v1291 = vshrl.u32 %v1290, 7
        %v1292 = vsub.s32 %v1289, %v1291
        %v1293 = vrot.slane %v1285, %v1292
        %v1295 = vunpack.c.l.s4 1983009808
        %v1296 = vunpack.c.0.s8 %v1295
        %v1297 = vlaneseq
        %v1298 = vshrl.u32 %v1297, 7
        %v1299 = vsub.s32 %v1296, %v1298
        %v1300 = vrot.slane %v1286, %v1299
        %v1301 = vcombine.low %v1245, %v1251
        %v1302 = vcombine.high %v1245, %v1251
        %v1304 = vunpack.c.l.s4 1983009808
        %v1305 = vunpack.c.0.s8 %v1304
        %v1306 = vlaneseq
        %v1307 = vshrl.u32 %v1306, 7
        %v1308 = vsub.s32 %v1305, %v1307
        %v1309 = vrot.slane %v1301, %v1308
        %v1311 = vunpack.c.l.s4 1983009808
        %v1312 = vunpack.c.0.s8 %v1311
        %v1313 = vlaneseq
        %v1314 = vshrl.u32 %v1313, 7
        %v1315 = vsub.s32 %v1312, %v1314
        %v1316 = vrot.slane %v1302, %v1315
        %v1317 = vcombine.low %v1261, %v1277
        %v1318 = vcombine.high %v1261, %v1277
        %v1320 = vunpack.c.l.s4 1934713408
        %v1321 = vunpack.c.0.s8 %v1320
        %v1322 = vlaneseq
        %v1323 = vshrl.u32 %v1322, 7
        %v1324 = vsub.s32 %v1321, %v1323
        %v1325 = vrot.slane %v1317, %v1324
        %v1327 = vunpack.c.l.s4 1934713408
        %v1328 = vunpack.c.0.s8 %v1327
        %v1329 = vlaneseq
        %v1330 = vshrl.u32 %v1329, 7
        %v1331 = vsub.s32 %v1328, %v1330
        %v1332 = vrot.slane %v1318, %v1331
        %v1333 = vcombine.low %v1268, %v1284
        %v1334 = vcombine.high %v1268, %v1284
        %v1336 = vunpack.c.l.s4 1934713408
        %v1337 = vunpack.c.0.s8 %v1336
        %v1338 = vlaneseq
        %v1339 = vshrl.u32 %v1338, 7
        %v1340 = vsub.s32 %v1337, %v1339
        %v1341 = vrot.slane %v1333, %v1340
        %v1343 = vunpack.c.l.s4 1934713408
        %v1344 = vunpack.c.0.s8 %v1343
        %v1345 = vlaneseq
        %v1346 = vshrl.u32 %v1345, 7
        %v1347 = vsub.s32 %v1344, %v1346
        %v1348 = vrot.slane %v1334, %v1347
        %v1349 = vcombine.low %v1293, %v1309
        %v1350 = vcombine.high %v1293, %v1309
        %v1352 = vunpack.c.l.s4 1934713408
        %v1353 = vunpack.c.0.s8 %v1352
        %v1354 = vlaneseq
        %v1355 = vshrl.u32 %v1354, 7
        %v1356 = vsub.s32 %v1353, %v1355
        %v1357 = vrot.slane %v1349, %v1356
        %v1359 = vunpack.c.l.s4 1934713408
        %v1360 = vunpack.c.0.s8 %v1359
        %v1361 = vlaneseq
        %v1362 = vshrl.u32 %v1361, 7
        %v1363 = vsub.s32 %v1360, %v1362
        %v1364 = vrot.slane %v1350, %v1363
        %v1365 = vcombine.low %v1300, %v1316
        %v1366 = vcombine.high %v1300, %v1316
        %v1368 = vunpack.c.l.s4 1934713408
        %v1369 = vunpack.c.0.s8 %v1368
        %v1370 = vlaneseq
        %v1371 = vshrl.u32 %v1370, 7
        %v1372 = vsub.s32 %v1369, %v1371
        %v1373 = vrot.slane %v1365, %v1372
        %v1375 = vunpack.c.l.s4 1934713408
        %v1376 = vunpack.c.0.s8 %v1375
        %v1377 = vlaneseq
        %v1378 = vshrl.u32 %v1377, 7
        %v1379 = vsub.s32 %v1376, %v1378
        %v1380 = vrot.slane %v1366, %v1379
        %v1381 = vcombine.low %v1325, %v1357
        %v1382 = vcombine.high %v1325, %v1357
        %v1383 = vcombine.low %v1332, %v1364
        %v1384 = vcombine.high %v1332, %v1364
        %v1385 = vcombine.low %v1341, %v1373
        %v1386 = vcombine.high %v1341, %v1373
        %v1387 = vcombine.low %v1348, %v1380
        %v1388 = vcombine.high %v1348, %v1380
        %v1389 = vcombine.low %v1381, %v1383
        %v1390 = vcombine.high %v1381, %v1383
        %v1392 = vunpack.c.l.s4 1983009808
        %v1393 = vunpack.c.0.s8 %v1392
        %v1394 = vlaneseq
        %v1395 = vshrl.u32 %v1394, 7
        %v1396 = vsub.s32 %v1393, %v1395
        %v1397 = vrot.slane %v1389, %v1396
        %v1399 = vunpack.c.l.s4 1983009808
        %v1400 = vunpack.c.0.s8 %v1399
        %v1401 = vlaneseq
        %v1402 = vshrl.u32 %v1401, 7
        %v1403 = vsub.s32 %v1400, %v1402
        %v1404 = vrot.slane %v1390, %v1403
        %v1405 = vcombine.low %v1382, %v1384
        %v1406 = vcombine.high %v1382, %v1384
        %v1408 = vunpack.c.l.s4 1983009808
        %v1409 = vunpack.c.0.s8 %v1408
        %v1410 = vlaneseq
        %v1411 = vshrl.u32 %v1410, 7
        %v1412 = vsub.s32 %v1409, %v1411
        %v1413 = vrot.slane %v1405, %v1412
        %v1415 = vunpack.c.l.s4 1983009808
        %v1416 = vunpack.c.0.s8 %v1415
        %v1417 = vlaneseq
        %v1418 = vshrl.u32 %v1417, 7
        %v1419 = vsub.s32 %v1416, %v1418
        %v1420 = vrot.slane %v1406, %v1419
        %v1421 = vcombine.low %v1385, %v1387
        %v1422 = vcombine.high %v1385, %v1387
        %v1424 = vunpack.c.l.s4 1983009808
        %v1425 = vunpack.c.0.s8 %v1424
        %v1426 = vlaneseq
        %v1427 = vshrl.u32 %v1426, 7
        %v1428 = vsub.s32 %v1425, %v1427
        %v1429 = vrot.slane %v1421, %v1428
        %v1431 = vunpack.c.l.s4 1983009808
        %v1432 = vunpack.c.0.s8 %v1431
        %v1433 = vlaneseq
        %v1434 = vshrl.u32 %v1433, 7
        %v1435 = vsub.s32 %v1432, %v1434
        %v1436 = vrot.slane %v1422, %v1435
        %v1437 = vcombine.low %v1386, %v1388
        %v1438 = vcombine.high %v1386, %v1388
        %v1440 = vunpack.c.l.s4 1983009808
        %v1441 = vunpack.c.0.s8 %v1440
        %v1442 = vlaneseq
        %v1443 = vshrl.u32 %v1442, 7
        %v1444 = vsub.s32 %v1441, %v1443
        %v1445 = vrot.slane %v1437, %v1444
        %v1447 = vunpack.c.l.s4 1983009808
        %v1448 = vunpack.c.0.s8 %v1447
        %v1449 = vlaneseq
        %v1450 = vshrl.u32 %v1449, 7
        %v1451 = vsub.s32 %v1448, %v1450
        %v1452 = vrot.slane %v1438, %v1451
        %v1453 = vcombine.low %v1397, %v1413
        %v1454 = vcombine.high %v1397, %v1413
        %v1456 = vunpack.c.l.s4 1934713408
        %v1457 = vunpack.c.0.s8 %v1456
        %v1458 = vlaneseq
        %v1459 = vshrl.u32 %v1458, 7
        %v1460 = vsub.s32 %v1457, %v1459
        %v1461 = vrot.slane %v1453, %v1460
        %v1463 = vunpack.c.l.s4 1934713408
        %v1464 = vunpack.c.0.s8 %v1463
        %v1465 = vlaneseq
        %v1466 = vshrl.u32 %v1465, 7
        %v1467 = vsub.s32 %v1464, %v1466
        %v1468 = vrot.slane %v1454, %v1467
        %v1469 = vcombine.low %v1404, %v1420
        %v1470 = vcombine.high %v1404, %v1420
        %v1472 = vunpack.c.l.s4 1934713408
        %v1473 = vunpack.c.0.s8 %v1472
        %v1474 = vlaneseq
        %v1475 = vshrl.u32 %v1474, 7
        %v1476 = vsub.s32 %v1473, %v1475
        %v1477 = vrot.slane %v1469, %v1476
        %v1479 = vunpack.c.l.s4 1934713408
        %v1480 = vunpack.c.0.s8 %v1479
        %v1481 = vlaneseq
        %v1482 = vshrl.u32 %v1481, 7
        %v1483 = vsub.s32 %v1480, %v1482
        %v1484 = vrot.slane %v1470, %v1483
        %v1485 = vcombine.low %v1429, %v1445
        %v1486 = vcombine.high %v1429, %v1445
        %v1488 = vunpack.c.l.s4 1934713408
        %v1489 = vunpack.c.0.s8 %v1488
        %v1490 = vlaneseq
        %v1491 = vshrl.u32 %v1490, 7
        %v1492 = vsub.s32 %v1489, %v1491
        %v1493 = vrot.slane %v1485, %v1492
        %v1495 = vunpack.c.l.s4 1934713408
        %v1496 = vunpack.c.0.s8 %v1495
        %v1497 = vlaneseq
        %v1498 = vshrl.u32 %v1497, 7
        %v1499 = vsub.s32 %v1496, %v1498
        %v1500 = vrot.slane %v1486, %v1499
        %v1501 = vcombine.low %v1436, %v1452
        %v1502 = vcombine.high %v1436, %v1452
        %v1504 = vunpack.c.l.s4 1934713408
        %v1505 = vunpack.c.0.s8 %v1504
        %v1506 = vlaneseq
        %v1507 = vshrl.u32 %v1506, 7
        %v1508 = vsub.s32 %v1505, %v1507
        %v1509 = vrot.slane %v1501, %v1508
        %v1511 = vunpack.c.l.s4 1934713408
        %v1512 = vunpack.c.0.s8 %v1511
        %v1513 = vlaneseq
        %v1514 = vshrl.u32 %v1513, 7
        %v1515 = vsub.s32 %v1512, %v1514
        %v1516 = vrot.slane %v1502, %v1515
        %v1517 = vcombine.low %v1461, %v1493
        %v1518 = vcombine.high %v1461, %v1493
        %v1519 = vcombine.low %v1468, %v1500
        %v1520 = vcombine.high %v1468, %v1500
        %v1521 = vcombine.low %v1477, %v1509
        %v1522 = vcombine.high %v1477, %v1509
        %v1523 = vcombine.low %v1484, %v1516
        %v1524 = vcombine.high %v1484, %v1516
        %vm1525 = vcmask 31744
        %v1527 = vsel %vm1525, %v929, 0
        %v1530 = vsel %vm1525, %v1223, 0
        %1532 = vmatprep.subr.mxu0 0.0
        %1533 = vmatpush1.xpose.msra.mxu0 %v1530
        %1534 = vmatprep.subr.mxu0 0.0
        %1535 = vmatpush1.xpose.msra.mxu0 0.0
        %1536 = vmatprep.subr.mxu0 0.0
        %1537 = vmatpush1.xpose.msra.mxu0 0.0
        %1538 = vmatprep.subr.mxu0 0.0
        %1539 = vmatpush1.xpose.msra.mxu0 0.0
        %1540 = vmatprep.subr.mxu0 0.0
        %1541 = vmatpush1.xpose.msra.mxu0 0.0
        %1542 = vmatprep.subr.mxu0 0.0
        %1543 = vmatpush1.xpose.msra.mxu0 0.0
        %1544 = vmatprep.subr.mxu0 0.0
        %1545 = vmatpush1.xpose.msra.mxu0 0.0
        %1546 = vmatprep.subr.mxu0 0.0
        %1547 = vmatpush1.xpose.msra.mxu0 0.0
        %1548 = vmatprep.subr.mxu0 0.0
        %1549 = vmatpush1.xpose.msra.mxu0 0.0
        %1550 = vmatprep.subr.mxu0 0.0
        %1551 = vmatpush1.xpose.msra.mxu0 0.0
        %1552 = vmatprep.subr.mxu0 0.0
        %1553 = vmatpush1.xpose.msra.mxu0 0.0
        %1554 = vmatprep.subr.mxu0 0.0
        %1555 = vmatpush1.xpose.msra.mxu0 0.0
        %1556 = vmatprep.subr.mxu0 0.0
        %1557 = vmatpush1.xpose.msra.mxu0 0.0
        %1558 = vmatprep.subr.mxu0 0.0
        %1559 = vmatpush1.xpose.msra.mxu0 0.0
        %1560 = vmatprep.subr.mxu0 0.0
        %1561 = vmatpush1.xpose.msra.mxu0 0.0
        %1562 = vmatprep.subr.mxu0 0.0
        %1563 = vmatpush1.xpose.msra.mxu0 0.0
        %1564 = vmatprep.subr.mxu0 0.0
        %1565 = vmatpush1.xpose.msra.mxu0 0.0
        %1566 = vmatprep.subr.mxu0 0.0
        %1567 = vmatpush1.xpose.msra.mxu0 0.0
        %1568 = vmatprep.subr.mxu0 0.0
        %1569 = vmatpush1.xpose.msra.mxu0 0.0
        %1570 = vmatprep.subr.mxu0 0.0
        %1571 = vmatpush1.xpose.msra.mxu0 0.0
        %1572 = vmatprep.subr.mxu0 0.0
        %1573 = vmatpush1.xpose.msra.mxu0 0.0
        %1574 = vmatprep.subr.mxu0 0.0
        %1575 = vmatpush1.xpose.msra.mxu0 0.0
        %1576 = vmatprep.subr.mxu0 0.0
        %1577 = vmatpush1.xpose.msra.mxu0 0.0
        %1578 = vmatprep.subr.mxu0 0.0
        %1579 = vmatpush1.xpose.msra.mxu0 0.0
        %1580 = vmatprep.subr.mxu0 0.0
        %1581 = vmatpush1.xpose.msra.mxu0 0.0
        %1582 = vmatprep.subr.mxu0 0.0
        %1583 = vmatpush1.xpose.msra.mxu0 0.0
        %1584 = vmatprep.subr.mxu0 0.0
        %1585 = vmatpush1.xpose.msra.mxu0 0.0
        %1586 = vmatprep.subr.mxu0 0.0
        %1587 = vmatpush1.xpose.msra.mxu0 0.0
        %1588 = vmatprep.subr.mxu0 0.0
        %1589 = vmatpush1.xpose.msra.mxu0 0.0
        %1590 = vmatprep.subr.mxu0 0.0
        %1591 = vmatpush1.xpose.msra.mxu0 0.0
        %1592 = vmatprep.subr.mxu0 0.0
        %1593 = vmatpush1.xpose.msra.mxu0 0.0
        %1594 = vmatprep.subr.mxu0 0.0
        %1595 = vmatpush1.xpose.msra.mxu0 0.0
        %1596 = vmatprep.mubr.f32.mxu0 0.0
        %1597 = vmatmul.mubr.f32.gmra.mrb[0].mxu0 %v1527
        %v1598 = vpop.f32.mrb[0].mxu0
        %v1599 = vadd.f32 0.0, %v1598
        %v1600 = vpop.f32.mrb[0].mxu0
        %1601 = vdwg.mxu0
        %v1603 = vsel %vm1525, %v930, 0
        %v1606 = vsel %vm1525, %v1224, 0
        %1608 = vmatprep.subr.mxu0 0.0
        %1609 = vmatpush1.xpose.msra.mxu0 %v1606
        %1610 = vmatprep.subr.mxu0 0.0
        %1611 = vmatpush1.xpose.msra.mxu0 0.0
        %1612 = vmatprep.subr.mxu0 0.0
        %1613 = vmatpush1.xpose.msra.mxu0 0.0
        %1614 = vmatprep.subr.mxu0 0.0
        %1615 = vmatpush1.xpose.msra.mxu0 0.0
        %1616 = vmatprep.subr.mxu0 0.0
        %1617 = vmatpush1.xpose.msra.mxu0 0.0
        %1618 = vmatprep.subr.mxu0 0.0
        %1619 = vmatpush1.xpose.msra.mxu0 0.0
        %1620 = vmatprep.subr.mxu0 0.0
        %1621 = vmatpush1.xpose.msra.mxu0 0.0
        %1622 = vmatprep.subr.mxu0 0.0
        %1623 = vmatpush1.xpose.msra.mxu0 0.0
        %1624 = vmatprep.subr.mxu0 0.0
        %1625 = vmatpush1.xpose.msra.mxu0 0.0
        %1626 = vmatprep.subr.mxu0 0.0
        %1627 = vmatpush1.xpose.msra.mxu0 0.0
        %1628 = vmatprep.subr.mxu0 0.0
        %1629 = vmatpush1.xpose.msra.mxu0 0.0
        %1630 = vmatprep.subr.mxu0 0.0
        %1631 = vmatpush1.xpose.msra.mxu0 0.0
        %1632 = vmatprep.subr.mxu0 0.0
        %1633 = vmatpush1.xpose.msra.mxu0 0.0
        %1634 = vmatprep.subr.mxu0 0.0
        %1635 = vmatpush1.xpose.msra.mxu0 0.0
        %1636 = vmatprep.subr.mxu0 0.0
        %1637 = vmatpush1.xpose.msra.mxu0 0.0
        %1638 = vmatprep.subr.mxu0 0.0
        %1639 = vmatpush1.xpose.msra.mxu0 0.0
        %1640 = vmatprep.subr.mxu0 0.0
        %1641 = vmatpush1.xpose.msra.mxu0 0.0
        %1642 = vmatprep.subr.mxu0 0.0
        %1643 = vmatpush1.xpose.msra.mxu0 0.0
        %1644 = vmatprep.subr.mxu0 0.0
        %1645 = vmatpush1.xpose.msra.mxu0 0.0
        %1646 = vmatprep.subr.mxu0 0.0
        %1647 = vmatpush1.xpose.msra.mxu0 0.0
        %1648 = vmatprep.subr.mxu0 0.0
        %1649 = vmatpush1.xpose.msra.mxu0 0.0
        %1650 = vmatprep.subr.mxu0 0.0
        %1651 = vmatpush1.xpose.msra.mxu0 0.0
        %1652 = vmatprep.subr.mxu0 0.0
        %1653 = vmatpush1.xpose.msra.mxu0 0.0
        %1654 = vmatprep.subr.mxu0 0.0
        %1655 = vmatpush1.xpose.msra.mxu0 0.0
        %1656 = vmatprep.subr.mxu0 0.0
        %1657 = vmatpush1.xpose.msra.mxu0 0.0
        %1658 = vmatprep.subr.mxu0 0.0
        %1659 = vmatpush1.xpose.msra.mxu0 0.0
        %1660 = vmatprep.subr.mxu0 0.0
        %1661 = vmatpush1.xpose.msra.mxu0 0.0
        %1662 = vmatprep.subr.mxu0 0.0
        %1663 = vmatpush1.xpose.msra.mxu0 0.0
        %1664 = vmatprep.subr.mxu0 0.0
        %1665 = vmatpush1.xpose.msra.mxu0 0.0
        %1666 = vmatprep.subr.mxu0 0.0
        %1667 = vmatpush1.xpose.msra.mxu0 0.0
        %1668 = vmatprep.subr.mxu0 0.0
        %1669 = vmatpush1.xpose.msra.mxu0 0.0
        %1670 = vmatprep.subr.mxu0 0.0
        %1671 = vmatpush1.xpose.msra.mxu0 0.0
        %1672 = vmatprep.mubr.f32.mxu0 0.0
        %1673 = vmatmul.mubr.f32.gmra.mrb[0].mxu0 %v1603
        %v1674 = vpop.f32.mrb[0].mxu0
        %v1675 = vadd.f32 0.0, %v1674
        %v1676 = vpop.f32.mrb[0].mxu0
        %1677 = vdwg.mxu0
        %v1679 = vsel %vm1525, %v931, 0
        %v1682 = vsel %vm1525, %v1225, 0
        %1684 = vmatprep.subr.mxu0 0.0
        %1685 = vmatpush1.xpose.msra.mxu0 %v1682
        %1686 = vmatprep.subr.mxu0 0.0
        %1687 = vmatpush1.xpose.msra.mxu0 0.0
        %1688 = vmatprep.subr.mxu0 0.0
        %1689 = vmatpush1.xpose.msra.mxu0 0.0
        %1690 = vmatprep.subr.mxu0 0.0
        %1691 = vmatpush1.xpose.msra.mxu0 0.0
        %1692 = vmatprep.subr.mxu0 0.0
        %1693 = vmatpush1.xpose.msra.mxu0 0.0
        %1694 = vmatprep.subr.mxu0 0.0
        %1695 = vmatpush1.xpose.msra.mxu0 0.0
        %1696 = vmatprep.subr.mxu0 0.0
        %1697 = vmatpush1.xpose.msra.mxu0 0.0
        %1698 = vmatprep.subr.mxu0 0.0
        %1699 = vmatpush1.xpose.msra.mxu0 0.0
        %1700 = vmatprep.subr.mxu0 0.0
        %1701 = vmatpush1.xpose.msra.mxu0 0.0
        %1702 = vmatprep.subr.mxu0 0.0
        %1703 = vmatpush1.xpose.msra.mxu0 0.0
        %1704 = vmatprep.subr.mxu0 0.0
        %1705 = vmatpush1.xpose.msra.mxu0 0.0
        %1706 = vmatprep.subr.mxu0 0.0
        %1707 = vmatpush1.xpose.msra.mxu0 0.0
        %1708 = vmatprep.subr.mxu0 0.0
        %1709 = vmatpush1.xpose.msra.mxu0 0.0
        %1710 = vmatprep.subr.mxu0 0.0
        %1711 = vmatpush1.xpose.msra.mxu0 0.0
        %1712 = vmatprep.subr.mxu0 0.0
        %1713 = vmatpush1.xpose.msra.mxu0 0.0
        %1714 = vmatprep.subr.mxu0 0.0
        %1715 = vmatpush1.xpose.msra.mxu0 0.0
        %1716 = vmatprep.subr.mxu0 0.0
        %1717 = vmatpush1.xpose.msra.mxu0 0.0
        %1718 = vmatprep.subr.mxu0 0.0
        %1719 = vmatpush1.xpose.msra.mxu0 0.0
        %1720 = vmatprep.subr.mxu0 0.0
        %1721 = vmatpush1.xpose.msra.mxu0 0.0
        %1722 = vmatprep.subr.mxu0 0.0
        %1723 = vmatpush1.xpose.msra.mxu0 0.0
        %1724 = vmatprep.subr.mxu0 0.0
        %1725 = vmatpush1.xpose.msra.mxu0 0.0
        %1726 = vmatprep.subr.mxu0 0.0
        %1727 = vmatpush1.xpose.msra.mxu0 0.0
        %1728 = vmatprep.subr.mxu0 0.0
        %1729 = vmatpush1.xpose.msra.mxu0 0.0
        %1730 = vmatprep.subr.mxu0 0.0
        %1731 = vmatpush1.xpose.msra.mxu0 0.0
        %1732 = vmatprep.subr.mxu0 0.0
        %1733 = vmatpush1.xpose.msra.mxu0 0.0
        %1734 = vmatprep.subr.mxu0 0.0
        %1735 = vmatpush1.xpose.msra.mxu0 0.0
        %1736 = vmatprep.subr.mxu0 0.0
        %1737 = vmatpush1.xpose.msra.mxu0 0.0
        %1738 = vmatprep.subr.mxu0 0.0
        %1739 = vmatpush1.xpose.msra.mxu0 0.0
        %1740 = vmatprep.subr.mxu0 0.0
        %1741 = vmatpush1.xpose.msra.mxu0 0.0
        %1742 = vmatprep.subr.mxu0 0.0
        %1743 = vmatpush1.xpose.msra.mxu0 0.0
        %1744 = vmatprep.subr.mxu0 0.0
        %1745 = vmatpush1.xpose.msra.mxu0 0.0
        %1746 = vmatprep.subr.mxu0 0.0
        %1747 = vmatpush1.xpose.msra.mxu0 0.0
        %1748 = vmatprep.mubr.f32.mxu0 0.0
        %1749 = vmatmul.mubr.f32.gmra.mrb[0].mxu0 %v1679
        %v1750 = vpop.f32.mrb[0].mxu0
        %v1751 = vadd.f32 0.0, %v1750
        %v1752 = vpop.f32.mrb[0].mxu0
        %1753 = vdwg.mxu0
        %v1755 = vsel %vm1525, %v932, 0
        %v1758 = vsel %vm1525, %v1226, 0
        %1760 = vmatprep.subr.mxu0 0.0
        %1761 = vmatpush1.xpose.msra.mxu0 %v1758
        %1762 = vmatprep.subr.mxu0 0.0
        %1763 = vmatpush1.xpose.msra.mxu0 0.0
        %1764 = vmatprep.subr.mxu0 0.0
        %1765 = vmatpush1.xpose.msra.mxu0 0.0
        %1766 = vmatprep.subr.mxu0 0.0
        %1767 = vmatpush1.xpose.msra.mxu0 0.0
        %1768 = vmatprep.subr.mxu0 0.0
        %1769 = vmatpush1.xpose.msra.mxu0 0.0
        %1770 = vmatprep.subr.mxu0 0.0
        %1771 = vmatpush1.xpose.msra.mxu0 0.0
        %1772 = vmatprep.subr.mxu0 0.0
        %1773 = vmatpush1.xpose.msra.mxu0 0.0
        %1774 = vmatprep.subr.mxu0 0.0
        %1775 = vmatpush1.xpose.msra.mxu0 0.0
        %1776 = vmatprep.subr.mxu0 0.0
        %1777 = vmatpush1.xpose.msra.mxu0 0.0
        %1778 = vmatprep.subr.mxu0 0.0
        %1779 = vmatpush1.xpose.msra.mxu0 0.0
        %1780 = vmatprep.subr.mxu0 0.0
        %1781 = vmatpush1.xpose.msra.mxu0 0.0
        %1782 = vmatprep.subr.mxu0 0.0
        %1783 = vmatpush1.xpose.msra.mxu0 0.0
        %1784 = vmatprep.subr.mxu0 0.0
        %1785 = vmatpush1.xpose.msra.mxu0 0.0
        %1786 = vmatprep.subr.mxu0 0.0
        %1787 = vmatpush1.xpose.msra.mxu0 0.0
        %1788 = vmatprep.subr.mxu0 0.0
        %1789 = vmatpush1.xpose.msra.mxu0 0.0
        %1790 = vmatprep.subr.mxu0 0.0
        %1791 = vmatpush1.xpose.msra.mxu0 0.0
        %1792 = vmatprep.subr.mxu0 0.0
        %1793 = vmatpush1.xpose.msra.mxu0 0.0
        %1794 = vmatprep.subr.mxu0 0.0
        %1795 = vmatpush1.xpose.msra.mxu0 0.0
        %1796 = vmatprep.subr.mxu0 0.0
        %1797 = vmatpush1.xpose.msra.mxu0 0.0
        %1798 = vmatprep.subr.mxu0 0.0
        %1799 = vmatpush1.xpose.msra.mxu0 0.0
        %1800 = vmatprep.subr.mxu0 0.0
        %1801 = vmatpush1.xpose.msra.mxu0 0.0
        %1802 = vmatprep.subr.mxu0 0.0
        %1803 = vmatpush1.xpose.msra.mxu0 0.0
        %1804 = vmatprep.subr.mxu0 0.0
        %1805 = vmatpush1.xpose.msra.mxu0 0.0
        %1806 = vmatprep.subr.mxu0 0.0
        %1807 = vmatpush1.xpose.msra.mxu0 0.0
        %1808 = vmatprep.subr.mxu0 0.0
        %1809 = vmatpush1.xpose.msra.mxu0 0.0
        %1810 = vmatprep.subr.mxu0 0.0
        %1811 = vmatpush1.xpose.msra.mxu0 0.0
        %1812 = vmatprep.subr.mxu0 0.0
        %1813 = vmatpush1.xpose.msra.mxu0 0.0
        %1814 = vmatprep.subr.mxu0 0.0
        %1815 = vmatpush1.xpose.msra.mxu0 0.0
        %1816 = vmatprep.subr.mxu0 0.0
        %1817 = vmatpush1.xpose.msra.mxu0 0.0
        %1818 = vmatprep.subr.mxu0 0.0
        %1819 = vmatpush1.xpose.msra.mxu0 0.0
        %1820 = vmatprep.subr.mxu0 0.0
        %1821 = vmatpush1.xpose.msra.mxu0 0.0
        %1822 = vmatprep.subr.mxu0 0.0
        %1823 = vmatpush1.xpose.msra.mxu0 0.0
        %1824 = vmatprep.mubr.f32.mxu0 0.0
        %1825 = vmatmul.mubr.f32.gmra.mrb[0].mxu0 %v1755
        %v1826 = vpop.f32.mrb[0].mxu0
        %v1827 = vadd.f32 0.0, %v1826
        %v1828 = vpop.f32.mrb[0].mxu0
        %1829 = vdwg.mxu0
        %v1831 = vsel %vm1525, %v933, 0
        %v1834 = vsel %vm1525, %v1227, 0
        %1836 = vmatprep.subr.mxu0 0.0
        %1837 = vmatpush1.xpose.msra.mxu0 %v1834
        %1838 = vmatprep.subr.mxu0 0.0
        %1839 = vmatpush1.xpose.msra.mxu0 0.0
        %1840 = vmatprep.subr.mxu0 0.0
        %1841 = vmatpush1.xpose.msra.mxu0 0.0
        %1842 = vmatprep.subr.mxu0 0.0
        %1843 = vmatpush1.xpose.msra.mxu0 0.0
        %1844 = vmatprep.subr.mxu0 0.0
        %1845 = vmatpush1.xpose.msra.mxu0 0.0
        %1846 = vmatprep.subr.mxu0 0.0
        %1847 = vmatpush1.xpose.msra.mxu0 0.0
        %1848 = vmatprep.subr.mxu0 0.0
        %1849 = vmatpush1.xpose.msra.mxu0 0.0
        %1850 = vmatprep.subr.mxu0 0.0
        %1851 = vmatpush1.xpose.msra.mxu0 0.0
        %1852 = vmatprep.subr.mxu0 0.0
        %1853 = vmatpush1.xpose.msra.mxu0 0.0
        %1854 = vmatprep.subr.mxu0 0.0
        %1855 = vmatpush1.xpose.msra.mxu0 0.0
        %1856 = vmatprep.subr.mxu0 0.0
        %1857 = vmatpush1.xpose.msra.mxu0 0.0
        %1858 = vmatprep.subr.mxu0 0.0
        %1859 = vmatpush1.xpose.msra.mxu0 0.0
        %1860 = vmatprep.subr.mxu0 0.0
        %1861 = vmatpush1.xpose.msra.mxu0 0.0
        %1862 = vmatprep.subr.mxu0 0.0
        %1863 = vmatpush1.xpose.msra.mxu0 0.0
        %1864 = vmatprep.subr.mxu0 0.0
        %1865 = vmatpush1.xpose.msra.mxu0 0.0
        %1866 = vmatprep.subr.mxu0 0.0
        %1867 = vmatpush1.xpose.msra.mxu0 0.0
        %1868 = vmatprep.subr.mxu0 0.0
        %1869 = vmatpush1.xpose.msra.mxu0 0.0
        %1870 = vmatprep.subr.mxu0 0.0
        %1871 = vmatpush1.xpose.msra.mxu0 0.0
        %1872 = vmatprep.subr.mxu0 0.0
        %1873 = vmatpush1.xpose.msra.mxu0 0.0
        %1874 = vmatprep.subr.mxu0 0.0
        %1875 = vmatpush1.xpose.msra.mxu0 0.0
        %1876 = vmatprep.subr.mxu0 0.0
        %1877 = vmatpush1.xpose.msra.mxu0 0.0
        %1878 = vmatprep.subr.mxu0 0.0
        %1879 = vmatpush1.xpose.msra.mxu0 0.0
        %1880 = vmatprep.subr.mxu0 0.0
        %1881 = vmatpush1.xpose.msra.mxu0 0.0
        %1882 = vmatprep.subr.mxu0 0.0
        %1883 = vmatpush1.xpose.msra.mxu0 0.0
        %1884 = vmatprep.subr.mxu0 0.0
        %1885 = vmatpush1.xpose.msra.mxu0 0.0
        %1886 = vmatprep.subr.mxu0 0.0
        %1887 = vmatpush1.xpose.msra.mxu0 0.0
        %1888 = vmatprep.subr.mxu0 0.0
        %1889 = vmatpush1.xpose.msra.mxu0 0.0
        %1890 = vmatprep.subr.mxu0 0.0
        %1891 = vmatpush1.xpose.msra.mxu0 0.0
        %1892 = vmatprep.subr.mxu0 0.0
        %1893 = vmatpush1.xpose.msra.mxu0 0.0
        %1894 = vmatprep.subr.mxu0 0.0
        %1895 = vmatpush1.xpose.msra.mxu0 0.0
        %1896 = vmatprep.subr.mxu0 0.0
        %1897 = vmatpush1.xpose.msra.mxu0 0.0
        %1898 = vmatprep.subr.mxu0 0.0
        %1899 = vmatpush1.xpose.msra.mxu0 0.0
        %1900 = vmatprep.mubr.f32.mxu0 0.0
        %1901 = vmatmul.mubr.f32.gmra.mrb[0].mxu0 %v1831
        %v1902 = vpop.f32.mrb[0].mxu0
        %v1903 = vadd.f32 0.0, %v1902
        %v1904 = vpop.f32.mrb[0].mxu0
        %1905 = vdwg.mxu0
        %v1907 = vsel %vm1525, %v934, 0
        %v1910 = vsel %vm1525, %v1228, 0
        %1912 = vmatprep.subr.mxu0 0.0
        %1913 = vmatpush1.xpose.msra.mxu0 %v1910
        %1914 = vmatprep.subr.mxu0 0.0
        %1915 = vmatpush1.xpose.msra.mxu0 0.0
        %1916 = vmatprep.subr.mxu0 0.0
        %1917 = vmatpush1.xpose.msra.mxu0 0.0
        %1918 = vmatprep.subr.mxu0 0.0
        %1919 = vmatpush1.xpose.msra.mxu0 0.0
        %1920 = vmatprep.subr.mxu0 0.0
        %1921 = vmatpush1.xpose.msra.mxu0 0.0
        %1922 = vmatprep.subr.mxu0 0.0
        %1923 = vmatpush1.xpose.msra.mxu0 0.0
        %1924 = vmatprep.subr.mxu0 0.0
        %1925 = vmatpush1.xpose.msra.mxu0 0.0
        %1926 = vmatprep.subr.mxu0 0.0
        %1927 = vmatpush1.xpose.msra.mxu0 0.0
        %1928 = vmatprep.subr.mxu0 0.0
        %1929 = vmatpush1.xpose.msra.mxu0 0.0
        %1930 = vmatprep.subr.mxu0 0.0
        %1931 = vmatpush1.xpose.msra.mxu0 0.0
        %1932 = vmatprep.subr.mxu0 0.0
        %1933 = vmatpush1.xpose.msra.mxu0 0.0
        %1934 = vmatprep.subr.mxu0 0.0
        %1935 = vmatpush1.xpose.msra.mxu0 0.0
        %1936 = vmatprep.subr.mxu0 0.0
        %1937 = vmatpush1.xpose.msra.mxu0 0.0
        %1938 = vmatprep.subr.mxu0 0.0
        %1939 = vmatpush1.xpose.msra.mxu0 0.0
        %1940 = vmatprep.subr.mxu0 0.0
        %1941 = vmatpush1.xpose.msra.mxu0 0.0
        %1942 = vmatprep.subr.mxu0 0.0
        %1943 = vmatpush1.xpose.msra.mxu0 0.0
        %1944 = vmatprep.subr.mxu0 0.0
        %1945 = vmatpush1.xpose.msra.mxu0 0.0
        %1946 = vmatprep.subr.mxu0 0.0
        %1947 = vmatpush1.xpose.msra.mxu0 0.0
        %1948 = vmatprep.subr.mxu0 0.0
        %1949 = vmatpush1.xpose.msra.mxu0 0.0
        %1950 = vmatprep.subr.mxu0 0.0
        %1951 = vmatpush1.xpose.msra.mxu0 0.0
        %1952 = vmatprep.subr.mxu0 0.0
        %1953 = vmatpush1.xpose.msra.mxu0 0.0
        %1954 = vmatprep.subr.mxu0 0.0
        %1955 = vmatpush1.xpose.msra.mxu0 0.0
        %1956 = vmatprep.subr.mxu0 0.0
        %1957 = vmatpush1.xpose.msra.mxu0 0.0
        %1958 = vmatprep.subr.mxu0 0.0
        %1959 = vmatpush1.xpose.msra.mxu0 0.0
        %1960 = vmatprep.subr.mxu0 0.0
        %1961 = vmatpush1.xpose.msra.mxu0 0.0
        %1962 = vmatprep.subr.mxu0 0.0
        %1963 = vmatpush1.xpose.msra.mxu0 0.0
        %1964 = vmatprep.subr.mxu0 0.0
        %1965 = vmatpush1.xpose.msra.mxu0 0.0
        %1966 = vmatprep.subr.mxu0 0.0
        %1967 = vmatpush1.xpose.msra.mxu0 0.0
        %1968 = vmatprep.subr.mxu0 0.0
        %1969 = vmatpush1.xpose.msra.mxu0 0.0
        %1970 = vmatprep.subr.mxu0 0.0
        %1971 = vmatpush1.xpose.msra.mxu0 0.0
        %1972 = vmatprep.subr.mxu0 0.0
        %1973 = vmatpush1.xpose.msra.mxu0 0.0
        %1974 = vmatprep.subr.mxu0 0.0
        %1975 = vmatpush1.xpose.msra.mxu0 0.0
        %1976 = vmatprep.mubr.f32.mxu0 0.0
        %1977 = vmatmul.mubr.f32.gmra.mrb[0].mxu0 %v1907
        %v1978 = vpop.f32.mrb[0].mxu0
        %v1979 = vadd.f32 0.0, %v1978
        %v1980 = vpop.f32.mrb[0].mxu0
        %1981 = vdwg.mxu0
        %v1983 = vsel %vm1525, %v935, 0
        %v1986 = vsel %vm1525, %v1229, 0
        %1988 = vmatprep.subr.mxu0 0.0
        %1989 = vmatpush1.xpose.msra.mxu0 %v1986
        %1990 = vmatprep.subr.mxu0 0.0
        %1991 = vmatpush1.xpose.msra.mxu0 0.0
        %1992 = vmatprep.subr.mxu0 0.0
        %1993 = vmatpush1.xpose.msra.mxu0 0.0
        %1994 = vmatprep.subr.mxu0 0.0
        %1995 = vmatpush1.xpose.msra.mxu0 0.0
        %1996 = vmatprep.subr.mxu0 0.0
        %1997 = vmatpush1.xpose.msra.mxu0 0.0
        %1998 = vmatprep.subr.mxu0 0.0
        %1999 = vmatpush1.xpose.msra.mxu0 0.0
        %2000 = vmatprep.subr.mxu0 0.0
        %2001 = vmatpush1.xpose.msra.mxu0 0.0
        %2002 = vmatprep.subr.mxu0 0.0
        %2003 = vmatpush1.xpose.msra.mxu0 0.0
        %2004 = vmatprep.subr.mxu0 0.0
        %2005 = vmatpush1.xpose.msra.mxu0 0.0
        %2006 = vmatprep.subr.mxu0 0.0
        %2007 = vmatpush1.xpose.msra.mxu0 0.0
        %2008 = vmatprep.subr.mxu0 0.0
        %2009 = vmatpush1.xpose.msra.mxu0 0.0
        %2010 = vmatprep.subr.mxu0 0.0
        %2011 = vmatpush1.xpose.msra.mxu0 0.0
        %2012 = vmatprep.subr.mxu0 0.0
        %2013 = vmatpush1.xpose.msra.mxu0 0.0
        %2014 = vmatprep.subr.mxu0 0.0
        %2015 = vmatpush1.xpose.msra.mxu0 0.0
        %2016 = vmatprep.subr.mxu0 0.0
        %2017 = vmatpush1.xpose.msra.mxu0 0.0
        %2018 = vmatprep.subr.mxu0 0.0
        %2019 = vmatpush1.xpose.msra.mxu0 0.0
        %2020 = vmatprep.subr.mxu0 0.0
        %2021 = vmatpush1.xpose.msra.mxu0 0.0
        %2022 = vmatprep.subr.mxu0 0.0
        %2023 = vmatpush1.xpose.msra.mxu0 0.0
        %2024 = vmatprep.subr.mxu0 0.0
        %2025 = vmatpush1.xpose.msra.mxu0 0.0
        %2026 = vmatprep.subr.mxu0 0.0
        %2027 = vmatpush1.xpose.msra.mxu0 0.0
        %2028 = vmatprep.subr.mxu0 0.0
        %2029 = vmatpush1.xpose.msra.mxu0 0.0
        %2030 = vmatprep.subr.mxu0 0.0
        %2031 = vmatpush1.xpose.msra.mxu0 0.0
        %2032 = vmatprep.subr.mxu0 0.0
        %2033 = vmatpush1.xpose.msra.mxu0 0.0
        %2034 = vmatprep.subr.mxu0 0.0
        %2035 = vmatpush1.xpose.msra.mxu0 0.0
        %2036 = vmatprep.subr.mxu0 0.0
        %2037 = vmatpush1.xpose.msra.mxu0 0.0
        %2038 = vmatprep.subr.mxu0 0.0
        %2039 = vmatpush1.xpose.msra.mxu0 0.0
        %2040 = vmatprep.subr.mxu0 0.0
        %2041 = vmatpush1.xpose.msra.mxu0 0.0
        %2042 = vmatprep.subr.mxu0 0.0
        %2043 = vmatpush1.xpose.msra.mxu0 0.0
        %2044 = vmatprep.subr.mxu0 0.0
        %2045 = vmatpush1.xpose.msra.mxu0 0.0
        %2046 = vmatprep.subr.mxu0 0.0
        %2047 = vmatpush1.xpose.msra.mxu0 0.0
        %2048 = vmatprep.subr.mxu0 0.0
        %2049 = vmatpush1.xpose.msra.mxu0 0.0
        %2050 = vmatprep.subr.mxu0 0.0
        %2051 = vmatpush1.xpose.msra.mxu0 0.0
        %2052 = vmatprep.mubr.f32.mxu0 0.0
        %2053 = vmatmul.mubr.f32.gmra.mrb[0].mxu0 %v1983
        %v2054 = vpop.f32.mrb[0].mxu0
        %v2055 = vadd.f32 0.0, %v2054
        %v2056 = vpop.f32.mrb[0].mxu0
        %2057 = vdwg.mxu0
        %v2059 = vsel %vm1525, %v936, 0
        %v2062 = vsel %vm1525, %v1230, 0
        %2064 = vmatprep.subr.mxu0 0.0
        %2065 = vmatpush1.xpose.msra.mxu0 %v2062
        %2066 = vmatprep.subr.mxu0 0.0
        %2067 = vmatpush1.xpose.msra.mxu0 0.0
        %2068 = vmatprep.subr.mxu0 0.0
        %2069 = vmatpush1.xpose.msra.mxu0 0.0
        %2070 = vmatprep.subr.mxu0 0.0
        %2071 = vmatpush1.xpose.msra.mxu0 0.0
        %2072 = vmatprep.subr.mxu0 0.0
        %2073 = vmatpush1.xpose.msra.mxu0 0.0
        %2074 = vmatprep.subr.mxu0 0.0
        %2075 = vmatpush1.xpose.msra.mxu0 0.0
        %2076 = vmatprep.subr.mxu0 0.0
        %2077 = vmatpush1.xpose.msra.mxu0 0.0
        %2078 = vmatprep.subr.mxu0 0.0
        %2079 = vmatpush1.xpose.msra.mxu0 0.0
        %2080 = vmatprep.subr.mxu0 0.0
        %2081 = vmatpush1.xpose.msra.mxu0 0.0
        %2082 = vmatprep.subr.mxu0 0.0
        %2083 = vmatpush1.xpose.msra.mxu0 0.0
        %2084 = vmatprep.subr.mxu0 0.0
        %2085 = vmatpush1.xpose.msra.mxu0 0.0
        %2086 = vmatprep.subr.mxu0 0.0
        %2087 = vmatpush1.xpose.msra.mxu0 0.0
        %2088 = vmatprep.subr.mxu0 0.0
        %2089 = vmatpush1.xpose.msra.mxu0 0.0
        %2090 = vmatprep.subr.mxu0 0.0
        %2091 = vmatpush1.xpose.msra.mxu0 0.0
        %2092 = vmatprep.subr.mxu0 0.0
        %2093 = vmatpush1.xpose.msra.mxu0 0.0
        %2094 = vmatprep.subr.mxu0 0.0
        %2095 = vmatpush1.xpose.msra.mxu0 0.0
        %2096 = vmatprep.subr.mxu0 0.0
        %2097 = vmatpush1.xpose.msra.mxu0 0.0
        %2098 = vmatprep.subr.mxu0 0.0
        %2099 = vmatpush1.xpose.msra.mxu0 0.0
        %2100 = vmatprep.subr.mxu0 0.0
        %2101 = vmatpush1.xpose.msra.mxu0 0.0
        %2102 = vmatprep.subr.mxu0 0.0
        %2103 = vmatpush1.xpose.msra.mxu0 0.0
        %2104 = vmatprep.subr.mxu0 0.0
        %2105 = vmatpush1.xpose.msra.mxu0 0.0
        %2106 = vmatprep.subr.mxu0 0.0
        %2107 = vmatpush1.xpose.msra.mxu0 0.0
        %2108 = vmatprep.subr.mxu0 0.0
        %2109 = vmatpush1.xpose.msra.mxu0 0.0
        %2110 = vmatprep.subr.mxu0 0.0
        %2111 = vmatpush1.xpose.msra.mxu0 0.0
        %2112 = vmatprep.subr.mxu0 0.0
        %2113 = vmatpush1.xpose.msra.mxu0 0.0
        %2114 = vmatprep.subr.mxu0 0.0
        %2115 = vmatpush1.xpose.msra.mxu0 0.0
        %2116 = vmatprep.subr.mxu0 0.0
        %2117 = vmatpush1.xpose.msra.mxu0 0.0
        %2118 = vmatprep.subr.mxu0 0.0
        %2119 = vmatpush1.xpose.msra.mxu0 0.0
        %2120 = vmatprep.subr.mxu0 0.0
        %2121 = vmatpush1.xpose.msra.mxu0 0.0
        %2122 = vmatprep.subr.mxu0 0.0
        %2123 = vmatpush1.xpose.msra.mxu0 0.0
        %2124 = vmatprep.subr.mxu0 0.0
        %2125 = vmatpush1.xpose.msra.mxu0 0.0
        %2126 = vmatprep.subr.mxu0 0.0
        %2127 = vmatpush1.xpose.msra.mxu0 0.0
        %2128 = vmatprep.mubr.f32.mxu0 0.0
        %2129 = vmatmul.mubr.f32.gmra.mrb[0].mxu0 %v2059
        %v2130 = vpop.f32.mrb[0].mxu0
        %v2131 = vadd.f32 0.0, %v2130
        %v2132 = vpop.f32.mrb[0].mxu0
        %2133 = vdwg.mxu0
        %vm2134 = vcmask 64512
        %v2135 = vsel %vm2134, %v1599, -inf
        %2136 = vmax.xlane.f32.xlu0 %v2135
        %v2137 = vpop.xlane.xlu0 %2136
        %v2138 = vsel %vm2134, %v1675, -inf
        %2139 = vmax.xlane.f32.xlu0 %v2138
        %v2140 = vpop.xlane.xlu0 %2139
        %v2141 = vsel %vm2134, %v1751, -inf
        %2142 = vmax.xlane.f32.xlu0 %v2141
        %v2143 = vpop.xlane.xlu0 %2142
        %v2144 = vsel %vm2134, %v1827, -inf
        %2145 = vmax.xlane.f32.xlu0 %v2144
        %v2146 = vpop.xlane.xlu0 %2145
        %v2147 = vsel %vm2134, %v1903, -inf
        %2148 = vmax.xlane.f32.xlu0 %v2147
        %v2149 = vpop.xlane.xlu0 %2148
        %v2150 = vsel %vm2134, %v1979, -inf
        %2151 = vmax.xlane.f32.xlu0 %v2150
        %v2152 = vpop.xlane.xlu0 %2151
        %v2153 = vsel %vm2134, %v2055, -inf
        %2154 = vmax.xlane.f32.xlu0 %v2153
        %v2155 = vpop.xlane.xlu0 %2154
        %v2156 = vsel %vm2134, %v2131, -inf
        %2157 = vmax.xlane.f32.xlu0 %v2156
        %v2158 = vpop.xlane.xlu0 %2157
        %v2159 = vsub.f32 %v1599, %v2137
        %v2160 = vsub.f32 %v1675, %v2140
        %v2161 = vsub.f32 %v1751, %v2143
        %v2162 = vsub.f32 %v1827, %v2146
        %v2163 = vsub.f32 %v1903, %v2149
        %v2164 = vsub.f32 %v1979, %v2152
        %v2165 = vsub.f32 %v2055, %v2155
        %v2166 = vsub.f32 %v2131, %v2158
        %v2167 = vmul.f32 %v2159, 1.442695
        %v2168 = vpow.pop %v2167
        %v2169 = vmul.f32 %v2160, 1.442695
        %v2170 = vpow.pop %v2169
        %v2171 = vmul.f32 %v2161, 1.442695
        %v2172 = vpow.pop %v2171
        %v2173 = vmul.f32 %v2162, 1.442695
        %v2174 = vpow.pop %v2173
        %v2175 = vmul.f32 %v2163, 1.442695
        %v2176 = vpow.pop %v2175
        %v2177 = vmul.f32 %v2164, 1.442695
        %v2178 = vpow.pop %v2177
        %v2179 = vmul.f32 %v2165, 1.442695
        %v2180 = vpow.pop %v2179
        %v2181 = vmul.f32 %v2166, 1.442695
        %v2182 = vpow.pop %v2181
        %v2183 = vsel %vm2134, %v2168, 0.0
        %2184 = vadd.xlane.f32.xlu0 %v2183
        %v2185 = vpop.xlane.xlu0 %2184
        %v2186 = vsel %vm2134, %v2170, 0.0
        %2187 = vadd.xlane.f32.xlu0 %v2186
        %v2188 = vpop.xlane.xlu0 %2187
        %v2189 = vsel %vm2134, %v2172, 0.0
        %2190 = vadd.xlane.f32.xlu0 %v2189
        %v2191 = vpop.xlane.xlu0 %2190
        %v2192 = vsel %vm2134, %v2174, 0.0
        %2193 = vadd.xlane.f32.xlu0 %v2192
        %v2194 = vpop.xlane.xlu0 %2193
        %v2195 = vsel %vm2134, %v2176, 0.0
        %2196 = vadd.xlane.f32.xlu0 %v2195
        %v2197 = vpop.xlane.xlu0 %2196
        %v2198 = vsel %vm2134, %v2178, 0.0
        %2199 = vadd.xlane.f32.xlu0 %v2198
        %v2200 = vpop.xlane.xlu0 %2199
        %v2201 = vsel %vm2134, %v2180, 0.0
        %2202 = vadd.xlane.f32.xlu0 %v2201
        %v2203 = vpop.xlane.xlu0 %2202
        %v2204 = vsel %vm2134, %v2182, 0.0
        %2205 = vadd.xlane.f32.xlu0 %v2204
        %v2206 = vpop.xlane.xlu0 %2205
        %v2207 = vrcp.pop %v2185
        %v2208 = vmul.f32 %v2168, %v2207
        %v2209 = vrcp.pop %v2188
        %v2210 = vmul.f32 %v2170, %v2209
        %v2211 = vrcp.pop %v2191
        %v2212 = vmul.f32 %v2172, %v2211
        %v2213 = vrcp.pop %v2194
        %v2214 = vmul.f32 %v2174, %v2213
        %v2215 = vrcp.pop %v2197
        %v2216 = vmul.f32 %v2176, %v2215
        %v2217 = vrcp.pop %v2200
        %v2218 = vmul.f32 %v2178, %v2217
        %v2219 = vrcp.pop %v2203
        %v2220 = vmul.f32 %v2180, %v2219
        %v2221 = vrcp.pop %v2206
        %v2222 = vmul.f32 %v2182, %v2221
        %v2224 = vsel %vm2134, %v2208, 0
        %2226 = vmatprep.subr.mxu0 0.0
        %2227 = vmatpush1.msra.mxu0 %v1517
        %2228 = vmatprep.subr.mxu0 0.0
        %2229 = vmatpush1.msra.mxu0 0.0
        %2230 = vmatprep.subr.mxu0 0.0
        %2231 = vmatpush1.msra.mxu0 0.0
        %2232 = vmatprep.subr.mxu0 0.0
        %2233 = vmatpush1.msra.mxu0 0.0
        %2234 = vmatprep.subr.mxu0 0.0
        %2235 = vmatpush1.msra.mxu0 0.0
        %2236 = vmatprep.subr.mxu0 0.0
        %2237 = vmatpush1.msra.mxu0 0.0
        %2238 = vmatprep.subr.mxu0 0.0
        %2239 = vmatpush1.msra.mxu0 0.0
        %2240 = vmatprep.subr.mxu0 0.0
        %2241 = vmatpush1.msra.mxu0 0.0
        %2242 = vmatprep.subr.mxu0 0.0
        %2243 = vmatpush1.msra.mxu0 0.0
        %2244 = vmatprep.subr.mxu0 0.0
        %2245 = vmatpush1.msra.mxu0 0.0
        %2246 = vmatprep.subr.mxu0 0.0
        %2247 = vmatpush1.msra.mxu0 0.0
        %2248 = vmatprep.subr.mxu0 0.0
        %2249 = vmatpush1.msra.mxu0 0.0
        %2250 = vmatprep.subr.mxu0 0.0
        %2251 = vmatpush1.msra.mxu0 0.0
        %2252 = vmatprep.subr.mxu0 0.0
        %2253 = vmatpush1.msra.mxu0 0.0
        %2254 = vmatprep.subr.mxu0 0.0
        %2255 = vmatpush1.msra.mxu0 0.0
        %2256 = vmatprep.subr.mxu0 0.0
        %2257 = vmatpush1.msra.mxu0 0.0
        %2258 = vmatprep.subr.mxu0 0.0
        %2259 = vmatpush1.msra.mxu0 0.0
        %2260 = vmatprep.subr.mxu0 0.0
        %2261 = vmatpush1.msra.mxu0 0.0
        %2262 = vmatprep.subr.mxu0 0.0
        %2263 = vmatpush1.msra.mxu0 0.0
        %2264 = vmatprep.subr.mxu0 0.0
        %2265 = vmatpush1.msra.mxu0 0.0
        %2266 = vmatprep.subr.mxu0 0.0
        %2267 = vmatpush1.msra.mxu0 0.0
        %2268 = vmatprep.subr.mxu0 0.0
        %2269 = vmatpush1.msra.mxu0 0.0
        %2270 = vmatprep.subr.mxu0 0.0
        %2271 = vmatpush1.msra.mxu0 0.0
        %2272 = vmatprep.subr.mxu0 0.0
        %2273 = vmatpush1.msra.mxu0 0.0
        %2274 = vmatprep.subr.mxu0 0.0
        %2275 = vmatpush1.msra.mxu0 0.0
        %2276 = vmatprep.subr.mxu0 0.0
        %2277 = vmatpush1.msra.mxu0 0.0
        %2278 = vmatprep.subr.mxu0 0.0
        %2279 = vmatpush1.msra.mxu0 0.0
        %2280 = vmatprep.subr.mxu0 0.0
        %2281 = vmatpush1.msra.mxu0 0.0
        %2282 = vmatprep.subr.mxu0 0.0
        %2283 = vmatpush1.msra.mxu0 0.0
        %2284 = vmatprep.subr.mxu0 0.0
        %2285 = vmatpush1.msra.mxu0 0.0
        %2286 = vmatprep.subr.mxu0 0.0
        %2287 = vmatpush1.msra.mxu0 0.0
        %2288 = vmatprep.subr.mxu0 0.0
        %2289 = vmatpush1.msra.mxu0 0.0
        %2290 = vmatprep.mubr.f32.mxu0 0.0
        %2291 = vmatmul.mubr.f32.gmra.mrb[0].mxu0 %v2224
        %v2292 = vpop.f32.mrb[0].mxu0
        %v2293 = vadd.f32 0.0, %v2292
        %v2294 = vpop.f32.mrb[0].mxu0
        %2295 = vdwg.mxu0
        %v2297 = vsel %vm2134, %v2210, 0
        %2299 = vmatprep.subr.mxu0 0.0
        %2300 = vmatpush1.msra.mxu0 %v1518
        %2301 = vmatprep.subr.mxu0 0.0
        %2302 = vmatpush1.msra.mxu0 0.0
        %2303 = vmatprep.subr.mxu0 0.0
        %2304 = vmatpush1.msra.mxu0 0.0
        %2305 = vmatprep.subr.mxu0 0.0
        %2306 = vmatpush1.msra.mxu0 0.0
        %2307 = vmatprep.subr.mxu0 0.0
        %2308 = vmatpush1.msra.mxu0 0.0
        %2309 = vmatprep.subr.mxu0 0.0
        %2310 = vmatpush1.msra.mxu0 0.0
        %2311 = vmatprep.subr.mxu0 0.0
        %2312 = vmatpush1.msra.mxu0 0.0
        %2313 = vmatprep.subr.mxu0 0.0
        %2314 = vmatpush1.msra.mxu0 0.0
        %2315 = vmatprep.subr.mxu0 0.0
        %2316 = vmatpush1.msra.mxu0 0.0
        %2317 = vmatprep.subr.mxu0 0.0
        %2318 = vmatpush1.msra.mxu0 0.0
        %2319 = vmatprep.subr.mxu0 0.0
        %2320 = vmatpush1.msra.mxu0 0.0
        %2321 = vmatprep.subr.mxu0 0.0
        %2322 = vmatpush1.msra.mxu0 0.0
        %2323 = vmatprep.subr.mxu0 0.0
        %2324 = vmatpush1.msra.mxu0 0.0
        %2325 = vmatprep.subr.mxu0 0.0
        %2326 = vmatpush1.msra.mxu0 0.0
        %2327 = vmatprep.subr.mxu0 0.0
        %2328 = vmatpush1.msra.mxu0 0.0
        %2329 = vmatprep.subr.mxu0 0.0
        %2330 = vmatpush1.msra.mxu0 0.0
        %2331 = vmatprep.subr.mxu0 0.0
        %2332 = vmatpush1.msra.mxu0 0.0
        %2333 = vmatprep.subr.mxu0 0.0
        %2334 = vmatpush1.msra.mxu0 0.0
        %2335 = vmatprep.subr.mxu0 0.0
        %2336 = vmatpush1.msra.mxu0 0.0
        %2337 = vmatprep.subr.mxu0 0.0
        %2338 = vmatpush1.msra.mxu0 0.0
        %2339 = vmatprep.subr.mxu0 0.0
        %2340 = vmatpush1.msra.mxu0 0.0
        %2341 = vmatprep.subr.mxu0 0.0
        %2342 = vmatpush1.msra.mxu0 0.0
        %2343 = vmatprep.subr.mxu0 0.0
        %2344 = vmatpush1.msra.mxu0 0.0
        %2345 = vmatprep.subr.mxu0 0.0
        %2346 = vmatpush1.msra.mxu0 0.0
        %2347 = vmatprep.subr.mxu0 0.0
        %2348 = vmatpush1.msra.mxu0 0.0
        %2349 = vmatprep.subr.mxu0 0.0
        %2350 = vmatpush1.msra.mxu0 0.0
        %2351 = vmatprep.subr.mxu0 0.0
        %2352 = vmatpush1.msra.mxu0 0.0
        %2353 = vmatprep.subr.mxu0 0.0
        %2354 = vmatpush1.msra.mxu0 0.0
        %2355 = vmatprep.subr.mxu0 0.0
        %2356 = vmatpush1.msra.mxu0 0.0
        %2357 = vmatprep.subr.mxu0 0.0
        %2358 = vmatpush1.msra.mxu0 0.0
        %2359 = vmatprep.subr.mxu0 0.0
        %2360 = vmatpush1.msra.mxu0 0.0
        %2361 = vmatprep.subr.mxu0 0.0
        %2362 = vmatpush1.msra.mxu0 0.0
        %2363 = vmatprep.mubr.f32.mxu0 0.0
        %2364 = vmatmul.mubr.f32.gmra.mrb[0].mxu0 %v2297
        %v2365 = vpop.f32.mrb[0].mxu0
        %v2366 = vadd.f32 0.0, %v2365
        %v2367 = vpop.f32.mrb[0].mxu0
        %2368 = vdwg.mxu0
        %v2370 = vsel %vm2134, %v2212, 0
        %2372 = vmatprep.subr.mxu0 0.0
        %2373 = vmatpush1.msra.mxu0 %v1519
        %2374 = vmatprep.subr.mxu0 0.0
        %2375 = vmatpush1.msra.mxu0 0.0
        %2376 = vmatprep.subr.mxu0 0.0
        %2377 = vmatpush1.msra.mxu0 0.0
        %2378 = vmatprep.subr.mxu0 0.0
        %2379 = vmatpush1.msra.mxu0 0.0
        %2380 = vmatprep.subr.mxu0 0.0
        %2381 = vmatpush1.msra.mxu0 0.0
        %2382 = vmatprep.subr.mxu0 0.0
        %2383 = vmatpush1.msra.mxu0 0.0
        %2384 = vmatprep.subr.mxu0 0.0
        %2385 = vmatpush1.msra.mxu0 0.0
        %2386 = vmatprep.subr.mxu0 0.0
        %2387 = vmatpush1.msra.mxu0 0.0
        %2388 = vmatprep.subr.mxu0 0.0
        %2389 = vmatpush1.msra.mxu0 0.0
        %2390 = vmatprep.subr.mxu0 0.0
        %2391 = vmatpush1.msra.mxu0 0.0
        %2392 = vmatprep.subr.mxu0 0.0
        %2393 = vmatpush1.msra.mxu0 0.0
        %2394 = vmatprep.subr.mxu0 0.0
        %2395 = vmatpush1.msra.mxu0 0.0
        %2396 = vmatprep.subr.mxu0 0.0
        %2397 = vmatpush1.msra.mxu0 0.0
        %2398 = vmatprep.subr.mxu0 0.0
        %2399 = vmatpush1.msra.mxu0 0.0
        %2400 = vmatprep.subr.mxu0 0.0
        %2401 = vmatpush1.msra.mxu0 0.0
        %2402 = vmatprep.subr.mxu0 0.0
        %2403 = vmatpush1.msra.mxu0 0.0
        %2404 = vmatprep.subr.mxu0 0.0
        %2405 = vmatpush1.msra.mxu0 0.0
        %2406 = vmatprep.subr.mxu0 0.0
        %2407 = vmatpush1.msra.mxu0 0.0
        %2408 = vmatprep.subr.mxu0 0.0
        %2409 = vmatpush1.msra.mxu0 0.0
        %2410 = vmatprep.subr.mxu0 0.0
        %2411 = vmatpush1.msra.mxu0 0.0
        %2412 = vmatprep.subr.mxu0 0.0
        %2413 = vmatpush1.msra.mxu0 0.0
        %2414 = vmatprep.subr.mxu0 0.0
        %2415 = vmatpush1.msra.mxu0 0.0
        %2416 = vmatprep.subr.mxu0 0.0
        %2417 = vmatpush1.msra.mxu0 0.0
        %2418 = vmatprep.subr.mxu0 0.0
        %2419 = vmatpush1.msra.mxu0 0.0
        %2420 = vmatprep.subr.mxu0 0.0
        %2421 = vmatpush1.msra.mxu0 0.0
        %2422 = vmatprep.subr.mxu0 0.0
        %2423 = vmatpush1.msra.mxu0 0.0
        %2424 = vmatprep.subr.mxu0 0.0
        %2425 = vmatpush1.msra.mxu0 0.0
        %2426 = vmatprep.subr.mxu0 0.0
        %2427 = vmatpush1.msra.mxu0 0.0
        %2428 = vmatprep.subr.mxu0 0.0
        %2429 = vmatpush1.msra.mxu0 0.0
        %2430 = vmatprep.subr.mxu0 0.0
        %2431 = vmatpush1.msra.mxu0 0.0
        %2432 = vmatprep.subr.mxu0 0.0
        %2433 = vmatpush1.msra.mxu0 0.0
        %2434 = vmatprep.subr.mxu0 0.0
        %2435 = vmatpush1.msra.mxu0 0.0
        %2436 = vmatprep.mubr.f32.mxu0 0.0
        %2437 = vmatmul.mubr.f32.gmra.mrb[0].mxu0 %v2370
        %v2438 = vpop.f32.mrb[0].mxu0
        %v2439 = vadd.f32 0.0, %v2438
        %v2440 = vpop.f32.mrb[0].mxu0
        %2441 = vdwg.mxu0
        %v2443 = vsel %vm2134, %v2214, 0
        %2445 = vmatprep.subr.mxu0 0.0
        %2446 = vmatpush1.msra.mxu0 %v1520
        %2447 = vmatprep.subr.mxu0 0.0
        %2448 = vmatpush1.msra.mxu0 0.0
        %2449 = vmatprep.subr.mxu0 0.0
        %2450 = vmatpush1.msra.mxu0 0.0
        %2451 = vmatprep.subr.mxu0 0.0
        %2452 = vmatpush1.msra.mxu0 0.0
        %2453 = vmatprep.subr.mxu0 0.0
        %2454 = vmatpush1.msra.mxu0 0.0
        %2455 = vmatprep.subr.mxu0 0.0
        %2456 = vmatpush1.msra.mxu0 0.0
        %2457 = vmatprep.subr.mxu0 0.0
        %2458 = vmatpush1.msra.mxu0 0.0
        %2459 = vmatprep.subr.mxu0 0.0
        %2460 = vmatpush1.msra.mxu0 0.0
        %2461 = vmatprep.subr.mxu0 0.0
        %2462 = vmatpush1.msra.mxu0 0.0
        %2463 = vmatprep.subr.mxu0 0.0
        %2464 = vmatpush1.msra.mxu0 0.0
        %2465 = vmatprep.subr.mxu0 0.0
        %2466 = vmatpush1.msra.mxu0 0.0
        %2467 = vmatprep.subr.mxu0 0.0
        %2468 = vmatpush1.msra.mxu0 0.0
        %2469 = vmatprep.subr.mxu0 0.0
        %2470 = vmatpush1.msra.mxu0 0.0
        %2471 = vmatprep.subr.mxu0 0.0
        %2472 = vmatpush1.msra.mxu0 0.0
        %2473 = vmatprep.subr.mxu0 0.0
        %2474 = vmatpush1.msra.mxu0 0.0
        %2475 = vmatprep.subr.mxu0 0.0
        %2476 = vmatpush1.msra.mxu0 0.0
        %2477 = vmatprep.subr.mxu0 0.0
        %2478 = vmatpush1.msra.mxu0 0.0
        %2479 = vmatprep.subr.mxu0 0.0
        %2480 = vmatpush1.msra.mxu0 0.0
        %2481 = vmatprep.subr.mxu0 0.0
        %2482 = vmatpush1.msra.mxu0 0.0
        %2483 = vmatprep.subr.mxu0 0.0
        %2484 = vmatpush1.msra.mxu0 0.0
        %2485 = vmatprep.subr.mxu0 0.0
        %2486 = vmatpush1.msra.mxu0 0.0
        %2487 = vmatprep.subr.mxu0 0.0
        %2488 = vmatpush1.msra.mxu0 0.0
        %2489 = vmatprep.subr.mxu0 0.0
        %2490 = vmatpush1.msra.mxu0 0.0
        %2491 = vmatprep.subr.mxu0 0.0
        %2492 = vmatpush1.msra.mxu0 0.0
        %2493 = vmatprep.subr.mxu0 0.0
        %2494 = vmatpush1.msra.mxu0 0.0
        %2495 = vmatprep.subr.mxu0 0.0
        %2496 = vmatpush1.msra.mxu0 0.0
        %2497 = vmatprep.subr.mxu0 0.0
        %2498 = vmatpush1.msra.mxu0 0.0
        %2499 = vmatprep.subr.mxu0 0.0
        %2500 = vmatpush1.msra.mxu0 0.0
        %2501 = vmatprep.subr.mxu0 0.0
        %2502 = vmatpush1.msra.mxu0 0.0
        %2503 = vmatprep.subr.mxu0 0.0
        %2504 = vmatpush1.msra.mxu0 0.0
        %2505 = vmatprep.subr.mxu0 0.0
        %2506 = vmatpush1.msra.mxu0 0.0
        %2507 = vmatprep.subr.mxu0 0.0
        %2508 = vmatpush1.msra.mxu0 0.0
        %2509 = vmatprep.mubr.f32.mxu0 0.0
        %2510 = vmatmul.mubr.f32.gmra.mrb[0].mxu0 %v2443
        %v2511 = vpop.f32.mrb[0].mxu0
        %v2512 = vadd.f32 0.0, %v2511
        %v2513 = vpop.f32.mrb[0].mxu0
        %2514 = vdwg.mxu0
        %v2516 = vsel %vm2134, %v2216, 0
        %2518 = vmatprep.subr.mxu0 0.0
        %2519 = vmatpush1.msra.mxu0 %v1521
        %2520 = vmatprep.subr.mxu0 0.0
        %2521 = vmatpush1.msra.mxu0 0.0
        %2522 = vmatprep.subr.mxu0 0.0
        %2523 = vmatpush1.msra.mxu0 0.0
        %2524 = vmatprep.subr.mxu0 0.0
        %2525 = vmatpush1.msra.mxu0 0.0
        %2526 = vmatprep.subr.mxu0 0.0
        %2527 = vmatpush1.msra.mxu0 0.0
        %2528 = vmatprep.subr.mxu0 0.0
        %2529 = vmatpush1.msra.mxu0 0.0
        %2530 = vmatprep.subr.mxu0 0.0
        %2531 = vmatpush1.msra.mxu0 0.0
        %2532 = vmatprep.subr.mxu0 0.0
        %2533 = vmatpush1.msra.mxu0 0.0
        %2534 = vmatprep.subr.mxu0 0.0
        %2535 = vmatpush1.msra.mxu0 0.0
        %2536 = vmatprep.subr.mxu0 0.0
        %2537 = vmatpush1.msra.mxu0 0.0
        %2538 = vmatprep.subr.mxu0 0.0
        %2539 = vmatpush1.msra.mxu0 0.0
        %2540 = vmatprep.subr.mxu0 0.0
        %2541 = vmatpush1.msra.mxu0 0.0
        %2542 = vmatprep.subr.mxu0 0.0
        %2543 = vmatpush1.msra.mxu0 0.0
        %2544 = vmatprep.subr.mxu0 0.0
        %2545 = vmatpush1.msra.mxu0 0.0
        %2546 = vmatprep.subr.mxu0 0.0
        %2547 = vmatpush1.msra.mxu0 0.0
        %2548 = vmatprep.subr.mxu0 0.0
        %2549 = vmatpush1.msra.mxu0 0.0
        %2550 = vmatprep.subr.mxu0 0.0
        %2551 = vmatpush1.msra.mxu0 0.0
        %2552 = vmatprep.subr.mxu0 0.0
        %2553 = vmatpush1.msra.mxu0 0.0
        %2554 = vmatprep.subr.mxu0 0.0
        %2555 = vmatpush1.msra.mxu0 0.0
        %2556 = vmatprep.subr.mxu0 0.0
        %2557 = vmatpush1.msra.mxu0 0.0
        %2558 = vmatprep.subr.mxu0 0.0
        %2559 = vmatpush1.msra.mxu0 0.0
        %2560 = vmatprep.subr.mxu0 0.0
        %2561 = vmatpush1.msra.mxu0 0.0
        %2562 = vmatprep.subr.mxu0 0.0
        %2563 = vmatpush1.msra.mxu0 0.0
        %2564 = vmatprep.subr.mxu0 0.0
        %2565 = vmatpush1.msra.mxu0 0.0
        %2566 = vmatprep.subr.mxu0 0.0
        %2567 = vmatpush1.msra.mxu0 0.0
        %2568 = vmatprep.subr.mxu0 0.0
        %2569 = vmatpush1.msra.mxu0 0.0
        %2570 = vmatprep.subr.mxu0 0.0
        %2571 = vmatpush1.msra.mxu0 0.0
        %2572 = vmatprep.subr.mxu0 0.0
        %2573 = vmatpush1.msra.mxu0 0.0
        %2574 = vmatprep.subr.mxu0 0.0
        %2575 = vmatpush1.msra.mxu0 0.0
        %2576 = vmatprep.subr.mxu0 0.0
        %2577 = vmatpush1.msra.mxu0 0.0
        %2578 = vmatprep.subr.mxu0 0.0
        %2579 = vmatpush1.msra.mxu0 0.0
        %2580 = vmatprep.subr.mxu0 0.0
        %2581 = vmatpush1.msra.mxu0 0.0
        %2582 = vmatprep.mubr.f32.mxu0 0.0
        %2583 = vmatmul.mubr.f32.gmra.mrb[0].mxu0 %v2516
        %v2584 = vpop.f32.mrb[0].mxu0
        %v2585 = vadd.f32 0.0, %v2584
        %v2586 = vpop.f32.mrb[0].mxu0
        %2587 = vdwg.mxu0
        %v2589 = vsel %vm2134, %v2218, 0
        %2591 = vmatprep.subr.mxu0 0.0
        %2592 = vmatpush1.msra.mxu0 %v1522
        %2593 = vmatprep.subr.mxu0 0.0
        %2594 = vmatpush1.msra.mxu0 0.0
        %2595 = vmatprep.subr.mxu0 0.0
        %2596 = vmatpush1.msra.mxu0 0.0
        %2597 = vmatprep.subr.mxu0 0.0
        %2598 = vmatpush1.msra.mxu0 0.0
        %2599 = vmatprep.subr.mxu0 0.0
        %2600 = vmatpush1.msra.mxu0 0.0
        %2601 = vmatprep.subr.mxu0 0.0
        %2602 = vmatpush1.msra.mxu0 0.0
        %2603 = vmatprep.subr.mxu0 0.0
        %2604 = vmatpush1.msra.mxu0 0.0
        %2605 = vmatprep.subr.mxu0 0.0
        %2606 = vmatpush1.msra.mxu0 0.0
        %2607 = vmatprep.subr.mxu0 0.0
        %2608 = vmatpush1.msra.mxu0 0.0
        %2609 = vmatprep.subr.mxu0 0.0
        %2610 = vmatpush1.msra.mxu0 0.0
        %2611 = vmatprep.subr.mxu0 0.0
        %2612 = vmatpush1.msra.mxu0 0.0
        %2613 = vmatprep.subr.mxu0 0.0
        %2614 = vmatpush1.msra.mxu0 0.0
        %2615 = vmatprep.subr.mxu0 0.0
        %2616 = vmatpush1.msra.mxu0 0.0
        %2617 = vmatprep.subr.mxu0 0.0
        %2618 = vmatpush1.msra.mxu0 0.0
        %2619 = vmatprep.subr.mxu0 0.0
        %2620 = vmatpush1.msra.mxu0 0.0
        %2621 = vmatprep.subr.mxu0 0.0
        %2622 = vmatpush1.msra.mxu0 0.0
        %2623 = vmatprep.subr.mxu0 0.0
        %2624 = vmatpush1.msra.mxu0 0.0
        %2625 = vmatprep.subr.mxu0 0.0
        %2626 = vmatpush1.msra.mxu0 0.0
        %2627 = vmatprep.subr.mxu0 0.0
        %2628 = vmatpush1.msra.mxu0 0.0
        %2629 = vmatprep.subr.mxu0 0.0
        %2630 = vmatpush1.msra.mxu0 0.0
        %2631 = vmatprep.subr.mxu0 0.0
        %2632 = vmatpush1.msra.mxu0 0.0
        %2633 = vmatprep.subr.mxu0 0.0
        %2634 = vmatpush1.msra.mxu0 0.0
        %2635 = vmatprep.subr.mxu0 0.0
        %2636 = vmatpush1.msra.mxu0 0.0
        %2637 = vmatprep.subr.mxu0 0.0
        %2638 = vmatpush1.msra.mxu0 0.0
        %2639 = vmatprep.subr.mxu0 0.0
        %2640 = vmatpush1.msra.mxu0 0.0
        %2641 = vmatprep.subr.mxu0 0.0
        %2642 = vmatpush1.msra.mxu0 0.0
        %2643 = vmatprep.subr.mxu0 0.0
        %2644 = vmatpush1.msra.mxu0 0.0
        %2645 = vmatprep.subr.mxu0 0.0
        %2646 = vmatpush1.msra.mxu0 0.0
        %2647 = vmatprep.subr.mxu0 0.0
        %2648 = vmatpush1.msra.mxu0 0.0
        %2649 = vmatprep.subr.mxu0 0.0
        %2650 = vmatpush1.msra.mxu0 0.0
        %2651 = vmatprep.subr.mxu0 0.0
        %2652 = vmatpush1.msra.mxu0 0.0
        %2653 = vmatprep.subr.mxu0 0.0
        %2654 = vmatpush1.msra.mxu0 0.0
        %2655 = vmatprep.mubr.f32.mxu0 0.0
        %2656 = vmatmul.mubr.f32.gmra.mrb[0].mxu0 %v2589
        %v2657 = vpop.f32.mrb[0].mxu0
        %v2658 = vadd.f32 0.0, %v2657
        %v2659 = vpop.f32.mrb[0].mxu0
        %2660 = vdwg.mxu0
        %v2662 = vsel %vm2134, %v2220, 0
        %2664 = vmatprep.subr.mxu0 0.0
        %2665 = vmatpush1.msra.mxu0 %v1523
        %2666 = vmatprep.subr.mxu0 0.0
        %2667 = vmatpush1.msra.mxu0 0.0
        %2668 = vmatprep.subr.mxu0 0.0
        %2669 = vmatpush1.msra.mxu0 0.0
        %2670 = vmatprep.subr.mxu0 0.0
        %2671 = vmatpush1.msra.mxu0 0.0
        %2672 = vmatprep.subr.mxu0 0.0
        %2673 = vmatpush1.msra.mxu0 0.0
        %2674 = vmatprep.subr.mxu0 0.0
        %2675 = vmatpush1.msra.mxu0 0.0
        %2676 = vmatprep.subr.mxu0 0.0
        %2677 = vmatpush1.msra.mxu0 0.0
        %2678 = vmatprep.subr.mxu0 0.0
        %2679 = vmatpush1.msra.mxu0 0.0
        %2680 = vmatprep.subr.mxu0 0.0
        %2681 = vmatpush1.msra.mxu0 0.0
        %2682 = vmatprep.subr.mxu0 0.0
        %2683 = vmatpush1.msra.mxu0 0.0
        %2684 = vmatprep.subr.mxu0 0.0
        %2685 = vmatpush1.msra.mxu0 0.0
        %2686 = vmatprep.subr.mxu0 0.0
        %2687 = vmatpush1.msra.mxu0 0.0
        %2688 = vmatprep.subr.mxu0 0.0
        %2689 = vmatpush1.msra.mxu0 0.0
        %2690 = vmatprep.subr.mxu0 0.0
        %2691 = vmatpush1.msra.mxu0 0.0
        %2692 = vmatprep.subr.mxu0 0.0
        %2693 = vmatpush1.msra.mxu0 0.0
        %2694 = vmatprep.subr.mxu0 0.0
        %2695 = vmatpush1.msra.mxu0 0.0
        %2696 = vmatprep.subr.mxu0 0.0
        %2697 = vmatpush1.msra.mxu0 0.0
        %2698 = vmatprep.subr.mxu0 0.0
        %2699 = vmatpush1.msra.mxu0 0.0
        %2700 = vmatprep.subr.mxu0 0.0
        %2701 = vmatpush1.msra.mxu0 0.0
        %2702 = vmatprep.subr.mxu0 0.0
        %2703 = vmatpush1.msra.mxu0 0.0
        %2704 = vmatprep.subr.mxu0 0.0
        %2705 = vmatpush1.msra.mxu0 0.0
        %2706 = vmatprep.subr.mxu0 0.0
        %2707 = vmatpush1.msra.mxu0 0.0
        %2708 = vmatprep.subr.mxu0 0.0
        %2709 = vmatpush1.msra.mxu0 0.0
        %2710 = vmatprep.subr.mxu0 0.0
        %2711 = vmatpush1.msra.mxu0 0.0
        %2712 = vmatprep.subr.mxu0 0.0
        %2713 = vmatpush1.msra.mxu0 0.0
        %2714 = vmatprep.subr.mxu0 0.0
        %2715 = vmatpush1.msra.mxu0 0.0
        %2716 = vmatprep.subr.mxu0 0.0
        %2717 = vmatpush1.msra.mxu0 0.0
        %2718 = vmatprep.subr.mxu0 0.0
        %2719 = vmatpush1.msra.mxu0 0.0
        %2720 = vmatprep.subr.mxu0 0.0
        %2721 = vmatpush1.msra.mxu0 0.0
        %2722 = vmatprep.subr.mxu0 0.0
        %2723 = vmatpush1.msra.mxu0 0.0
        %2724 = vmatprep.subr.mxu0 0.0
        %2725 = vmatpush1.msra.mxu0 0.0
        %2726 = vmatprep.subr.mxu0 0.0
        %2727 = vmatpush1.msra.mxu0 0.0
        %2728 = vmatprep.mubr.f32.mxu0 0.0
        %2729 = vmatmul.mubr.f32.gmra.mrb[0].mxu0 %v2662
        %v2730 = vpop.f32.mrb[0].mxu0
        %v2731 = vadd.f32 0.0, %v2730
        %v2732 = vpop.f32.mrb[0].mxu0
        %2733 = vdwg.mxu0
        %v2735 = vsel %vm2134, %v2222, 0
        %2737 = vmatprep.subr.mxu0 0.0
        %2738 = vmatpush1.msra.mxu0 %v1524
        %2739 = vmatprep.subr.mxu0 0.0
        %2740 = vmatpush1.msra.mxu0 0.0
        %2741 = vmatprep.subr.mxu0 0.0
        %2742 = vmatpush1.msra.mxu0 0.0
        %2743 = vmatprep.subr.mxu0 0.0
        %2744 = vmatpush1.msra.mxu0 0.0
        %2745 = vmatprep.subr.mxu0 0.0
        %2746 = vmatpush1.msra.mxu0 0.0
        %2747 = vmatprep.subr.mxu0 0.0
        %2748 = vmatpush1.msra.mxu0 0.0
        %2749 = vmatprep.subr.mxu0 0.0
        %2750 = vmatpush1.msra.mxu0 0.0
        %2751 = vmatprep.subr.mxu0 0.0
        %2752 = vmatpush1.msra.mxu0 0.0
        %2753 = vmatprep.subr.mxu0 0.0
        %2754 = vmatpush1.msra.mxu0 0.0
        %2755 = vmatprep.subr.mxu0 0.0
        %2756 = vmatpush1.msra.mxu0 0.0
        %2757 = vmatprep.subr.mxu0 0.0
        %2758 = vmatpush1.msra.mxu0 0.0
        %2759 = vmatprep.subr.mxu0 0.0
        %2760 = vmatpush1.msra.mxu0 0.0
        %2761 = vmatprep.subr.mxu0 0.0
        %2762 = vmatpush1.msra.mxu0 0.0
        %2763 = vmatprep.subr.mxu0 0.0
        %2764 = vmatpush1.msra.mxu0 0.0
        %2765 = vmatprep.subr.mxu0 0.0
        %2766 = vmatpush1.msra.mxu0 0.0
        %2767 = vmatprep.subr.mxu0 0.0
        %2768 = vmatpush1.msra.mxu0 0.0
        %2769 = vmatprep.subr.mxu0 0.0
        %2770 = vmatpush1.msra.mxu0 0.0
        %2771 = vmatprep.subr.mxu0 0.0
        %2772 = vmatpush1.msra.mxu0 0.0
        %2773 = vmatprep.subr.mxu0 0.0
        %2774 = vmatpush1.msra.mxu0 0.0
        %2775 = vmatprep.subr.mxu0 0.0
        %2776 = vmatpush1.msra.mxu0 0.0
        %2777 = vmatprep.subr.mxu0 0.0
        %2778 = vmatpush1.msra.mxu0 0.0
        %2779 = vmatprep.subr.mxu0 0.0
        %2780 = vmatpush1.msra.mxu0 0.0
        %2781 = vmatprep.subr.mxu0 0.0
        %2782 = vmatpush1.msra.mxu0 0.0
        %2783 = vmatprep.subr.mxu0 0.0
        %2784 = vmatpush1.msra.mxu0 0.0
        %2785 = vmatprep.subr.mxu0 0.0
        %2786 = vmatpush1.msra.mxu0 0.0
        %2787 = vmatprep.subr.mxu0 0.0
        %2788 = vmatpush1.msra.mxu0 0.0
        %2789 = vmatprep.subr.mxu0 0.0
        %2790 = vmatpush1.msra.mxu0 0.0
        %2791 = vmatprep.subr.mxu0 0.0
        %2792 = vmatpush1.msra.mxu0 0.0
        %2793 = vmatprep.subr.mxu0 0.0
        %2794 = vmatpush1.msra.mxu0 0.0
        %2795 = vmatprep.subr.mxu0 0.0
        %2796 = vmatpush1.msra.mxu0 0.0
        %2797 = vmatprep.subr.mxu0 0.0
        %2798 = vmatpush1.msra.mxu0 0.0
        %2799 = vmatprep.subr.mxu0 0.0
        %2800 = vmatpush1.msra.mxu0 0.0
        %2801 = vmatprep.mubr.f32.mxu0 0.0
        %2802 = vmatmul.mubr.f32.gmra.mrb[0].mxu0 %v2735
        %v2803 = vpop.f32.mrb[0].mxu0
        %v2804 = vadd.f32 0.0, %v2803
        %v2805 = vpop.f32.mrb[0].mxu0
        %2806 = vdwg.mxu0
        %v2807 = vcombine.low %v2293, %v2439
        %v2808 = vcombine.high %v2293, %v2439
        %v2810 = vunpack.c.l.s4 1983009808
        %v2811 = vunpack.c.0.s8 %v2810
        %v2812 = vlaneseq
        %v2813 = vshrl.u32 %v2812, 7
        %v2814 = vsub.s32 %v2811, %v2813
        %v2815 = vrot.slane %v2807, %v2814
        %v2817 = vunpack.c.l.s4 1983009808
        %v2818 = vunpack.c.0.s8 %v2817
        %v2819 = vlaneseq
        %v2820 = vshrl.u32 %v2819, 7
        %v2821 = vsub.s32 %v2818, %v2820
        %v2822 = vrot.slane %v2808, %v2821
        %v2823 = vcombine.low %v2366, %v2512
        %v2824 = vcombine.high %v2366, %v2512
        %v2826 = vunpack.c.l.s4 1983009808
        %v2827 = vunpack.c.0.s8 %v2826
        %v2828 = vlaneseq
        %v2829 = vshrl.u32 %v2828, 7
        %v2830 = vsub.s32 %v2827, %v2829
        %v2831 = vrot.slane %v2823, %v2830
        %v2833 = vunpack.c.l.s4 1983009808
        %v2834 = vunpack.c.0.s8 %v2833
        %v2835 = vlaneseq
        %v2836 = vshrl.u32 %v2835, 7
        %v2837 = vsub.s32 %v2834, %v2836
        %v2838 = vrot.slane %v2824, %v2837
        %v2839 = vcombine.low %v2585, %v2731
        %v2840 = vcombine.high %v2585, %v2731
        %v2842 = vunpack.c.l.s4 1983009808
        %v2843 = vunpack.c.0.s8 %v2842
        %v2844 = vlaneseq
        %v2845 = vshrl.u32 %v2844, 7
        %v2846 = vsub.s32 %v2843, %v2845
        %v2847 = vrot.slane %v2839, %v2846
        %v2849 = vunpack.c.l.s4 1983009808
        %v2850 = vunpack.c.0.s8 %v2849
        %v2851 = vlaneseq
        %v2852 = vshrl.u32 %v2851, 7
        %v2853 = vsub.s32 %v2850, %v2852
        %v2854 = vrot.slane %v2840, %v2853
        %v2855 = vcombine.low %v2658, %v2804
        %v2856 = vcombine.high %v2658, %v2804
        %v2858 = vunpack.c.l.s4 1983009808
        %v2859 = vunpack.c.0.s8 %v2858
        %v2860 = vlaneseq
        %v2861 = vshrl.u32 %v2860, 7
        %v2862 = vsub.s32 %v2859, %v2861
        %v2863 = vrot.slane %v2855, %v2862
        %v2865 = vunpack.c.l.s4 1983009808
        %v2866 = vunpack.c.0.s8 %v2865
        %v2867 = vlaneseq
        %v2868 = vshrl.u32 %v2867, 7
        %v2869 = vsub.s32 %v2866, %v2868
        %v2870 = vrot.slane %v2856, %v2869
        %v2871 = vcombine.low %v2815, %v2831
        %v2872 = vcombine.high %v2815, %v2831
        %v2874 = vunpack.c.l.s4 1934713408
        %v2875 = vunpack.c.0.s8 %v2874
        %v2876 = vlaneseq
        %v2877 = vshrl.u32 %v2876, 7
        %v2878 = vsub.s32 %v2875, %v2877
        %v2879 = vrot.slane %v2871, %v2878
        %v2881 = vunpack.c.l.s4 1934713408
        %v2882 = vunpack.c.0.s8 %v2881
        %v2883 = vlaneseq
        %v2884 = vshrl.u32 %v2883, 7
        %v2885 = vsub.s32 %v2882, %v2884
        %v2886 = vrot.slane %v2872, %v2885
        %v2887 = vcombine.low %v2822, %v2838
        %v2888 = vcombine.high %v2822, %v2838
        %v2890 = vunpack.c.l.s4 1934713408
        %v2891 = vunpack.c.0.s8 %v2890
        %v2892 = vlaneseq
        %v2893 = vshrl.u32 %v2892, 7
        %v2894 = vsub.s32 %v2891, %v2893
        %v2895 = vrot.slane %v2887, %v2894
        %v2897 = vunpack.c.l.s4 1934713408
        %v2898 = vunpack.c.0.s8 %v2897
        %v2899 = vlaneseq
        %v2900 = vshrl.u32 %v2899, 7
        %v2901 = vsub.s32 %v2898, %v2900
        %v2902 = vrot.slane %v2888, %v2901
        %v2903 = vcombine.low %v2847, %v2863
        %v2904 = vcombine.high %v2847, %v2863
        %v2906 = vunpack.c.l.s4 1934713408
        %v2907 = vunpack.c.0.s8 %v2906
        %v2908 = vlaneseq
        %v2909 = vshrl.u32 %v2908, 7
        %v2910 = vsub.s32 %v2907, %v2909
        %v2911 = vrot.slane %v2903, %v2910
        %v2913 = vunpack.c.l.s4 1934713408
        %v2914 = vunpack.c.0.s8 %v2913
        %v2915 = vlaneseq
        %v2916 = vshrl.u32 %v2915, 7
        %v2917 = vsub.s32 %v2914, %v2916
        %v2918 = vrot.slane %v2904, %v2917
        %v2919 = vcombine.low %v2854, %v2870
        %v2920 = vcombine.high %v2854, %v2870
        %v2922 = vunpack.c.l.s4 1934713408
        %v2923 = vunpack.c.0.s8 %v2922
        %v2924 = vlaneseq
        %v2925 = vshrl.u32 %v2924, 7
        %v2926 = vsub.s32 %v2923, %v2925
        %v2927 = vrot.slane %v2919, %v2926
        %v2929 = vunpack.c.l.s4 1934713408
        %v2930 = vunpack.c.0.s8 %v2929
        %v2931 = vlaneseq
        %v2932 = vshrl.u32 %v2931, 7
        %v2933 = vsub.s32 %v2930, %v2932
        %v2934 = vrot.slane %v2920, %v2933
        %v2935 = vcombine.low %v2879, %v2911
        %v2936 = vcombine.high %v2879, %v2911
        %v2937 = vcombine.low %v2886, %v2918
        %v2938 = vcombine.high %v2886, %v2918
        %v2939 = vcombine.low %v2895, %v2927
        %v2940 = vcombine.high %v2895, %v2927
        %v2941 = vcombine.low %v2902, %v2934
        %v2942 = vcombine.high %v2902, %v2934
        %v2943 = vcombine.low %v2935, %v2937
        %v2944 = vcombine.high %v2935, %v2937
        %v2946 = vunpack.c.l.s4 1983009808
        %v2947 = vunpack.c.0.s8 %v2946
        %v2948 = vlaneseq
        %v2949 = vshrl.u32 %v2948, 7
        %v2950 = vsub.s32 %v2947, %v2949
        %v2951 = vrot.slane %v2943, %v2950
        %v2953 = vunpack.c.l.s4 1983009808
        %v2954 = vunpack.c.0.s8 %v2953
        %v2955 = vlaneseq
        %v2956 = vshrl.u32 %v2955, 7
        %v2957 = vsub.s32 %v2954, %v2956
        %v2958 = vrot.slane %v2944, %v2957
        %v2959 = vcombine.low %v2936, %v2938
        %v2960 = vcombine.high %v2936, %v2938
        %v2962 = vunpack.c.l.s4 1983009808
        %v2963 = vunpack.c.0.s8 %v2962
        %v2964 = vlaneseq
        %v2965 = vshrl.u32 %v2964, 7
        %v2966 = vsub.s32 %v2963, %v2965
        %v2967 = vrot.slane %v2959, %v2966
        %v2969 = vunpack.c.l.s4 1983009808
        %v2970 = vunpack.c.0.s8 %v2969
        %v2971 = vlaneseq
        %v2972 = vshrl.u32 %v2971, 7
        %v2973 = vsub.s32 %v2970, %v2972
        %v2974 = vrot.slane %v2960, %v2973
        %v2975 = vcombine.low %v2939, %v2941
        %v2976 = vcombine.high %v2939, %v2941
        %v2978 = vunpack.c.l.s4 1983009808
        %v2979 = vunpack.c.0.s8 %v2978
        %v2980 = vlaneseq
        %v2981 = vshrl.u32 %v2980, 7
        %v2982 = vsub.s32 %v2979, %v2981
        %v2983 = vrot.slane %v2975, %v2982
        %v2985 = vunpack.c.l.s4 1983009808
        %v2986 = vunpack.c.0.s8 %v2985
        %v2987 = vlaneseq
        %v2988 = vshrl.u32 %v2987, 7
        %v2989 = vsub.s32 %v2986, %v2988
        %v2990 = vrot.slane %v2976, %v2989
        %v2991 = vcombine.low %v2940, %v2942
        %v2992 = vcombine.high %v2940, %v2942
        %v2994 = vunpack.c.l.s4 1983009808
        %v2995 = vunpack.c.0.s8 %v2994
        %v2996 = vlaneseq
        %v2997 = vshrl.u32 %v2996, 7
        %v2998 = vsub.s32 %v2995, %v2997
        %v2999 = vrot.slane %v2991, %v2998
        %v3001 = vunpack.c.l.s4 1983009808
        %v3002 = vunpack.c.0.s8 %v3001
        %v3003 = vlaneseq
        %v3004 = vshrl.u32 %v3003, 7
        %v3005 = vsub.s32 %v3002, %v3004
        %v3006 = vrot.slane %v2992, %v3005
        %v3007 = vcombine.low %v2951, %v2967
        %v3008 = vcombine.high %v2951, %v2967
        %v3010 = vunpack.c.l.s4 1934713408
        %v3011 = vunpack.c.0.s8 %v3010
        %v3012 = vlaneseq
        %v3013 = vshrl.u32 %v3012, 7
        %v3014 = vsub.s32 %v3011, %v3013
        %v3015 = vrot.slane %v3007, %v3014
        %v3017 = vunpack.c.l.s4 1934713408
        %v3018 = vunpack.c.0.s8 %v3017
        %v3019 = vlaneseq
        %v3020 = vshrl.u32 %v3019, 7
        %v3021 = vsub.s32 %v3018, %v3020
        %v3022 = vrot.slane %v3008, %v3021
        %v3023 = vcombine.low %v2958, %v2974
        %v3024 = vcombine.high %v2958, %v2974
        %v3026 = vunpack.c.l.s4 1934713408
        %v3027 = vunpack.c.0.s8 %v3026
        %v3028 = vlaneseq
        %v3029 = vshrl.u32 %v3028, 7
        %v3030 = vsub.s32 %v3027, %v3029
        %v3031 = vrot.slane %v3023, %v3030
        %v3033 = vunpack.c.l.s4 1934713408
        %v3034 = vunpack.c.0.s8 %v3033
        %v3035 = vlaneseq
        %v3036 = vshrl.u32 %v3035, 7
        %v3037 = vsub.s32 %v3034, %v3036
        %v3038 = vrot.slane %v3024, %v3037
        %v3039 = vcombine.low %v2983, %v2999
        %v3040 = vcombine.high %v2983, %v2999
        %v3042 = vunpack.c.l.s4 1934713408
        %v3043 = vunpack.c.0.s8 %v3042
        %v3044 = vlaneseq
        %v3045 = vshrl.u32 %v3044, 7
        %v3046 = vsub.s32 %v3043, %v3045
        %v3047 = vrot.slane %v3039, %v3046
        %v3049 = vunpack.c.l.s4 1934713408
        %v3050 = vunpack.c.0.s8 %v3049
        %v3051 = vlaneseq
        %v3052 = vshrl.u32 %v3051, 7
        %v3053 = vsub.s32 %v3050, %v3052
        %v3054 = vrot.slane %v3040, %v3053
        %v3055 = vcombine.low %v2990, %v3006
        %v3056 = vcombine.high %v2990, %v3006
        %v3058 = vunpack.c.l.s4 1934713408
        %v3059 = vunpack.c.0.s8 %v3058
        %v3060 = vlaneseq
        %v3061 = vshrl.u32 %v3060, 7
        %v3062 = vsub.s32 %v3059, %v3061
        %v3063 = vrot.slane %v3055, %v3062
        %v3065 = vunpack.c.l.s4 1934713408
        %v3066 = vunpack.c.0.s8 %v3065
        %v3067 = vlaneseq
        %v3068 = vshrl.u32 %v3067, 7
        %v3069 = vsub.s32 %v3066, %v3068
        %v3070 = vrot.slane %v3056, %v3069
        %v3071 = vcombine.low %v3015, %v3047
        %v3072 = vcombine.high %v3015, %v3047
        %v3073 = vcombine.low %v3022, %v3054
        %v3074 = vcombine.high %v3022, %v3054
        %v3075 = vcombine.low %v3031, %v3063
        %v3076 = vcombine.high %v3031, %v3063
        %v3077 = vcombine.low %v3038, %v3070
        %v3078 = vcombine.high %v3038, %v3070
        %3080 = vrot.lane.b32.xlu0 %v3072, 4
        %v3081 = vpop.permute.xlu0 %3080
        %3084 = vrot.lane.b32.xlu0 %v3073, 8
        %v3085 = vpop.permute.xlu0 %3084
        %3088 = vrot.lane.b32.xlu0 %v3074, 12
        %v3089 = vpop.permute.xlu0 %3088
        %3092 = vrot.lane.b32.xlu0 %v3075, 16
        %v3093 = vpop.permute.xlu0 %3092
        %3096 = vrot.lane.b32.xlu0 %v3076, 20
        %v3097 = vpop.permute.xlu0 %3096
        %3100 = vrot.lane.b32.xlu0 %v3077, 24
        %v3101 = vpop.permute.xlu0 %3100
        %3104 = vrot.lane.b32.xlu0 %v3078, 28
        %v3105 = vpop.permute.xlu0 %3104
        %v3107 = vsel %vm1525, %v3071, %v3081
        %v3108 = vsel %vm2134, %v3107, %v3085
        %vm3109 = vcmask 97280
        %v3110 = vsel %vm3109, %v3108, %v3089
        %vm3111 = vcmask 130048
        %v3112 = vsel %vm3111, %v3110, %v3093
        %vm3113 = vcmask 162816
        %v3114 = vsel %vm3113, %v3112, %v3097
        %vm3115 = vcmask 195584
        %v3116 = vsel %vm3115, %v3114, %v3101
        %vm3117 = vcmask 228352
        %v3118 = vsel %vm3117, %v3116, %v3105
        %v3119 = vld [vmem:[%s4] sm:$0xff]
        %v3120 = vld [vmem:[%s4 + $0x8] sm:$0xff]
        %v3121 = vld [vmem:[%s4 + $0x10] sm:$0xff]
        %v3122 = vld [vmem:[%s4 + $0x18] sm:$0xff]
        %v3123 = vlaneseq
        %v3124 = vshrl.u32 %v3123, 7
        %v3125 = vsub.s32 3, %v3124
        %v3126 = vrot.slane %v395, %v3125
        %v3128 = vsel %vm405, %v3118, 0
        %3130 = vmatprep.subr.mxu0 0.0
        %3131 = vmatpush1.msra.mxu0 %v3119
        %3132 = vmatprep.subr.mxu0 0.0
        %3133 = vmatpush1.msra.mxu0 %v3120
        %3134 = vmatprep.subr.mxu0 0.0
        %3135 = vmatpush1.msra.mxu0 %v3121
        %3136 = vmatprep.subr.mxu0 0.0
        %3137 = vmatpush1.msra.mxu0 %v3122
        %3138 = vmatprep.subr.mxu0 0.0
        %3139 = vmatpush1.msra.mxu0 0.0
        %3140 = vmatprep.subr.mxu0 0.0
        %3141 = vmatpush1.msra.mxu0 0.0
        %3142 = vmatprep.subr.mxu0 0.0
        %3143 = vmatpush1.msra.mxu0 0.0
        %3144 = vmatprep.subr.mxu0 0.0
        %3145 = vmatpush1.msra.mxu0 0.0
        %3146 = vmatprep.subr.mxu0 0.0
        %3147 = vmatpush1.msra.mxu0 0.0
        %3148 = vmatprep.subr.mxu0 0.0
        %3149 = vmatpush1.msra.mxu0 0.0
        %3150 = vmatprep.subr.mxu0 0.0
        %3151 = vmatpush1.msra.mxu0 0.0
        %3152 = vmatprep.subr.mxu0 0.0
        %3153 = vmatpush1.msra.mxu0 0.0
        %3154 = vmatprep.subr.mxu0 0.0
        %3155 = vmatpush1.msra.mxu0 0.0
        %3156 = vmatprep.subr.mxu0 0.0
        %3157 = vmatpush1.msra.mxu0 0.0
        %3158 = vmatprep.subr.mxu0 0.0
        %3159 = vmatpush1.msra.mxu0 0.0
        %3160 = vmatprep.subr.mxu0 0.0
        %3161 = vmatpush1.msra.mxu0 0.0
        %3162 = vmatprep.subr.mxu0 0.0
        %3163 = vmatpush1.msra.mxu0 0.0
        %3164 = vmatprep.subr.mxu0 0.0
        %3165 = vmatpush1.msra.mxu0 0.0
        %3166 = vmatprep.subr.mxu0 0.0
        %3167 = vmatpush1.msra.mxu0 0.0
        %3168 = vmatprep.subr.mxu0 0.0
        %3169 = vmatpush1.msra.mxu0 0.0
        %3170 = vmatprep.subr.mxu0 0.0
        %3171 = vmatpush1.msra.mxu0 0.0
        %3172 = vmatprep.subr.mxu0 0.0
        %3173 = vmatpush1.msra.mxu0 0.0
        %3174 = vmatprep.subr.mxu0 0.0
        %3175 = vmatpush1.msra.mxu0 0.0
        %3176 = vmatprep.subr.mxu0 0.0
        %3177 = vmatpush1.msra.mxu0 0.0
        %3178 = vmatprep.subr.mxu0 0.0
        %3179 = vmatpush1.msra.mxu0 0.0
        %3180 = vmatprep.subr.mxu0 0.0
        %3181 = vmatpush1.msra.mxu0 0.0
        %3182 = vmatprep.subr.mxu0 0.0
        %3183 = vmatpush1.msra.mxu0 0.0
        %3184 = vmatprep.subr.mxu0 0.0
        %3185 = vmatpush1.msra.mxu0 0.0
        %3186 = vmatprep.subr.mxu0 0.0
        %3187 = vmatpush1.msra.mxu0 0.0
        %3188 = vmatprep.subr.mxu0 0.0
        %3189 = vmatpush1.msra.mxu0 0.0
        %3190 = vmatprep.subr.mxu0 0.0
        %3191 = vmatpush1.msra.mxu0 0.0
        %3192 = vmatprep.subr.mxu0 0.0
        %3193 = vmatpush1.msra.mxu0 0.0
        %3194 = vmatprep.mubr.f32.mxu0 0.0
        %3195 = vmatmul.mubr.f32.gmra.mrb[0].mxu0 %v3128
        %v3196 = vpop.f32.mrb[0].mxu0
        %v3197 = vadd.f32 %v3126, %v3196
        %v3198 = vpop.f32.mrb[0].mxu0
        %3199 = vdwg.mxu0
        %v3200 = vadd.f32 %v3197, %v393
        %v3201 = vsel %vm405, %v3200, 0.0
        %3202 = vadd.xlane.f32.xlu0 %v3201
        %v3203 = vpop.xlane.xlu0 %3202
        %v3204 = vrcp.pop 32.0
        %v3205 = vmul.f32 %v3203, %v3204
        %v3206 = vsub.f32 %v3200, %v3205
        %v3207 = vmul.f32 %v3206, %v3206
        %v3208 = vsel %vm405, %v3207, 0.0
        %3209 = vadd.xlane.f32.xlu0 %v3208
        %v3210 = vpop.xlane.xlu0 %3209
        %v3211 = vmul.f32 %v3210, %v3204
        %v3212 = vadd.f32 %v3211, 1e-05
        %v3213 = vrsqrt.pop %v3212
        %v3214 = vmul.f32 %v3206, %v3213
        %v3215 = vlaneseq
        %v3216 = vshrl.u32 %v3215, 7
        %v3217 = vsub.s32 4, %v3216
        %v3218 = vrot.slane %v395, %v3217
        %v3219 = vmul.f32 %v3214, %v3218
        %v3220 = vlaneseq
        %v3221 = vshrl.u32 %v3220, 7
        %v3222 = vsub.s32 5, %v3221
        %v3223 = vrot.slane %v395, %v3222
        %v3224 = vadd.f32 %v3219, %v3223
        %v3225 = vld [vmem:[%s5] sm:$0xff]
        %v3226 = vld [vmem:[%s5 + $0x8] sm:$0xff]
        %v3227 = vld [vmem:[%s5 + $0x10] sm:$0xff]
        %v3228 = vld [vmem:[%s5 + $0x18] sm:$0xff]
        %v3229 = vlaneseq
        %v3230 = vshrl.u32 %v3229, 7
        %v3231 = vsub.s32 6, %v3230
        %v3232 = vrot.slane %v395, %v3231
        %v3234 = vsel %vm405, %v3224, 0
        %3236 = vmatprep.subr.mxu0 0.0
        %3237 = vmatpush1.msra.mxu0 %v3225
        %3238 = vmatprep.subr.mxu0 0.0
        %3239 = vmatpush1.msra.mxu0 %v3226
        %3240 = vmatprep.subr.mxu0 0.0
        %3241 = vmatpush1.msra.mxu0 %v3227
        %3242 = vmatprep.subr.mxu0 0.0
        %3243 = vmatpush1.msra.mxu0 %v3228
        %3244 = vmatprep.subr.mxu0 0.0
        %3245 = vmatpush1.msra.mxu0 0.0
        %3246 = vmatprep.subr.mxu0 0.0
        %3247 = vmatpush1.msra.mxu0 0.0
        %3248 = vmatprep.subr.mxu0 0.0
        %3249 = vmatpush1.msra.mxu0 0.0
        %3250 = vmatprep.subr.mxu0 0.0
        %3251 = vmatpush1.msra.mxu0 0.0
        %3252 = vmatprep.subr.mxu0 0.0
        %3253 = vmatpush1.msra.mxu0 0.0
        %3254 = vmatprep.subr.mxu0 0.0
        %3255 = vmatpush1.msra.mxu0 0.0
        %3256 = vmatprep.subr.mxu0 0.0
        %3257 = vmatpush1.msra.mxu0 0.0
        %3258 = vmatprep.subr.mxu0 0.0
        %3259 = vmatpush1.msra.mxu0 0.0
        %3260 = vmatprep.subr.mxu0 0.0
        %3261 = vmatpush1.msra.mxu0 0.0
        %3262 = vmatprep.subr.mxu0 0.0
        %3263 = vmatpush1.msra.mxu0 0.0
        %3264 = vmatprep.subr.mxu0 0.0
        %3265 = vmatpush1.msra.mxu0 0.0
        %3266 = vmatprep.subr.mxu0 0.0
        %3267 = vmatpush1.msra.mxu0 0.0
        %3268 = vmatprep.subr.mxu0 0.0
        %3269 = vmatpush1.msra.mxu0 0.0
        %3270 = vmatprep.subr.mxu0 0.0
        %3271 = vmatpush1.msra.mxu0 0.0
        %3272 = vmatprep.subr.mxu0 0.0
        %3273 = vmatpush1.msra.mxu0 0.0
        %3274 = vmatprep.subr.mxu0 0.0
        %3275 = vmatpush1.msra.mxu0 0.0
        %3276 = vmatprep.subr.mxu0 0.0
        %3277 = vmatpush1.msra.mxu0 0.0
        %3278 = vmatprep.subr.mxu0 0.0
        %3279 = vmatpush1.msra.mxu0 0.0
        %3280 = vmatprep.subr.mxu0 0.0
        %3281 = vmatpush1.msra.mxu0 0.0
        %3282 = vmatprep.subr.mxu0 0.0
        %3283 = vmatpush1.msra.mxu0 0.0
        %3284 = vmatprep.subr.mxu0 0.0
        %3285 = vmatpush1.msra.mxu0 0.0
        %3286 = vmatprep.subr.mxu0 0.0
        %3287 = vmatpush1.msra.mxu0 0.0
        %3288 = vmatprep.subr.mxu0 0.0
        %3289 = vmatpush1.msra.mxu0 0.0
        %3290 = vmatprep.subr.mxu0 0.0
        %3291 = vmatpush1.msra.mxu0 0.0
        %3292 = vmatprep.subr.mxu0 0.0
        %3293 = vmatpush1.msra.mxu0 0.0
        %3294 = vmatprep.subr.mxu0 0.0
        %3295 = vmatpush1.msra.mxu0 0.0
        %3296 = vmatprep.subr.mxu0 0.0
        %3297 = vmatpush1.msra.mxu0 0.0
        %3298 = vmatprep.subr.mxu0 0.0
        %3299 = vmatpush1.msra.mxu0 0.0
        %3300 = vmatprep.mubr.f32.mxu0 0.0
        %3301 = vmatmul.mubr.f32.gmra.mrb[0].mxu0 %v3234
        %v3302 = vpop.f32.mrb[0].mxu0
        %v3303 = vadd.f32 %v3232, %v3302
        %v3304 = vpop.f32.mrb[0].mxu0
        %3305 = vdwg.mxu0
        %v3306 = vmax.f32 %v3303, 0.0
        %v3307 = vld [vmem:[%s6] sm:$0xff]
        %v3308 = vld [vmem:[%s6 + $0x8] sm:$0xff]
        %v3309 = vld [vmem:[%s6 + $0x10] sm:$0xff]
        %v3310 = vld [vmem:[%s6 + $0x18] sm:$0xff]
        %v3311 = vld [vmem:[%s6 + $0x20] sm:$0xff]
        %v3312 = vld [vmem:[%s6 + $0x28] sm:$0xff]
        %v3313 = vld [vmem:[%s6 + $0x30] sm:$0xff]
        %v3314 = vld [vmem:[%s6 + $0x38] sm:$0xff]
        %v3315 = vld [vmem:[%s6 + $0x40] sm:$0xff]
        %v3316 = vld [vmem:[%s6 + $0x48] sm:$0xff]
        %v3317 = vld [vmem:[%s6 + $0x50] sm:$0xff]
        %v3318 = vld [vmem:[%s6 + $0x58] sm:$0xff]
        %v3319 = vld [vmem:[%s6 + $0x60] sm:$0xff]
        %v3320 = vld [vmem:[%s6 + $0x68] sm:$0xff]
        %v3321 = vld [vmem:[%s6 + $0x70] sm:$0xff]
        %v3322 = vld [vmem:[%s6 + $0x78] sm:$0xff]
        %v3323 = vlaneseq
        %v3324 = vshrl.u32 %v3323, 7
        %v3325 = vsub.s32 7, %v3324
        %v3326 = vrot.slane %v395, %v3325
        %3327 = vmatprep.subr.mxu0 0.0
        %3328 = vmatpush1.msra.mxu0 %v3307
        %3329 = vmatprep.subr.mxu0 0.0
        %3330 = vmatpush1.msra.mxu0 %v3308
        %3331 = vmatprep.subr.mxu0 0.0
        %3332 = vmatpush1.msra.mxu0 %v3309
        %3333 = vmatprep.subr.mxu0 0.0
        %3334 = vmatpush1.msra.mxu0 %v3310
        %3335 = vmatprep.subr.mxu0 0.0
        %3336 = vmatpush1.msra.mxu0 %v3311
        %3337 = vmatprep.subr.mxu0 0.0
        %3338 = vmatpush1.msra.mxu0 %v3312
        %3339 = vmatprep.subr.mxu0 0.0
        %3340 = vmatpush1.msra.mxu0 %v3313
        %3341 = vmatprep.subr.mxu0 0.0
        %3342 = vmatpush1.msra.mxu0 %v3314
        %3343 = vmatprep.subr.mxu0 0.0
        %3344 = vmatpush1.msra.mxu0 %v3315
        %3345 = vmatprep.subr.mxu0 0.0
        %3346 = vmatpush1.msra.mxu0 %v3316
        %3347 = vmatprep.subr.mxu0 0.0
        %3348 = vmatpush1.msra.mxu0 %v3317
        %3349 = vmatprep.subr.mxu0 0.0
        %3350 = vmatpush1.msra.mxu0 %v3318
        %3351 = vmatprep.subr.mxu0 0.0
        %3352 = vmatpush1.msra.mxu0 %v3319
        %3353 = vmatprep.subr.mxu0 0.0
        %3354 = vmatpush1.msra.mxu0 %v3320
        %3355 = vmatprep.subr.mxu0 0.0
        %3356 = vmatpush1.msra.mxu0 %v3321
        %3357 = vmatprep.subr.mxu0 0.0
        %3358 = vmatpush1.msra.mxu0 %v3322
        %3359 = vmatprep.subr.mxu0 0.0
        %3360 = vmatpush1.msra.mxu0 0.0
        %3361 = vmatprep.subr.mxu0 0.0
        %3362 = vmatpush1.msra.mxu0 0.0
        %3363 = vmatprep.subr.mxu0 0.0
        %3364 = vmatpush1.msra.mxu0 0.0
        %3365 = vmatprep.subr.mxu0 0.0
        %3366 = vmatpush1.msra.mxu0 0.0
        %3367 = vmatprep.subr.mxu0 0.0
        %3368 = vmatpush1.msra.mxu0 0.0
        %3369 = vmatprep.subr.mxu0 0.0
        %3370 = vmatpush1.msra.mxu0 0.0
        %3371 = vmatprep.subr.mxu0 0.0
        %3372 = vmatpush1.msra.mxu0 0.0
        %3373 = vmatprep.subr.mxu0 0.0
        %3374 = vmatpush1.msra.mxu0 0.0
        %3375 = vmatprep.subr.mxu0 0.0
        %3376 = vmatpush1.msra.mxu0 0.0
        %3377 = vmatprep.subr.mxu0 0.0
        %3378 = vmatpush1.msra.mxu0 0.0
        %3379 = vmatprep.subr.mxu0 0.0
        %3380 = vmatpush1.msra.mxu0 0.0
        %3381 = vmatprep.subr.mxu0 0.0
        %3382 = vmatpush1.msra.mxu0 0.0
        %3383 = vmatprep.subr.mxu0 0.0
        %3384 = vmatpush1.msra.mxu0 0.0
        %3385 = vmatprep.subr.mxu0 0.0
        %3386 = vmatpush1.msra.mxu0 0.0
        %3387 = vmatprep.subr.mxu0 0.0
        %3388 = vmatpush1.msra.mxu0 0.0
        %3389 = vmatprep.subr.mxu0 0.0
        %3390 = vmatpush1.msra.mxu0 0.0
        %3391 = vmatprep.mubr.f32.mxu0 0.0
        %3392 = vmatmul.mubr.f32.gmra.mrb[0].mxu0 %v3306
        %v3393 = vpop.f32.mrb[0].mxu0
        %v3394 = vadd.f32 %v3326, %v3393
        %v3395 = vpop.f32.mrb[0].mxu0
        %3396 = vdwg.mxu0
        %v3397 = vadd.f32 %v3394, %v3224
        %v3398 = vsel %vm405, %v3397, 0.0
        %3399 = vadd.xlane.f32.xlu0 %v3398
        %v3400 = vpop.xlane.xlu0 %3399
        %v3401 = vmul.f32 %v3400, %v3204
        %v3402 = vsub.f32 %v3397, %v3401
        %v3403 = vmul.f32 %v3402, %v3402
        %v3404 = vsel %vm405, %v3403, 0.0
        %3405 = vadd.xlane.f32.xlu0 %v3404
        %v3406 = vpop.xlane.xlu0 %3405
        %v3407 = vmul.f32 %v3406, %v3204
        %v3408 = vadd.f32 %v3407, 1e-05
        %v3409 = vrsqrt.pop %v3408
        %v3410 = vmul.f32 %v3402, %v3409
        %v3411 = vlaneseq
        %v3412 = vshrl.u32 %v3411, 7
        %v3413 = vsub.s32 0, %v3412
        %v3414 = vrot.slane %v396, %v3413
        %v3415 = vmul.f32 %v3410, %v3414
        %v3416 = vlaneseq
        %v3417 = vshrl.u32 %v3416, 7
        %v3418 = vsub.s32 1, %v3417
        %v3419 = vrot.slane %v396, %v3418
        %v3420 = vadd.f32 %v3415, %v3419
        %3421 = vst.msk [vmem:[%s391] sm:$0xff] %vm405, %v3420
        %s3422 = sand.u32 %s219, 1
        %s3423 = scalar_lea.sflag [#allocation4], %s3422
        %s3424 = sand.u32 %s219, 1
        %s3425 = smul.addr %s3424, 8
        %s3426 = scalar_lea.vmem [#allocation8], %s3425
        // Predicated region
        $region65: #{transformer_encoder_block.1} parent=51 // pred_check
          %p3427 = pneg %p229
        $region66: #{transformer_encoder_block.1} parent=51 // pred_check_branch
          %3429 = sbr.rel (%p3427) target = $region68
        $region67: #{transformer_encoder_block.1} parent=51 // pred_region
          %s3431 = ssub.s32 128, 128
          %3432 = vsyncadd %s3423, %s3431
          %s3433 = smul.addr %s28, 128
          %s3434 = scalar_lea.hbm %s8, %s3433
          %s3436 = sshll.u32 %s3426, 4
          %s3437 = int_to_ptr.vmem [resolvable:$true] %s3436
          %3439 = dma.vmem_to_hbm [thread:$0]  %s3437, 128, %s3434, %s3423
        $region68: #{transformer_encoder_block.1} parent=51 // pred_fallthru
          _
      $region52: #{transformer_encoder_block.1} parent=5 // pred_fallthru
        _
      %p3440 = scmp.le.s32.totalorder 2, %s23
      // Predicated region
      $region69: #{transformer_encoder_block.1} parent=5 // pred_check
        %p3441 = pneg %p3440
      $region70: #{transformer_encoder_block.1} parent=5 // pred_check_branch
        %3443 = sbr.rel (%p3441) target = $region72
      $region71: #{transformer_encoder_block.1} parent=5 // pred_region
        %s3444 = ssub.s32 %s23, 2
        // Predicated region
        $region73: #{transformer_encoder_block.1} parent=71 // pred_check
          %p3445 = pneg %p235
        $region74: #{transformer_encoder_block.1} parent=71 // pred_check_branch
          %3447 = sbr.rel (%p3445) target = $region76
        $region75: #{transformer_encoder_block.1} parent=71 // pred_region
          %s3448 = sand.u32 %s220, 1
          %s3449 = scalar_lea.sflag [#allocation4], %s3448
          %s3450 = sand.u32 %s220, 1
          %s3451 = smul.addr %s3450, 8
          %s3452 = scalar_lea.vmem [#allocation8], %s3451
          %3453 = dma.done %s3449, 128
        $region76: #{transformer_encoder_block.1} parent=71 // pred_fallthru
          _
      $region72: #{transformer_encoder_block.1} parent=5 // pred_fallthru
        _
    $region6: #{transformer_encoder_block.1} parent=1 // loop_footer
      %s27 = sadd.s32 1, %s23
    $region7: #{transformer_encoder_block.1} parent=1 // loop_footer_branch
      %22 = sbr.rel target = $region3
    $region8: #{transformer_encoder_block.1} parent=1 // loop_exit
      _
    %3454 = vsyncpa [#allocation3], 1
    %s3455 = scalar_lea.sflag [#allocation3], 1
    %3456 = vsyncpa %s3455, 1
    %3457 = vsyncpa [#allocation6], 1
    %s3458 = scalar_lea.sflag [#allocation6], 1
    %3459 = vsyncpa %s3458, 1
    %3460 = vsyncpa [#allocation4], 1
    %s3461 = scalar_lea.sflag [#allocation4], 1
    %3462 = vsyncpa %s3461, 1

</llo_original>
